<compile_context>
chip_gen: v7x
topology: tpu7x:2x2x1
jax: 0.10.0
libtpu: 0.0.40
codegen_flags: <defaults>
</compile_context>

<pallas_src>
import functools

import jax
import jax.numpy as jnp
from jax import lax
from jax.experimental import pallas as pl
from jax.experimental.pallas import tpu as pltpu

MARGIN = 5.0
_LANE = 128
_SUBLANE = 8


def _round_up(x, m):
    return (x + m - 1) // m * m


def _pad2d(x, rows, cols):
    r, c = x.shape
    if rows == r and cols == c:
        return x
    return jnp.pad(x, ((0, rows - r), (0, cols - c)))


# --------------------------------------------------------------------------
# Fast path: VMEM-resident tables + exact one-hot MXU gather.
# --------------------------------------------------------------------------
def _onehot_gather(table, ids_col):
    """Exact row gather via one-hot matmul.  table: (n, Dp); ids_col: (tb, 1)."""
    n = table.shape[0]
    tb = ids_col.shape[0]
    iota = lax.broadcasted_iota(jnp.int32, (tb, n), 1)
    onehot = (iota == ids_col).astype(table.dtype)
    # HIGHEST precision keeps f32 tables exact through the MXU (no bf16 pass).
    return jnp.dot(onehot, table,
                   preferred_element_type=jnp.float32,
                   precision=lax.Precision.HIGHEST)


def _vmem_kernel(idx_ref, ent_ref, rel_ref, out_ref, acc_ref, *,
                 batch, tb, padded_b, share_neg_rel):
    t = pl.program_id(0)
    nt = pl.num_programs(0)

    @pl.when(t == 0)
    def _():
        acc_ref[...] = jnp.zeros_like(acc_ref)

    ids = idx_ref[...]                                   # (tb, 6) int32
    ent_tab = ent_ref[...]                               # (Ep, Dp), VMEM-resident
    rel_tab = rel_ref[...]                               # (Rp, Dp), VMEM-resident

    def col(role):
        return ids[:, role:role + 1]                     # (tb, 1)

    h_pos = _onehot_gather(ent_tab, col(0))
    r_pos = _onehot_gather(rel_tab, col(1))
    t_pos = _onehot_gather(ent_tab, col(2))
    h_neg = _onehot_gather(ent_tab, col(3))
    r_neg = r_pos if share_neg_rel else _onehot_gather(rel_tab, col(4))
    t_neg = _onehot_gather(ent_tab, col(5))

    d_pos = jnp.sum(jnp.abs(h_pos + r_pos - t_pos), axis=-1, keepdims=True)
    d_neg = jnp.sum(jnp.abs(h_neg + r_neg - t_neg), axis=-1, keepdims=True)
    hinge = jnp.maximum(d_pos - d_neg + MARGIN, 0.0)     # (tb, 1) f32

    if padded_b != batch:                                # static: skip when no padding
        rows = t * tb + lax.broadcasted_iota(jnp.int32, (tb, 1), 0)
        hinge = jnp.where(rows < batch, hinge, 0.0)

    acc_ref[...] += jnp.sum(hinge, axis=0, keepdims=True)

    @pl.when(t == nt - 1)
    def _():
        out_ref[...] = acc_ref[...] * (1.0 / batch)      # scale once by the true B


# --------------------------------------------------------------------------
# Fallback path: tables in HBM, per-row DMA gather, double-buffered.
# --------------------------------------------------------------------------
def _hbm_kernel(idx_ref, ent_hbm, rel_hbm, out_ref, buf, sem, acc_ref, *,
                batch, tb, padded_b):
    t = pl.program_id(0)
    nt = pl.num_programs(0)
    slot = t % 2

    def table(role):
        # roles: 0=pos_h(ent) 1=pos_r(rel) 2=pos_t(ent) 3=neg_h 4=neg_r 5=neg_t
        return rel_hbm if role in (1, 4) else ent_hbm

    def start_gather(tile, slot_):
        base = tile * tb

        def body(r, carry):
            for role in range(6):                        # static role loop
                row = idx_ref[role, base + r]            # SMEM scalar read
                pltpu.make_async_copy(
                    table(role).at[pl.ds(row, 1), :],
                    buf.at[slot_, role, pl.ds(r, 1), :],
                    sem.at[slot_],
                ).start()
            return carry

        lax.fori_loop(0, tb, body, 0)                    # no 6*tb static unroll

    def wait_gather(slot_):
        # INVARIANT: every copy above moves exactly one padded row
        # (Dp * itemsize bytes) and signals sem[slot_]; a single descriptor
        # covering the whole (6, tb, Dp) slot therefore waits for the combined
        # byte count of all 6*tb row copies (one aggregate wait per slot).
        pltpu.make_async_copy(buf.at[slot_], buf.at[slot_], sem.at[slot_]).wait()

    @pl.when(t == 0)
    def _():
        acc_ref[...] = jnp.zeros_like(acc_ref)
        start_gather(0, 0)

    # Prefetch the next tile's rows before waiting on this tile's rows.
    @pl.when(t + 1 < nt)
    def _():
        start_gather(t + 1, 1 - slot)

    wait_gather(slot)

    slab = buf.at[slot]                                  # (6, tb, Dp) view

    def role_f32(role):                                  # per-role upcast (no big slab copy)
        return slab[role].astype(jnp.float32)

    d_pos = jnp.sum(jnp.abs(role_f32(0) + role_f32(1) - role_f32(2)),
                    axis=-1, keepdims=True)
    d_neg = jnp.sum(jnp.abs(role_f32(3) + role_f32(4) - role_f32(5)),
                    axis=-1, keepdims=True)
    hinge = jnp.maximum(d_pos - d_neg + MARGIN, 0.0)

    if padded_b != batch:
        rows = t * tb + lax.broadcasted_iota(jnp.int32, (tb, 1), 0)
        hinge = jnp.where(rows < batch, hinge, 0.0)

    acc_ref[...] += jnp.sum(hinge, axis=0, keepdims=True)

    @pl.when(t == nt - 1)
    def _():
        out_ref[...] = acc_ref[...] * (1.0 / batch)


# --------------------------------------------------------------------------
# Wrapper
# --------------------------------------------------------------------------
def transea_forward(ent_emb, rel_emb, pos_triplets, neg_triplets, *,
                    block_b=256, gather_mode="auto", share_neg_rel=False):
    """Mean margin-ranking TransE loss (TransEA.forward with is_numerical=False).

    ent_emb: [E+1, D], rel_emb: [R+1, D] (same float dtype, f32 or bf16).
    pos_triplets / neg_triplets: int [3, B] = (head, rel, tail) indices.
    share_neg_rel=True skips gathering the negative relation (reuses pos rel).
    Returns the scalar mean hinge loss (float32).
    """
    assert ent_emb.dtype == rel_emb.dtype
    assert ent_emb.shape[1] == rel_emb.shape[1]
    assert pos_triplets.shape == neg_triplets.shape and pos_triplets.shape[0] == 3

    batch = pos_triplets.shape[1]
    dim = ent_emb.shape[1]
    itemsize = jnp.dtype(ent_emb.dtype).itemsize

    # Lane-dense padded tables (zero cols do not change the L1 distance).
    dp = _round_up(dim, _LANE)
    ep = _round_up(ent_emb.shape[0], _SUBLANE)
    rp = _round_up(rel_emb.shape[0], _SUBLANE)
    ent_p = _pad2d(ent_emb, ep, dp)
    rel_p = _pad2d(rel_emb, rp, dp)

    # Batch tiling; ragged tail padded with the (valid) index 0 and masked.
    tb = _round_up(max(1, min(block_b, batch)), _SUBLANE)
    num_tiles = pl.cdiv(batch, tb)
    padded_b = num_tiles * tb

    idx6 = jnp.concatenate([pos_triplets, neg_triplets], axis=0).astype(jnp.int32)
    if padded_b != batch:
        idx6 = jnp.pad(idx6, ((0, 0), (0, padded_b - batch)))

    if gather_mode == "auto":
        table_bytes = 2 * (ep + rp) * dp * itemsize      # (worst-case double-buffered)
        onehot_bytes = 6 * tb * max(ep, rp) * 4          # live one-hot tiles (f32)
        gather_mode = "vmem" if table_bytes + onehot_bytes <= 24 * 1024 * 1024 else "hbm"

    if gather_mode == "vmem":
        vmem_need = (2 * (ep + rp) * dp * itemsize
                     + 6 * tb * max(ep, rp) * 4 + 12 * tb * dp * 4)
        kernel = functools.partial(_vmem_kernel, batch=batch, tb=tb,
                                   padded_b=padded_b, share_neg_rel=share_neg_rel)
        grid_spec = pltpu.PrefetchScalarGridSpec(
            num_scalar_prefetch=0,
            grid=(num_tiles,),
            in_specs=[
                pl.BlockSpec((tb, 6), lambda t: (t, 0)),     # per-tile indices
                pl.BlockSpec((ep, dp), lambda t: (0, 0)),    # whole ent table, VMEM-resident
                pl.BlockSpec((rp, dp), lambda t: (0, 0)),    # whole rel table, VMEM-resident
            ],
            out_specs=pl.BlockSpec((1, 1), lambda t: (0, 0)),
            scratch_shapes=[pltpu.VMEM((1, 1), jnp.float32)],
        )
        args = (idx6.T, ent_p, rel_p)                        # idx as (padded_b, 6)
    elif gather_mode == "hbm":
        # TODO(synk): for batches in the tens of thousands, stream [6, tb] index
        #             slices per tile instead of scalar-prefetching all of idx
        #             into SMEM.
        vmem_need = 2 * 6 * tb * dp * itemsize + 12 * tb * dp * 4
        kernel = functools.partial(_hbm_kernel, batch=batch, tb=tb, padded_b=padded_b)
        grid_spec = pltpu.PrefetchScalarGridSpec(
            num_scalar_prefetch=1,                           # idx -> SMEM pre-grid
            grid=(num_tiles,),
            in_specs=[
                pl.BlockSpec(memory_space=pl.ANY),           # ent table stays in HBM
                pl.BlockSpec(memory_space=pl.ANY),           # rel table stays in HBM
            ],
            out_specs=pl.BlockSpec((1, 1), lambda t, idx: (0, 0)),
            scratch_shapes=[
                pltpu.VMEM((2, 6, tb, dp), ent_emb.dtype),   # double-buffered gather tile
                pltpu.SemaphoreType.DMA((2,)),               # one DMA semaphore per slot
                pltpu.VMEM((1, 1), jnp.float32),             # hinge-sum accumulator
            ],
        )
        args = (idx6, ent_p, rel_p)
    else:
        raise ValueError(f"unknown gather_mode: {gather_mode}")

    # Raise the scoped VMEM limit only when needed (v5e default is 16 MiB);
    # cap well below v7x's 64 MiB physical VMEM.
    vmem_limit = None
    if vmem_need > 12 * 1024 * 1024:
        vmem_limit = int(min(vmem_need + 16 * 1024 * 1024, 56 * 1024 * 1024))

    out = pl.pallas_call(
        kernel,
        grid_spec=grid_spec,
        out_shape=jax.ShapeDtypeStruct((1, 1), jnp.float32),
        compiler_params=pltpu.CompilerParams(
            dimension_semantics=("arbitrary",),              # accumulation axis
            vmem_limit_bytes=vmem_limit,
        ),
    )(*args)
    return out[0, 0]


def reference_forward(ent_emb, rel_emb, pos, neg):
    def dist(t):
        return jnp.sum(jnp.abs(ent_emb[t[0]] + rel_emb[t[1]] - ent_emb[t[2]]), axis=1)
    return jnp.mean(jnp.maximum(0.0, dist(pos) - dist(neg) + MARGIN))


if __name__ == "__main__":
    dim, ent_num, rel_num = 32, 50, 10

    key = jax.random.PRNGKey(0)
    k_ent, k_rel, k_a, k_b = jax.random.split(key, 4)

    # nn.Embedding(n + 1, dim, padding_idx=n), weights uniform(-1, 1), padding row zeroed.
    ent_embedding = jax.random.uniform(k_ent, (ent_num + 1, dim),
                                       minval=-1.0, maxval=1.0, dtype=jnp.float32)
    ent_embedding = ent_embedding.at[ent_num].set(0.0)
    rel_embedding = jax.random.uniform(k_rel, (rel_num + 1, dim),
                                       minval=-1.0, maxval=1.0, dtype=jnp.float32)
    rel_embedding = rel_embedding.at[rel_num].set(0.0)

    def make_triplets(k, batch):
        kh, kr, kt, knh, knt = jax.random.split(k, 5)
        pos = jnp.stack([
            jax.random.randint(kh, (batch,), 0, ent_num, dtype=jnp.int32),
            jax.random.randint(kr, (batch,), 0, rel_num, dtype=jnp.int32),
            jax.random.randint(kt, (batch,), 0, ent_num, dtype=jnp.int32),
        ])
        neg = jnp.stack([
            jax.random.randint(knh, (batch,), 0, ent_num, dtype=jnp.int32),
            pos[1],
            jax.random.randint(knt, (batch,), 0, ent_num, dtype=jnp.int32),
        ])
        return pos, neg

    # 1) Small batch, auto mode -> VMEM-resident tables + one-hot MXU gather.
    pos, neg = make_triplets(k_a, 10)
    got = jax.block_until_ready(
        transea_forward(ent_embedding, rel_embedding, pos, neg))
    want = reference_forward(ent_embedding, rel_embedding, pos, neg)
    assert jnp.allclose(got, want, rtol=1e-4, atol=1e-4), (got, want)

    # 2) Multi-tile ragged batch, VMEM path, reusing the positive relation for
    #    the negative triple (neg_rel == pos_rel by construction here).
    pos, neg = make_triplets(k_b, 300)
    want = reference_forward(ent_embedding, rel_embedding, pos, neg)
    got = jax.block_until_ready(transea_forward(
        ent_embedding, rel_embedding, pos, neg,
        block_b=128, gather_mode="vmem", share_neg_rel=True))
    assert jnp.allclose(got, want, rtol=1e-4, atol=1e-4), (got, want)

    # 3) Same batch through the HBM per-row-DMA fallback (double-buffered
    #    gather, fori_loop DMA starts, one aggregate wait per slot).
    got = jax.block_until_ready(transea_forward(
        ent_embedding, rel_embedding, pos, neg, block_b=128, gather_mode="hbm"))
    assert jnp.allclose(got, want, rtol=1e-4, atol=1e-4), (got, want)

    print("KERNEL_OK")
</pallas_src>

<mosaic_0001>
module attributes {stable_mosaic.version = 11 : i64} {
  func.func @_vmem_kernel(%arg0: i32, %arg1: memref<16x6xi32, #tpu.memory_space<vmem>>, %arg2: memref<56x128xf32, #tpu.memory_space<vmem>>, %arg3: memref<16x128xf32, #tpu.memory_space<vmem>>, %arg4: memref<1x1xf32, #tpu.memory_space<vmem>>, %arg5: memref<1x1xf32, #tpu.memory_space<vmem>>) attributes {dimension_semantics = [#tpu.dimension_semantics<arbitrary>], iteration_bounds = array<i64: 1>, scalar_prefetch = 0 : i64, scratch_operands = 1 : i64, tpu.core_type = #tpu.core_type<tc>, window_params = [{transform_indices = @transform_0, window_bounds = array<i64: 16, 6>}, {pipeline_mode = #tpu.pipeline_mode<synchronous>, transform_indices = @transform_1, window_bounds = array<i64: 56, 128>}, {pipeline_mode = #tpu.pipeline_mode<synchronous>, transform_indices = @transform_2, window_bounds = array<i64: 16, 128>}, {pipeline_mode = #tpu.pipeline_mode<synchronous>, transform_indices = @transform_3, window_bounds = array<i64: 1, 1>}]} {
    %c0_i32 = arith.constant 0 : i32
    %0 = arith.cmpi eq, %arg0, %c0_i32 : i32
    %1 = arith.extui %0 : i1 to i32
    %c0_i32_0 = arith.constant 0 : i32
    %2 = arith.cmpi ne, %1, %c0_i32_0 : i32
    scf.if %2 {
      %cst_23 = arith.constant 0.000000e+00 : f32
      %79 = vector.broadcast %cst_23 : f32 to vector<1x1xf32>
      %c0_24 = arith.constant 0 : index
      %c0_25 = arith.constant 0 : index
      %80 = vector.load %arg5[%c0_24, %c0_25] : memref<1x1xf32, #tpu.memory_space<vmem>>, vector<1x1xf32>
      tpu.vector_store %arg5[%c0_24, %c0_25], %79 {strides = array<i32>} : memref<1x1xf32, #tpu.memory_space<vmem>>, vector<1x1xf32>,
    } else {
    }
    %c0 = arith.constant 0 : index
    %c0_1 = arith.constant 0 : index
    %3 = vector.load %arg1[%c0, %c0_1] : memref<16x6xi32, #tpu.memory_space<vmem>>, vector<16x6xi32>
    %c0_2 = arith.constant 0 : index
    %c0_3 = arith.constant 0 : index
    %4 = vector.load %arg2[%c0_2, %c0_3] : memref<56x128xf32, #tpu.memory_space<vmem>>, vector<56x128xf32>
    %c0_4 = arith.constant 0 : index
    %c0_5 = arith.constant 0 : index
    %5 = vector.load %arg3[%c0_4, %c0_5] : memref<16x128xf32, #tpu.memory_space<vmem>>, vector<16x128xf32>
    %6 = vector.extract_strided_slice %3 {offsets = [0, 0], sizes = [16, 1], strides = [1, 1]} : vector<16x6xi32> to vector<16x1xi32>
    %7 = tpu.iota {dimensions = array<i32: 1>} : vector<16x56xi32>
    %8 = vector.broadcast %6 : vector<16x1xi32> to vector<16x56xi32>
    %9 = arith.cmpi eq, %7, %8 : vector<16x56xi32>
    %10 = arith.extui %9 : vector<16x56xi1> to vector<16x56xi32>
    %11 = arith.sitofp %10 : vector<16x56xi32> to vector<16x56xf32>
    %cst = arith.constant dense<0.000000e+00> : vector<16x128xf32>
    %12 = tpu.matmul %11, %4, %cst {dimension_numbers = #tpu.dot_dimension_numbers<[1], [0], [0], [1], [0, 0, 1, 1], [], []>, precision = #tpu.contract_precision<fp32>} : vector<16x56xf32>, vector<56x128xf32>, vector<16x128xf32> -> vector<16x128xf32>
    %13 = vector.extract_strided_slice %3 {offsets = [0, 1], sizes = [16, 1], strides = [1, 1]} : vector<16x6xi32> to vector<16x1xi32>
    %14 = tpu.iota {dimensions = array<i32: 1>} : vector<16x16xi32>
    %15 = vector.broadcast %13 : vector<16x1xi32> to vector<16x16xi32>
    %16 = arith.cmpi eq, %14, %15 : vector<16x16xi32>
    %17 = arith.extui %16 : vector<16x16xi1> to vector<16x16xi32>
    %18 = arith.sitofp %17 : vector<16x16xi32> to vector<16x16xf32>
    %cst_6 = arith.constant dense<0.000000e+00> : vector<16x128xf32>
    %19 = tpu.matmul %18, %5, %cst_6 {dimension_numbers = #tpu.dot_dimension_numbers<[1], [0], [0], [1], [0, 0, 1, 1], [], []>, precision = #tpu.contract_precision<fp32>} : vector<16x16xf32>, vector<16x128xf32>, vector<16x128xf32> -> vector<16x128xf32>
    %20 = vector.extract_strided_slice %3 {offsets = [0, 2], sizes = [16, 1], strides = [1, 1]} : vector<16x6xi32> to vector<16x1xi32>
    %21 = tpu.iota {dimensions = array<i32: 1>} : vector<16x56xi32>
    %22 = vector.broadcast %20 : vector<16x1xi32> to vector<16x56xi32>
    %23 = arith.cmpi eq, %21, %22 : vector<16x56xi32>
    %24 = arith.extui %23 : vector<16x56xi1> to vector<16x56xi32>
    %25 = arith.sitofp %24 : vector<16x56xi32> to vector<16x56xf32>
    %cst_7 = arith.constant dense<0.000000e+00> : vector<16x128xf32>
    %26 = tpu.matmul %25, %4, %cst_7 {dimension_numbers = #tpu.dot_dimension_numbers<[1], [0], [0], [1], [0, 0, 1, 1], [], []>, precision = #tpu.contract_precision<fp32>} : vector<16x56xf32>, vector<56x128xf32>, vector<16x128xf32> -> vector<16x128xf32>
    %27 = vector.extract_strided_slice %3 {offsets = [0, 3], sizes = [16, 1], strides = [1, 1]} : vector<16x6xi32> to vector<16x1xi32>
    %28 = tpu.iota {dimensions = array<i32: 1>} : vector<16x56xi32>
    %29 = vector.broadcast %27 : vector<16x1xi32> to vector<16x56xi32>
    %30 = arith.cmpi eq, %28, %29 : vector<16x56xi32>
    %31 = arith.extui %30 : vector<16x56xi1> to vector<16x56xi32>
    %32 = arith.sitofp %31 : vector<16x56xi32> to vector<16x56xf32>
    %cst_8 = arith.constant dense<0.000000e+00> : vector<16x128xf32>
    %33 = tpu.matmul %32, %4, %cst_8 {dimension_numbers = #tpu.dot_dimension_numbers<[1], [0], [0], [1], [0, 0, 1, 1], [], []>, precision = #tpu.contract_precision<fp32>} : vector<16x56xf32>, vector<56x128xf32>, vector<16x128xf32> -> vector<16x128xf32>
    %34 = vector.extract_strided_slice %3 {offsets = [0, 4], sizes = [16, 1], strides = [1, 1]} : vector<16x6xi32> to vector<16x1xi32>
    %35 = tpu.iota {dimensions = array<i32: 1>} : vector<16x16xi32>
    %36 = vector.broadcast %34 : vector<16x1xi32> to vector<16x16xi32>
    %37 = arith.cmpi eq, %35, %36 : vector<16x16xi32>
    %38 = arith.extui %37 : vector<16x16xi1> to vector<16x16xi32>
    %39 = arith.sitofp %38 : vector<16x16xi32> to vector<16x16xf32>
    %cst_9 = arith.constant dense<0.000000e+00> : vector<16x128xf32>
    %40 = tpu.matmul %39, %5, %cst_9 {dimension_numbers = #tpu.dot_dimension_numbers<[1], [0], [0], [1], [0, 0, 1, 1], [], []>, precision = #tpu.contract_precision<fp32>} : vector<16x16xf32>, vector<16x128xf32>, vector<16x128xf32> -> vector<16x128xf32>
    %41 = vector.extract_strided_slice %3 {offsets = [0, 5], sizes = [16, 1], strides = [1, 1]} : vector<16x6xi32> to vector<16x1xi32>
    %42 = tpu.iota {dimensions = array<i32: 1>} : vector<16x56xi32>
    %43 = vector.broadcast %41 : vector<16x1xi32> to vector<16x56xi32>
    %44 = arith.cmpi eq, %42, %43 : vector<16x56xi32>
    %45 = arith.extui %44 : vector<16x56xi1> to vector<16x56xi32>
    %46 = arith.sitofp %45 : vector<16x56xi32> to vector<16x56xf32>
    %cst_10 = arith.constant dense<0.000000e+00> : vector<16x128xf32>
    %47 = tpu.matmul %46, %4, %cst_10 {dimension_numbers = #tpu.dot_dimension_numbers<[1], [0], [0], [1], [0, 0, 1, 1], [], []>, precision = #tpu.contract_precision<fp32>} : vector<16x56xf32>, vector<56x128xf32>, vector<16x128xf32> -> vector<16x128xf32>
    %48 = arith.addf %12, %19 : vector<16x128xf32>
    %49 = arith.subf %48, %26 : vector<16x128xf32>
    %50 = math.absf %49 : vector<16x128xf32>
    %cst_11 = arith.constant dense<0.000000e+00> : vector<16xf32>
    %51 = vector.multi_reduction <add>, %50, %cst_11 [1] : vector<16x128xf32> to vector<16xf32>
    %52 = vector.shape_cast %51 : vector<16xf32> to vector<16x1xf32>
    %53 = arith.addf %33, %40 : vector<16x128xf32>
    %54 = arith.subf %53, %47 : vector<16x128xf32>
    %55 = math.absf %54 : vector<16x128xf32>
    %cst_12 = arith.constant dense<0.000000e+00> : vector<16xf32>
    %56 = vector.multi_reduction <add>, %55, %cst_12 [1] : vector<16x128xf32> to vector<16xf32>
    %57 = vector.shape_cast %56 : vector<16xf32> to vector<16x1xf32>
    %58 = arith.subf %52, %57 : vector<16x1xf32>
    %cst_13 = arith.constant 5.000000e+00 : f32
    %59 = vector.broadcast %cst_13 : f32 to vector<16x1xf32>
    %60 = arith.addf %58, %59 : vector<16x1xf32>
    %cst_14 = arith.constant 0.000000e+00 : f32
    %61 = vector.broadcast %cst_14 : f32 to vector<16x1xf32>
    %62 = arith.maximumf %60, %61 : vector<16x1xf32>
    %c16_i32 = arith.constant 16 : i32
    %63 = arith.muli %arg0, %c16_i32 : i32
    %64 = tpu.iota {dimensions = array<i32: 0>} : vector<16x1xi32>
    %65 = vector.broadcast %63 : i32 to vector<16x1xi32>
    %66 = arith.addi %65, %64 : vector<16x1xi32>
    %c10_i32 = arith.constant 10 : i32
    %67 = vector.broadcast %c10_i32 : i32 to vector<16x1xi32>
    %68 = arith.cmpi slt, %66, %67 : vector<16x1xi32>
    %cst_15 = arith.constant 0.000000e+00 : f32
    %69 = vector.broadcast %cst_15 : f32 to vector<16x1xf32>
    %70 = arith.select %68, %62, %69 : vector<16x1xi1>, vector<16x1xf32>
    %c0_16 = arith.constant 0 : index
    %c0_17 = arith.constant 0 : index
    %71 = vector.load %arg5[%c0_16, %c0_17] : memref<1x1xf32, #tpu.memory_space<vmem>>, vector<1x1xf32>
    %cst_18 = arith.constant dense<0.000000e+00> : vector<1xf32>
    %72 = vector.multi_reduction <add>, %70, %cst_18 [0] : vector<16x1xf32> to vector<1xf32>
    %73 = vector.shape_cast %72 : vector<1xf32> to vector<1x1xf32>
    %74 = arith.addf %71, %73 : vector<1x1xf32>
    %c0_19 = arith.constant 0 : index
    %c0_20 = arith.constant 0 : index
    %75 = vector.load %arg5[%c0_19, %c0_20] : memref<1x1xf32, #tpu.memory_space<vmem>>, vector<1x1xf32>
    tpu.vector_store %arg5[%c0_19, %c0_20], %74 {strides = array<i32>} : memref<1x1xf32, #tpu.memory_space<vmem>>, vector<1x1xf32>,
    %c0_i32_21 = arith.constant 0 : i32
    %76 = arith.cmpi eq, %arg0, %c0_i32_21 : i32
    %77 = arith.extui %76 : i1 to i32
    %c0_i32_22 = arith.constant 0 : i32
    %78 = arith.cmpi ne, %77, %c0_i32_22 : i32
    scf.if %78 {
      %c0_23 = arith.constant 0 : index
      %c0_24 = arith.constant 0 : index
      %79 = vector.load %arg5[%c0_23, %c0_24] : memref<1x1xf32, #tpu.memory_space<vmem>>, vector<1x1xf32>
      %cst_25 = arith.constant 1.000000e-01 : f32
      %80 = vector.broadcast %cst_25 : f32 to vector<1x1xf32>
      %81 = arith.mulf %79, %80 : vector<1x1xf32>
      %c0_26 = arith.constant 0 : index
      %c0_27 = arith.constant 0 : index
      %82 = vector.load %arg4[%c0_26, %c0_27] : memref<1x1xf32, #tpu.memory_space<vmem>>, vector<1x1xf32>
      tpu.vector_store %arg4[%c0_26, %c0_27], %81 {strides = array<i32>} : memref<1x1xf32, #tpu.memory_space<vmem>>, vector<1x1xf32>,
    } else {
    }
    return
  }
  func.func @transform_0(%arg0: i32) -> (i32, i32) {
    %c0_i32 = arith.constant 0 : i32
    %c0_i32_0 = arith.constant 0 : i32
    return %arg0, %c0_i32 : i32, i32
  }
  func.func @transform_1(%arg0: i32) -> (i32, i32) {
    %c0_i32 = arith.constant 0 : i32
    %c0_i32_0 = arith.constant 0 : i32
    %c0_i32_1 = arith.constant 0 : i32
    return %c0_i32, %c0_i32_0 : i32, i32
  }
  func.func @transform_2(%arg0: i32) -> (i32, i32) {
    %c0_i32 = arith.constant 0 : i32
    %c0_i32_0 = arith.constant 0 : i32
    %c0_i32_1 = arith.constant 0 : i32
    return %c0_i32, %c0_i32_0 : i32, i32
  }
  func.func @transform_3(%arg0: i32) -> (i32, i32) {
    %c0_i32 = arith.constant 0 : i32
    %c0_i32_0 = arith.constant 0 : i32
    %c0_i32_1 = arith.constant 0 : i32
    return %c0_i32, %c0_i32_0 : i32, i32
  }
}

</mosaic_0001>

<llo_original>
// kernel: tpu_custom_call.1
$region0: #{tpu_custom_call.1}
  #allocation0 [shape = 'u32[]', space=smem, size = 0x4, offset = 0x4, fixed_abs, tag = 'smem constant byte address 0x4 - core index']
  #allocation1 [shape = 'u32[144,128]{1,0:T(1,128)}', space=vmem, size = 0x12000, scoped, tag = 'internal scratch']
  #allocation2 [shape = 'f32[1,1]{1,0:T(1,128)}', space=vmem, size = 0x200, scoped, tag = 'scratch operand']
  %s0 = inlined_call_operand.vmem [shape: s32[16,6], index: 0, kind: input, shape index: {}]
  %s1 = inlined_call_operand.hbm [shape: f32[56,128], index: 1, kind: input, shape index: {}]
  %s2 = inlined_call_operand.vmem [shape: f32[16,128], index: 2, kind: input, shape index: {}]
  %s3 = inlined_call_operand.hbm [shape: f32[1,1], index: 3, kind: output, shape index: {}]
  %s4 = sld [smem:[#allocation0]]
  $region34: #{tpu_custom_call.1} parent=0
    _
  %s6 = ssub.s32 1, %s4
  %s7 = scalar_select 0, %s6, %s4
  $region1: #{tpu_custom_call.1} parent=0
    #allocation3 [shape = 'u8[28672]{0}', space=vmem, size = 0x7000, scoped, tag = 'input window, operand 1, single buffered']
    #allocation4 [shape = 's32[1]{0}', space=sflag, size = 0x4, scoped, tag = 'scoped memory for tpu_custom_call.1']
    #allocation5 [shape = 's32[1]{0}', space=sflag, size = 0x4, scoped, tag = 'scoped memory for tpu_custom_call.1']
    #allocation6 [shape = 'u8[512]{0}', space=vmem, size = 0x400, scoped, tag = 'output window, operand 0, single buffered']
    %8 = vsyncpa [#allocation4], 0
    %9 = vsyncpa [#allocation5], 0
    // Predicated region
    $region2: #{tpu_custom_call.1} parent=1 // pred_check
      _
    $region3: #{tpu_custom_call.1} parent=1 // pred_check_branch
      %11 = sbr.rel (0) target = $region5
    $region4: #{tpu_custom_call.1} parent=1 // pred_region
      _
    $region5: #{tpu_custom_call.1} parent=1 // pred_fallthru
      _
    // Predicated region
    $region6: #{tpu_custom_call.1} parent=1 // pred_check
      _
    $region7: #{tpu_custom_call.1} parent=1 // pred_check_branch
      %13 = sbr.rel (0) target = $region9
    $region8: #{tpu_custom_call.1} parent=1 // pred_region
      %s15 = ssub.s32 896, 896
      %16 = vsyncadd [#allocation4], %s15
      %s17 = sshll.u32 [#allocation3], 4
      %s18 = int_to_ptr.vmem [resolvable:$true] %s17
      %23 = dma.hbm_to_vmem [thread:$0]  %s1, 896, %s18, [#allocation4], 128, 128, 8
    $region9: #{tpu_custom_call.1} parent=1 // pred_fallthru
      _
    // Predicated region
    $region10: #{tpu_custom_call.1} parent=1 // pred_check
      _
    $region11: #{tpu_custom_call.1} parent=1 // pred_check_branch
      %25 = sbr.rel (0) target = $region13
    $region12: #{tpu_custom_call.1} parent=1 // pred_region
      _
    $region13: #{tpu_custom_call.1} parent=1 // pred_fallthru
      _
    // Predicated region
    $region14: #{tpu_custom_call.1} parent=1 // pred_check
      _
    $region15: #{tpu_custom_call.1} parent=1 // pred_check_branch
      %27 = sbr.rel (0) target = $region17
    $region16: #{tpu_custom_call.1} parent=1 // pred_region
      %28 = dma.done [#allocation4], 896
    $region17: #{tpu_custom_call.1} parent=1 // pred_fallthru
      _
    %p29 = scmp.eq.s32.totalorder 0, 0
    // Predicated region
    $region18: #{tpu_custom_call.1} parent=1 // pred_check
      %p30 = pneg %p29
    $region19: #{tpu_custom_call.1} parent=1 // pred_check_branch
      %32 = sbr.rel (%p30) target = $region21
    $region20: #{tpu_custom_call.1} parent=1 // pred_region
      %vm33 = vcmask 0
      %34 = vst.msk [vmem:[#allocation2] sm:$0x1] %vm33, 0.0
    $region21: #{tpu_custom_call.1} parent=1 // pred_fallthru
      _
    %v35 = vld [vmem:[%s0] sm:$0xff]
    %v36 = vld [vmem:[%s0 + $0x8] sm:$0xff]
    %v37 = vld [vmem:[#allocation3] sm:$0xff]
    %v38 = vld [vmem:[#allocation3 + $0x8] sm:$0xff]
    %v39 = vld [vmem:[#allocation3 + $0x10] sm:$0xff]
    %v40 = vld [vmem:[#allocation3 + $0x18] sm:$0xff]
    %v41 = vld [vmem:[#allocation3 + $0x20] sm:$0xff]
    %v42 = vld [vmem:[#allocation3 + $0x28] sm:$0xff]
    %v43 = vld [vmem:[#allocation3 + $0x30] sm:$0xff]
    %v44 = vld [vmem:[%s2] sm:$0xff]
    %v45 = vld [vmem:[%s2 + $0x8] sm:$0xff]
    %v46 = vlaneseq
    %v47 = vand.u32 %v46, 127
    %48 = vset.pattern.permute.xlu0 0
    %49 = vperm.xlu0 %48, %v35
    %v50 = vpop.permute.xlu0 %49
    %51 = vset.pattern.permute.xlu0 0
    %52 = vperm.xlu0 %51, %v36
    %v53 = vpop.permute.xlu0 %52
    %vm54 = vcmp.eq.s32.totalorder %v47, %v50
    %vm55 = vcmp.eq.s32.totalorder %v47, %v53
    %v56 = vsel %vm54, 1, 0
    %v57 = vsel %vm55, 1, 0
    %v58 = vcvt.s32.f32 %v56
    %v59 = vcvt.s32.f32 %v57
    %60 = vset.pattern.permute.xlu0 1
    %61 = vperm.xlu0 %60, %v35
    %v62 = vpop.permute.xlu0 %61
    %63 = vset.pattern.permute.xlu0 1
    %64 = vperm.xlu0 %63, %v36
    %v65 = vpop.permute.xlu0 %64
    %vm66 = vcmp.eq.s32.totalorder %v47, %v62
    %vm67 = vcmp.eq.s32.totalorder %v47, %v65
    %v68 = vsel %vm66, 1, 0
    %v69 = vsel %vm67, 1, 0
    %v70 = vcvt.s32.f32 %v68
    %v71 = vcvt.s32.f32 %v69
    %vm72 = vcmask 130048
    %v74 = vsel %vm72, %v70, 0
    %v77 = vsel %vm72, %v71, 0
    %79 = vmatprep.subr.mxu0 0.0
    %v80 = vand.u32 %v44, 4294901760
    %81 = vmatpush1.msra.mxu0 %v80
    %82 = vmatprep.subr.mxu0 0.0
    %v83 = vand.u32 %v45, 4294901760
    %84 = vmatpush1.msra.mxu0 %v83
    %85 = vmatprep.subr.mxu0 0.0
    %86 = vmatpush1.msra.mxu0 0.0
    %87 = vmatprep.subr.mxu0 0.0
    %88 = vmatpush1.msra.mxu0 0.0
    %89 = vmatprep.subr.mxu0 0.0
    %90 = vmatpush1.msra.mxu0 0.0
    %91 = vmatprep.subr.mxu0 0.0
    %92 = vmatpush1.msra.mxu0 0.0
    %93 = vmatprep.subr.mxu0 0.0
    %94 = vmatpush1.msra.mxu0 0.0
    %95 = vmatprep.subr.mxu0 0.0
    %96 = vmatpush1.msra.mxu0 0.0
    %97 = vmatprep.subr.mxu0 0.0
    %98 = vmatpush1.msra.mxu0 0.0
    %99 = vmatprep.subr.mxu0 0.0
    %100 = vmatpush1.msra.mxu0 0.0
    %101 = vmatprep.subr.mxu0 0.0
    %102 = vmatpush1.msra.mxu0 0.0
    %103 = vmatprep.subr.mxu0 0.0
    %104 = vmatpush1.msra.mxu0 0.0
    %105 = vmatprep.subr.mxu0 0.0
    %106 = vmatpush1.msra.mxu0 0.0
    %107 = vmatprep.subr.mxu0 0.0
    %108 = vmatpush1.msra.mxu0 0.0
    %109 = vmatprep.subr.mxu0 0.0
    %110 = vmatpush1.msra.mxu0 0.0
    %111 = vmatprep.subr.mxu0 0.0
    %112 = vmatpush1.msra.mxu0 0.0
    %113 = vmatprep.subr.mxu0 0.0
    %114 = vmatpush1.msra.mxu0 0.0
    %115 = vmatprep.subr.mxu0 0.0
    %116 = vmatpush1.msra.mxu0 0.0
    %117 = vmatprep.subr.mxu0 0.0
    %118 = vmatpush1.msra.mxu0 0.0
    %119 = vmatprep.subr.mxu0 0.0
    %120 = vmatpush1.msra.mxu0 0.0
    %121 = vmatprep.subr.mxu0 0.0
    %122 = vmatpush1.msra.mxu0 0.0
    %123 = vmatprep.subr.mxu0 0.0
    %124 = vmatpush1.msra.mxu0 0.0
    %125 = vmatprep.subr.mxu0 0.0
    %126 = vmatpush1.msra.mxu0 0.0
    %127 = vmatprep.subr.mxu0 0.0
    %128 = vmatpush1.msra.mxu0 0.0
    %129 = vmatprep.subr.mxu0 0.0
    %130 = vmatpush1.msra.mxu0 0.0
    %131 = vmatprep.subr.mxu0 0.0
    %132 = vmatpush1.msra.mxu0 0.0
    %133 = vmatprep.subr.mxu0 0.0
    %134 = vmatpush1.msra.mxu0 0.0
    %135 = vmatprep.subr.mxu0 0.0
    %136 = vmatpush1.msra.mxu0 0.0
    %137 = vmatprep.subr.mxu0 0.0
    %138 = vmatpush1.msra.mxu0 0.0
    %139 = vmatprep.subr.mxu0 0.0
    %140 = vmatpush1.msra.mxu0 0.0
    %141 = vmatprep.subr.mxu0 0.0
    %142 = vmatpush1.msra.mxu0 0.0
    %143 = vmatprep.subr.mxu0 0.0
    %144 = vmatpush1.msra.mxu0 0.0
    %145 = vmatprep.mubr.f32.mxu0 0.0
    %v146 = vand.u32 %v74, 4294901760
    %v147 = vsub.f32 %v74, %v146
    %v148 = vand.u32 %v147, 4294901760
    %v149 = vsub.f32 %v147, %v148
    %v150 = vand.u32 %v149, 4294901760
    %151 = vmatmul.mubr.f32.gmra.mrb[0].mxu0 %v150
    %v152 = vpop.f32.mrb[0].mxu0
    %v153 = vadd.f32 0.0, %v152
    %v154 = vpop.f32.mrb[0].mxu0
    %155 = vmatprep.mubr.f32.mxu0 0.0
    %v156 = vand.u32 %v77, 4294901760
    %v157 = vsub.f32 %v77, %v156
    %v158 = vand.u32 %v157, 4294901760
    %v159 = vsub.f32 %v157, %v158
    %v160 = vand.u32 %v159, 4294901760
    %161 = vmatmul.mubr.f32.gmra.mrb[0].mxu0 %v160
    %v162 = vpop.f32.mrb[0].mxu0
    %v163 = vadd.f32 0.0, %v162
    %v164 = vpop.f32.mrb[0].mxu0
    %165 = vdwg.mxu0
    %166 = vmatprep.subr.mxu0 0.0
    %v167 = vand.u32 %v44, 4294901760
    %v168 = vsub.f32 %v44, %v167
    %v169 = vand.u32 %v168, 4294901760
    %v170 = vsub.f32 %v168, %v169
    %v171 = vand.u32 %v170, 4294901760
    %172 = vmatpush1.msra.mxu0 %v171
    %173 = vmatprep.subr.mxu0 0.0
    %v174 = vand.u32 %v45, 4294901760
    %v175 = vsub.f32 %v45, %v174
    %v176 = vand.u32 %v175, 4294901760
    %v177 = vsub.f32 %v175, %v176
    %v178 = vand.u32 %v177, 4294901760
    %179 = vmatpush1.msra.mxu0 %v178
    %180 = vmatprep.subr.mxu0 0.0
    %181 = vmatpush1.msra.mxu0 0.0
    %182 = vmatprep.subr.mxu0 0.0
    %183 = vmatpush1.msra.mxu0 0.0
    %184 = vmatprep.subr.mxu0 0.0
    %185 = vmatpush1.msra.mxu0 0.0
    %186 = vmatprep.subr.mxu0 0.0
    %187 = vmatpush1.msra.mxu0 0.0
    %188 = vmatprep.subr.mxu0 0.0
    %189 = vmatpush1.msra.mxu0 0.0
    %190 = vmatprep.subr.mxu0 0.0
    %191 = vmatpush1.msra.mxu0 0.0
    %192 = vmatprep.subr.mxu0 0.0
    %193 = vmatpush1.msra.mxu0 0.0
    %194 = vmatprep.subr.mxu0 0.0
    %195 = vmatpush1.msra.mxu0 0.0
    %196 = vmatprep.subr.mxu0 0.0
    %197 = vmatpush1.msra.mxu0 0.0
    %198 = vmatprep.subr.mxu0 0.0
    %199 = vmatpush1.msra.mxu0 0.0
    %200 = vmatprep.subr.mxu0 0.0
    %201 = vmatpush1.msra.mxu0 0.0
    %202 = vmatprep.subr.mxu0 0.0
    %203 = vmatpush1.msra.mxu0 0.0
    %204 = vmatprep.subr.mxu0 0.0
    %205 = vmatpush1.msra.mxu0 0.0
    %206 = vmatprep.subr.mxu0 0.0
    %207 = vmatpush1.msra.mxu0 0.0
    %208 = vmatprep.subr.mxu0 0.0
    %209 = vmatpush1.msra.mxu0 0.0
    %210 = vmatprep.subr.mxu0 0.0
    %211 = vmatpush1.msra.mxu0 0.0
    %212 = vmatprep.subr.mxu0 0.0
    %213 = vmatpush1.msra.mxu0 0.0
    %214 = vmatprep.subr.mxu0 0.0
    %215 = vmatpush1.msra.mxu0 0.0
    %216 = vmatprep.subr.mxu0 0.0
    %217 = vmatpush1.msra.mxu0 0.0
    %218 = vmatprep.subr.mxu0 0.0
    %219 = vmatpush1.msra.mxu0 0.0
    %220 = vmatprep.subr.mxu0 0.0
    %221 = vmatpush1.msra.mxu0 0.0
    %222 = vmatprep.subr.mxu0 0.0
    %223 = vmatpush1.msra.mxu0 0.0
    %224 = vmatprep.subr.mxu0 0.0
    %225 = vmatpush1.msra.mxu0 0.0
    %226 = vmatprep.subr.mxu0 0.0
    %227 = vmatpush1.msra.mxu0 0.0
    %228 = vmatprep.subr.mxu0 0.0
    %229 = vmatpush1.msra.mxu0 0.0
    %230 = vmatprep.subr.mxu0 0.0
    %231 = vmatpush1.msra.mxu0 0.0
    %232 = vmatprep.subr.mxu0 0.0
    %233 = vmatpush1.msra.mxu0 0.0
    %234 = vmatprep.subr.mxu0 0.0
    %235 = vmatpush1.msra.mxu0 0.0
    %236 = vmatprep.subr.mxu0 0.0
    %237 = vmatpush1.msra.mxu0 0.0
    %238 = vmatprep.subr.mxu0 0.0
    %239 = vmatpush1.msra.mxu0 0.0
    %240 = vmatprep.mubr.f32.mxu0 0.0
    %v241 = vand.u32 %v74, 4294901760
    %242 = vmatmul.mubr.f32.gmra.mrb[0].mxu0 %v241
    %v243 = vpop.f32.mrb[0].mxu0
    %v244 = vadd.f32 %v153, %v243
    %v245 = vpop.f32.mrb[0].mxu0
    %246 = vmatprep.mubr.f32.mxu0 0.0
    %v247 = vand.u32 %v77, 4294901760
    %248 = vmatmul.mubr.f32.gmra.mrb[0].mxu0 %v247
    %v249 = vpop.f32.mrb[0].mxu0
    %v250 = vadd.f32 %v163, %v249
    %v251 = vpop.f32.mrb[0].mxu0
    %252 = vdwg.mxu0
    %253 = vmatprep.subr.mxu0 0.0
    %v254 = vand.u32 %v44, 4294901760
    %v255 = vsub.f32 %v44, %v254
    %256 = vmatpush1.msra.mxu0 %v255
    %257 = vmatprep.subr.mxu0 0.0
    %v258 = vand.u32 %v45, 4294901760
    %v259 = vsub.f32 %v45, %v258
    %260 = vmatpush1.msra.mxu0 %v259
    %261 = vmatprep.subr.mxu0 0.0
    %262 = vmatpush1.msra.mxu0 0.0
    %263 = vmatprep.subr.mxu0 0.0
    %264 = vmatpush1.msra.mxu0 0.0
    %265 = vmatprep.subr.mxu0 0.0
    %266 = vmatpush1.msra.mxu0 0.0
    %267 = vmatprep.subr.mxu0 0.0
    %268 = vmatpush1.msra.mxu0 0.0
    %269 = vmatprep.subr.mxu0 0.0
    %270 = vmatpush1.msra.mxu0 0.0
    %271 = vmatprep.subr.mxu0 0.0
    %272 = vmatpush1.msra.mxu0 0.0
    %273 = vmatprep.subr.mxu0 0.0
    %274 = vmatpush1.msra.mxu0 0.0
    %275 = vmatprep.subr.mxu0 0.0
    %276 = vmatpush1.msra.mxu0 0.0
    %277 = vmatprep.subr.mxu0 0.0
    %278 = vmatpush1.msra.mxu0 0.0
    %279 = vmatprep.subr.mxu0 0.0
    %280 = vmatpush1.msra.mxu0 0.0
    %281 = vmatprep.subr.mxu0 0.0
    %282 = vmatpush1.msra.mxu0 0.0
    %283 = vmatprep.subr.mxu0 0.0
    %284 = vmatpush1.msra.mxu0 0.0
    %285 = vmatprep.subr.mxu0 0.0
    %286 = vmatpush1.msra.mxu0 0.0
    %287 = vmatprep.subr.mxu0 0.0
    %288 = vmatpush1.msra.mxu0 0.0
    %289 = vmatprep.subr.mxu0 0.0
    %290 = vmatpush1.msra.mxu0 0.0
    %291 = vmatprep.subr.mxu0 0.0
    %292 = vmatpush1.msra.mxu0 0.0
    %293 = vmatprep.subr.mxu0 0.0
    %294 = vmatpush1.msra.mxu0 0.0
    %295 = vmatprep.subr.mxu0 0.0
    %296 = vmatpush1.msra.mxu0 0.0
    %297 = vmatprep.subr.mxu0 0.0
    %298 = vmatpush1.msra.mxu0 0.0
    %299 = vmatprep.subr.mxu0 0.0
    %300 = vmatpush1.msra.mxu0 0.0
    %301 = vmatprep.subr.mxu0 0.0
    %302 = vmatpush1.msra.mxu0 0.0
    %303 = vmatprep.subr.mxu0 0.0
    %304 = vmatpush1.msra.mxu0 0.0
    %305 = vmatprep.subr.mxu0 0.0
    %306 = vmatpush1.msra.mxu0 0.0
    %307 = vmatprep.subr.mxu0 0.0
    %308 = vmatpush1.msra.mxu0 0.0
    %309 = vmatprep.subr.mxu0 0.0
    %310 = vmatpush1.msra.mxu0 0.0
    %311 = vmatprep.subr.mxu0 0.0
    %312 = vmatpush1.msra.mxu0 0.0
    %313 = vmatprep.subr.mxu0 0.0
    %314 = vmatpush1.msra.mxu0 0.0
    %315 = vmatprep.subr.mxu0 0.0
    %316 = vmatpush1.msra.mxu0 0.0
    %317 = vmatprep.subr.mxu0 0.0
    %318 = vmatpush1.msra.mxu0 0.0
    %319 = vmatprep.subr.mxu0 0.0
    %320 = vmatpush1.msra.mxu0 0.0
    %321 = vmatprep.mubr.f32.mxu0 0.0
    %v322 = vand.u32 %v74, 4294901760
    %v323 = vsub.f32 %v74, %v322
    %324 = vmatmul.mubr.f32.gmra.mrb[0].mxu0 %v323
    %v325 = vpop.f32.mrb[0].mxu0
    %v326 = vadd.f32 %v244, %v325
    %v327 = vpop.f32.mrb[0].mxu0
    %328 = vmatprep.mubr.f32.mxu0 0.0
    %v329 = vand.u32 %v77, 4294901760
    %v330 = vsub.f32 %v77, %v329
    %331 = vmatmul.mubr.f32.gmra.mrb[0].mxu0 %v330
    %v332 = vpop.f32.mrb[0].mxu0
    %v333 = vadd.f32 %v250, %v332
    %v334 = vpop.f32.mrb[0].mxu0
    %335 = vdwg.mxu0
    %336 = vmatprep.subr.mxu0 0.0
    %v337 = vand.u32 %v44, 4294901760
    %338 = vmatpush1.msra.mxu0 %v337
    %339 = vmatprep.subr.mxu0 0.0
    %v340 = vand.u32 %v45, 4294901760
    %341 = vmatpush1.msra.mxu0 %v340
    %342 = vmatprep.subr.mxu0 0.0
    %343 = vmatpush1.msra.mxu0 0.0
    %344 = vmatprep.subr.mxu0 0.0
    %345 = vmatpush1.msra.mxu0 0.0
    %346 = vmatprep.subr.mxu0 0.0
    %347 = vmatpush1.msra.mxu0 0.0
    %348 = vmatprep.subr.mxu0 0.0
    %349 = vmatpush1.msra.mxu0 0.0
    %350 = vmatprep.subr.mxu0 0.0
    %351 = vmatpush1.msra.mxu0 0.0
    %352 = vmatprep.subr.mxu0 0.0
    %353 = vmatpush1.msra.mxu0 0.0
    %354 = vmatprep.subr.mxu0 0.0
    %355 = vmatpush1.msra.mxu0 0.0
    %356 = vmatprep.subr.mxu0 0.0
    %357 = vmatpush1.msra.mxu0 0.0
    %358 = vmatprep.subr.mxu0 0.0
    %359 = vmatpush1.msra.mxu0 0.0
    %360 = vmatprep.subr.mxu0 0.0
    %361 = vmatpush1.msra.mxu0 0.0
    %362 = vmatprep.subr.mxu0 0.0
    %363 = vmatpush1.msra.mxu0 0.0
    %364 = vmatprep.subr.mxu0 0.0
    %365 = vmatpush1.msra.mxu0 0.0
    %366 = vmatprep.subr.mxu0 0.0
    %367 = vmatpush1.msra.mxu0 0.0
    %368 = vmatprep.subr.mxu0 0.0
    %369 = vmatpush1.msra.mxu0 0.0
    %370 = vmatprep.subr.mxu0 0.0
    %371 = vmatpush1.msra.mxu0 0.0
    %372 = vmatprep.subr.mxu0 0.0
    %373 = vmatpush1.msra.mxu0 0.0
    %374 = vmatprep.subr.mxu0 0.0
    %375 = vmatpush1.msra.mxu0 0.0
    %376 = vmatprep.subr.mxu0 0.0
    %377 = vmatpush1.msra.mxu0 0.0
    %378 = vmatprep.subr.mxu0 0.0
    %379 = vmatpush1.msra.mxu0 0.0
    %380 = vmatprep.subr.mxu0 0.0
    %381 = vmatpush1.msra.mxu0 0.0
    %382 = vmatprep.subr.mxu0 0.0
    %383 = vmatpush1.msra.mxu0 0.0
    %384 = vmatprep.subr.mxu0 0.0
    %385 = vmatpush1.msra.mxu0 0.0
    %386 = vmatprep.subr.mxu0 0.0
    %387 = vmatpush1.msra.mxu0 0.0
    %388 = vmatprep.subr.mxu0 0.0
    %389 = vmatpush1.msra.mxu0 0.0
    %390 = vmatprep.subr.mxu0 0.0
    %391 = vmatpush1.msra.mxu0 0.0
    %392 = vmatprep.subr.mxu0 0.0
    %393 = vmatpush1.msra.mxu0 0.0
    %394 = vmatprep.subr.mxu0 0.0
    %395 = vmatpush1.msra.mxu0 0.0
    %396 = vmatprep.subr.mxu0 0.0
    %397 = vmatpush1.msra.mxu0 0.0
    %398 = vmatprep.subr.mxu0 0.0
    %399 = vmatpush1.msra.mxu0 0.0
    %400 = vmatprep.subr.mxu0 0.0
    %401 = vmatpush1.msra.mxu0 0.0
    %402 = vmatprep.mubr.f32.mxu0 0.0
    %v403 = vand.u32 %v74, 4294901760
    %v404 = vsub.f32 %v74, %v403
    %v405 = vand.u32 %v404, 4294901760
    %406 = vmatmul.mubr.f32.gmra.mrb[0].mxu0 %v405
    %v407 = vpop.f32.mrb[0].mxu0
    %v408 = vadd.f32 %v326, %v407
    %v409 = vpop.f32.mrb[0].mxu0
    %410 = vmatprep.mubr.f32.mxu0 0.0
    %v411 = vand.u32 %v77, 4294901760
    %v412 = vsub.f32 %v77, %v411
    %v413 = vand.u32 %v412, 4294901760
    %414 = vmatmul.mubr.f32.gmra.mrb[0].mxu0 %v413
    %v415 = vpop.f32.mrb[0].mxu0
    %v416 = vadd.f32 %v333, %v415
    %v417 = vpop.f32.mrb[0].mxu0
    %418 = vdwg.mxu0
    %419 = vmatprep.subr.mxu0 0.0
    %v420 = vand.u32 %v44, 4294901760
    %v421 = vsub.f32 %v44, %v420
    %v422 = vand.u32 %v421, 4294901760
    %423 = vmatpush1.msra.mxu0 %v422
    %424 = vmatprep.subr.mxu0 0.0
    %v425 = vand.u32 %v45, 4294901760
    %v426 = vsub.f32 %v45, %v425
    %v427 = vand.u32 %v426, 4294901760
    %428 = vmatpush1.msra.mxu0 %v427
    %429 = vmatprep.subr.mxu0 0.0
    %430 = vmatpush1.msra.mxu0 0.0
    %431 = vmatprep.subr.mxu0 0.0
    %432 = vmatpush1.msra.mxu0 0.0
    %433 = vmatprep.subr.mxu0 0.0
    %434 = vmatpush1.msra.mxu0 0.0
    %435 = vmatprep.subr.mxu0 0.0
    %436 = vmatpush1.msra.mxu0 0.0
    %437 = vmatprep.subr.mxu0 0.0
    %438 = vmatpush1.msra.mxu0 0.0
    %439 = vmatprep.subr.mxu0 0.0
    %440 = vmatpush1.msra.mxu0 0.0
    %441 = vmatprep.subr.mxu0 0.0
    %442 = vmatpush1.msra.mxu0 0.0
    %443 = vmatprep.subr.mxu0 0.0
    %444 = vmatpush1.msra.mxu0 0.0
    %445 = vmatprep.subr.mxu0 0.0
    %446 = vmatpush1.msra.mxu0 0.0
    %447 = vmatprep.subr.mxu0 0.0
    %448 = vmatpush1.msra.mxu0 0.0
    %449 = vmatprep.subr.mxu0 0.0
    %450 = vmatpush1.msra.mxu0 0.0
    %451 = vmatprep.subr.mxu0 0.0
    %452 = vmatpush1.msra.mxu0 0.0
    %453 = vmatprep.subr.mxu0 0.0
    %454 = vmatpush1.msra.mxu0 0.0
    %455 = vmatprep.subr.mxu0 0.0
    %456 = vmatpush1.msra.mxu0 0.0
    %457 = vmatprep.subr.mxu0 0.0
    %458 = vmatpush1.msra.mxu0 0.0
    %459 = vmatprep.subr.mxu0 0.0
    %460 = vmatpush1.msra.mxu0 0.0
    %461 = vmatprep.subr.mxu0 0.0
    %462 = vmatpush1.msra.mxu0 0.0
    %463 = vmatprep.subr.mxu0 0.0
    %464 = vmatpush1.msra.mxu0 0.0
    %465 = vmatprep.subr.mxu0 0.0
    %466 = vmatpush1.msra.mxu0 0.0
    %467 = vmatprep.subr.mxu0 0.0
    %468 = vmatpush1.msra.mxu0 0.0
    %469 = vmatprep.subr.mxu0 0.0
    %470 = vmatpush1.msra.mxu0 0.0
    %471 = vmatprep.subr.mxu0 0.0
    %472 = vmatpush1.msra.mxu0 0.0
    %473 = vmatprep.subr.mxu0 0.0
    %474 = vmatpush1.msra.mxu0 0.0
    %475 = vmatprep.subr.mxu0 0.0
    %476 = vmatpush1.msra.mxu0 0.0
    %477 = vmatprep.subr.mxu0 0.0
    %478 = vmatpush1.msra.mxu0 0.0
    %479 = vmatprep.subr.mxu0 0.0
    %480 = vmatpush1.msra.mxu0 0.0
    %481 = vmatprep.subr.mxu0 0.0
    %482 = vmatpush1.msra.mxu0 0.0
    %483 = vmatprep.subr.mxu0 0.0
    %484 = vmatpush1.msra.mxu0 0.0
    %485 = vmatprep.subr.mxu0 0.0
    %486 = vmatpush1.msra.mxu0 0.0
    %487 = vmatprep.subr.mxu0 0.0
    %488 = vmatpush1.msra.mxu0 0.0
    %489 = vmatprep.mubr.f32.mxu0 0.0
    %v490 = vand.u32 %v74, 4294901760
    %491 = vmatmul.mubr.f32.gmra.mrb[0].mxu0 %v490
    %v492 = vpop.f32.mrb[0].mxu0
    %v493 = vadd.f32 %v408, %v492
    %v494 = vpop.f32.mrb[0].mxu0
    %495 = vmatprep.mubr.f32.mxu0 0.0
    %v496 = vand.u32 %v77, 4294901760
    %497 = vmatmul.mubr.f32.gmra.mrb[0].mxu0 %v496
    %v498 = vpop.f32.mrb[0].mxu0
    %v499 = vadd.f32 %v416, %v498
    %v500 = vpop.f32.mrb[0].mxu0
    %501 = vdwg.mxu0
    %502 = vmatprep.subr.mxu0 0.0
    %v503 = vand.u32 %v44, 4294901760
    %504 = vmatpush1.msra.mxu0 %v503
    %505 = vmatprep.subr.mxu0 0.0
    %v506 = vand.u32 %v45, 4294901760
    %507 = vmatpush1.msra.mxu0 %v506
    %508 = vmatprep.subr.mxu0 0.0
    %509 = vmatpush1.msra.mxu0 0.0
    %510 = vmatprep.subr.mxu0 0.0
    %511 = vmatpush1.msra.mxu0 0.0
    %512 = vmatprep.subr.mxu0 0.0
    %513 = vmatpush1.msra.mxu0 0.0
    %514 = vmatprep.subr.mxu0 0.0
    %515 = vmatpush1.msra.mxu0 0.0
    %516 = vmatprep.subr.mxu0 0.0
    %517 = vmatpush1.msra.mxu0 0.0
    %518 = vmatprep.subr.mxu0 0.0
    %519 = vmatpush1.msra.mxu0 0.0
    %520 = vmatprep.subr.mxu0 0.0
    %521 = vmatpush1.msra.mxu0 0.0
    %522 = vmatprep.subr.mxu0 0.0
    %523 = vmatpush1.msra.mxu0 0.0
    %524 = vmatprep.subr.mxu0 0.0
    %525 = vmatpush1.msra.mxu0 0.0
    %526 = vmatprep.subr.mxu0 0.0
    %527 = vmatpush1.msra.mxu0 0.0
    %528 = vmatprep.subr.mxu0 0.0
    %529 = vmatpush1.msra.mxu0 0.0
    %530 = vmatprep.subr.mxu0 0.0
    %531 = vmatpush1.msra.mxu0 0.0
    %532 = vmatprep.subr.mxu0 0.0
    %533 = vmatpush1.msra.mxu0 0.0
    %534 = vmatprep.subr.mxu0 0.0
    %535 = vmatpush1.msra.mxu0 0.0
    %536 = vmatprep.subr.mxu0 0.0
    %537 = vmatpush1.msra.mxu0 0.0
    %538 = vmatprep.subr.mxu0 0.0
    %539 = vmatpush1.msra.mxu0 0.0
    %540 = vmatprep.subr.mxu0 0.0
    %541 = vmatpush1.msra.mxu0 0.0
    %542 = vmatprep.subr.mxu0 0.0
    %543 = vmatpush1.msra.mxu0 0.0
    %544 = vmatprep.subr.mxu0 0.0
    %545 = vmatpush1.msra.mxu0 0.0
    %546 = vmatprep.subr.mxu0 0.0
    %547 = vmatpush1.msra.mxu0 0.0
    %548 = vmatprep.subr.mxu0 0.0
    %549 = vmatpush1.msra.mxu0 0.0
    %550 = vmatprep.subr.mxu0 0.0
    %551 = vmatpush1.msra.mxu0 0.0
    %552 = vmatprep.subr.mxu0 0.0
    %553 = vmatpush1.msra.mxu0 0.0
    %554 = vmatprep.subr.mxu0 0.0
    %555 = vmatpush1.msra.mxu0 0.0
    %556 = vmatprep.subr.mxu0 0.0
    %557 = vmatpush1.msra.mxu0 0.0
    %558 = vmatprep.subr.mxu0 0.0
    %559 = vmatpush1.msra.mxu0 0.0
    %560 = vmatprep.subr.mxu0 0.0
    %561 = vmatpush1.msra.mxu0 0.0
    %562 = vmatprep.subr.mxu0 0.0
    %563 = vmatpush1.msra.mxu0 0.0
    %564 = vmatprep.subr.mxu0 0.0
    %565 = vmatpush1.msra.mxu0 0.0
    %566 = vmatprep.subr.mxu0 0.0
    %567 = vmatpush1.msra.mxu0 0.0
    %568 = vmatprep.mubr.f32.mxu0 0.0
    %v569 = vand.u32 %v74, 4294901760
    %570 = vmatmul.mubr.f32.gmra.mrb[0].mxu0 %v569
    %v571 = vpop.f32.mrb[0].mxu0
    %v572 = vadd.f32 %v493, %v571
    %v573 = vpop.f32.mrb[0].mxu0
    %574 = vmatprep.mubr.f32.mxu0 0.0
    %v575 = vand.u32 %v77, 4294901760
    %576 = vmatmul.mubr.f32.gmra.mrb[0].mxu0 %v575
    %v577 = vpop.f32.mrb[0].mxu0
    %v578 = vadd.f32 %v499, %v577
    %v579 = vpop.f32.mrb[0].mxu0
    %580 = vdwg.mxu0
    %581 = vset.pattern.permute.xlu0 2
    %582 = vperm.xlu0 %581, %v35
    %v583 = vpop.permute.xlu0 %582
    %584 = vset.pattern.permute.xlu0 2
    %585 = vperm.xlu0 %584, %v36
    %v586 = vpop.permute.xlu0 %585
    %vm587 = vcmp.eq.s32.totalorder %v47, %v583
    %vm588 = vcmp.eq.s32.totalorder %v47, %v586
    %v589 = vsel %vm587, 1, 0
    %v590 = vsel %vm588, 1, 0
    %v591 = vcvt.s32.f32 %v589
    %v592 = vcvt.s32.f32 %v590
    %vm593 = vcmask 457728
    %v595 = vsel %vm593, %v591, 0
    %v598 = vsel %vm593, %v592, 0
    %600 = vmatprep.subr.mxu0 0.0
    %v601 = vand.u32 %v37, 4294901760
    %602 = vmatpush1.msra.mxu0 %v601
    %603 = vmatprep.subr.mxu0 0.0
    %v604 = vand.u32 %v38, 4294901760
    %605 = vmatpush1.msra.mxu0 %v604
    %606 = vmatprep.subr.mxu0 0.0
    %v607 = vand.u32 %v39, 4294901760
    %608 = vmatpush1.msra.mxu0 %v607
    %609 = vmatprep.subr.mxu0 0.0
    %v610 = vand.u32 %v40, 4294901760
    %611 = vmatpush1.msra.mxu0 %v610
    %612 = vmatprep.subr.mxu0 0.0
    %v613 = vand.u32 %v41, 4294901760
    %614 = vmatpush1.msra.mxu0 %v613
    %615 = vmatprep.subr.mxu0 0.0
    %v616 = vand.u32 %v42, 4294901760
    %617 = vmatpush1.msra.mxu0 %v616
    %618 = vmatprep.subr.mxu0 0.0
    %v619 = vand.u32 %v43, 4294901760
    %620 = vmatpush1.msra.mxu0 %v619
    %621 = vmatprep.subr.mxu0 0.0
    %622 = vmatpush1.msra.mxu0 0.0
    %623 = vmatprep.subr.mxu0 0.0
    %624 = vmatpush1.msra.mxu0 0.0
    %625 = vmatprep.subr.mxu0 0.0
    %626 = vmatpush1.msra.mxu0 0.0
    %627 = vmatprep.subr.mxu0 0.0
    %628 = vmatpush1.msra.mxu0 0.0
    %629 = vmatprep.subr.mxu0 0.0
    %630 = vmatpush1.msra.mxu0 0.0
    %631 = vmatprep.subr.mxu0 0.0
    %632 = vmatpush1.msra.mxu0 0.0
    %633 = vmatprep.subr.mxu0 0.0
    %634 = vmatpush1.msra.mxu0 0.0
    %635 = vmatprep.subr.mxu0 0.0
    %636 = vmatpush1.msra.mxu0 0.0
    %637 = vmatprep.subr.mxu0 0.0
    %638 = vmatpush1.msra.mxu0 0.0
    %639 = vmatprep.subr.mxu0 0.0
    %640 = vmatpush1.msra.mxu0 0.0
    %641 = vmatprep.subr.mxu0 0.0
    %642 = vmatpush1.msra.mxu0 0.0
    %643 = vmatprep.subr.mxu0 0.0
    %644 = vmatpush1.msra.mxu0 0.0
    %645 = vmatprep.subr.mxu0 0.0
    %646 = vmatpush1.msra.mxu0 0.0
    %647 = vmatprep.subr.mxu0 0.0
    %648 = vmatpush1.msra.mxu0 0.0
    %649 = vmatprep.subr.mxu0 0.0
    %650 = vmatpush1.msra.mxu0 0.0
    %651 = vmatprep.subr.mxu0 0.0
    %652 = vmatpush1.msra.mxu0 0.0
    %653 = vmatprep.subr.mxu0 0.0
    %654 = vmatpush1.msra.mxu0 0.0
    %655 = vmatprep.subr.mxu0 0.0
    %656 = vmatpush1.msra.mxu0 0.0
    %657 = vmatprep.subr.mxu0 0.0
    %658 = vmatpush1.msra.mxu0 0.0
    %659 = vmatprep.subr.mxu0 0.0
    %660 = vmatpush1.msra.mxu0 0.0
    %661 = vmatprep.subr.mxu0 0.0
    %662 = vmatpush1.msra.mxu0 0.0
    %663 = vmatprep.subr.mxu0 0.0
    %664 = vmatpush1.msra.mxu0 0.0
    %665 = vmatprep.subr.mxu0 0.0
    %666 = vmatpush1.msra.mxu0 0.0
    %667 = vmatprep.subr.mxu0 0.0
    %668 = vmatpush1.msra.mxu0 0.0
    %669 = vmatprep.subr.mxu0 0.0
    %670 = vmatpush1.msra.mxu0 0.0
    %671 = vmatprep.mubr.f32.mxu0 0.0
    %v672 = vand.u32 %v595, 4294901760
    %v673 = vsub.f32 %v595, %v672
    %v674 = vand.u32 %v673, 4294901760
    %v675 = vsub.f32 %v673, %v674
    %v676 = vand.u32 %v675, 4294901760
    %677 = vmatmul.mubr.f32.gmra.mrb[0].mxu0 %v676
    %v678 = vpop.f32.mrb[0].mxu0
    %v679 = vadd.f32 0.0, %v678
    %v680 = vpop.f32.mrb[0].mxu0
    %681 = vmatprep.mubr.f32.mxu0 0.0
    %v682 = vand.u32 %v598, 4294901760
    %v683 = vsub.f32 %v598, %v682
    %v684 = vand.u32 %v683, 4294901760
    %v685 = vsub.f32 %v683, %v684
    %v686 = vand.u32 %v685, 4294901760
    %687 = vmatmul.mubr.f32.gmra.mrb[0].mxu0 %v686
    %v688 = vpop.f32.mrb[0].mxu0
    %v689 = vadd.f32 0.0, %v688
    %v690 = vpop.f32.mrb[0].mxu0
    %691 = vdwg.mxu0
    %692 = vmatprep.subr.mxu0 0.0
    %v693 = vand.u32 %v37, 4294901760
    %v694 = vsub.f32 %v37, %v693
    %v695 = vand.u32 %v694, 4294901760
    %v696 = vsub.f32 %v694, %v695
    %v697 = vand.u32 %v696, 4294901760
    %698 = vmatpush1.msra.mxu0 %v697
    %699 = vmatprep.subr.mxu0 0.0
    %v700 = vand.u32 %v38, 4294901760
    %v701 = vsub.f32 %v38, %v700
    %v702 = vand.u32 %v701, 4294901760
    %v703 = vsub.f32 %v701, %v702
    %v704 = vand.u32 %v703, 4294901760
    %705 = vmatpush1.msra.mxu0 %v704
    %706 = vmatprep.subr.mxu0 0.0
    %v707 = vand.u32 %v39, 4294901760
    %v708 = vsub.f32 %v39, %v707
    %v709 = vand.u32 %v708, 4294901760
    %v710 = vsub.f32 %v708, %v709
    %v711 = vand.u32 %v710, 4294901760
    %712 = vmatpush1.msra.mxu0 %v711
    %713 = vmatprep.subr.mxu0 0.0
    %v714 = vand.u32 %v40, 4294901760
    %v715 = vsub.f32 %v40, %v714
    %v716 = vand.u32 %v715, 4294901760
    %v717 = vsub.f32 %v715, %v716
    %v718 = vand.u32 %v717, 4294901760
    %719 = vmatpush1.msra.mxu0 %v718
    %720 = vmatprep.subr.mxu0 0.0
    %v721 = vand.u32 %v41, 4294901760
    %v722 = vsub.f32 %v41, %v721
    %v723 = vand.u32 %v722, 4294901760
    %v724 = vsub.f32 %v722, %v723
    %v725 = vand.u32 %v724, 4294901760
    %726 = vmatpush1.msra.mxu0 %v725
    %727 = vmatprep.subr.mxu0 0.0
    %v728 = vand.u32 %v42, 4294901760
    %v729 = vsub.f32 %v42, %v728
    %v730 = vand.u32 %v729, 4294901760
    %v731 = vsub.f32 %v729, %v730
    %v732 = vand.u32 %v731, 4294901760
    %733 = vmatpush1.msra.mxu0 %v732
    %734 = vmatprep.subr.mxu0 0.0
    %v735 = vand.u32 %v43, 4294901760
    %v736 = vsub.f32 %v43, %v735
    %v737 = vand.u32 %v736, 4294901760
    %v738 = vsub.f32 %v736, %v737
    %v739 = vand.u32 %v738, 4294901760
    %740 = vmatpush1.msra.mxu0 %v739
    %741 = vmatprep.subr.mxu0 0.0
    %742 = vmatpush1.msra.mxu0 0.0
    %743 = vmatprep.subr.mxu0 0.0
    %744 = vmatpush1.msra.mxu0 0.0
    %745 = vmatprep.subr.mxu0 0.0
    %746 = vmatpush1.msra.mxu0 0.0
    %747 = vmatprep.subr.mxu0 0.0
    %748 = vmatpush1.msra.mxu0 0.0
    %749 = vmatprep.subr.mxu0 0.0
    %750 = vmatpush1.msra.mxu0 0.0
    %751 = vmatprep.subr.mxu0 0.0
    %752 = vmatpush1.msra.mxu0 0.0
    %753 = vmatprep.subr.mxu0 0.0
    %754 = vmatpush1.msra.mxu0 0.0
    %755 = vmatprep.subr.mxu0 0.0
    %756 = vmatpush1.msra.mxu0 0.0
    %757 = vmatprep.subr.mxu0 0.0
    %758 = vmatpush1.msra.mxu0 0.0
    %759 = vmatprep.subr.mxu0 0.0
    %760 = vmatpush1.msra.mxu0 0.0
    %761 = vmatprep.subr.mxu0 0.0
    %762 = vmatpush1.msra.mxu0 0.0
    %763 = vmatprep.subr.mxu0 0.0
    %764 = vmatpush1.msra.mxu0 0.0
    %765 = vmatprep.subr.mxu0 0.0
    %766 = vmatpush1.msra.mxu0 0.0
    %767 = vmatprep.subr.mxu0 0.0
    %768 = vmatpush1.msra.mxu0 0.0
    %769 = vmatprep.subr.mxu0 0.0
    %770 = vmatpush1.msra.mxu0 0.0
    %771 = vmatprep.subr.mxu0 0.0
    %772 = vmatpush1.msra.mxu0 0.0
    %773 = vmatprep.subr.mxu0 0.0
    %774 = vmatpush1.msra.mxu0 0.0
    %775 = vmatprep.subr.mxu0 0.0
    %776 = vmatpush1.msra.mxu0 0.0
    %777 = vmatprep.subr.mxu0 0.0
    %778 = vmatpush1.msra.mxu0 0.0
    %779 = vmatprep.subr.mxu0 0.0
    %780 = vmatpush1.msra.mxu0 0.0
    %781 = vmatprep.subr.mxu0 0.0
    %782 = vmatpush1.msra.mxu0 0.0
    %783 = vmatprep.subr.mxu0 0.0
    %784 = vmatpush1.msra.mxu0 0.0
    %785 = vmatprep.subr.mxu0 0.0
    %786 = vmatpush1.msra.mxu0 0.0
    %787 = vmatprep.subr.mxu0 0.0
    %788 = vmatpush1.msra.mxu0 0.0
    %789 = vmatprep.subr.mxu0 0.0
    %790 = vmatpush1.msra.mxu0 0.0
    %791 = vmatprep.mubr.f32.mxu0 0.0
    %v792 = vand.u32 %v595, 4294901760
    %793 = vmatmul.mubr.f32.gmra.mrb[0].mxu0 %v792
    %v794 = vpop.f32.mrb[0].mxu0
    %v795 = vadd.f32 %v679, %v794
    %v796 = vpop.f32.mrb[0].mxu0
    %797 = vmatprep.mubr.f32.mxu0 0.0
    %v798 = vand.u32 %v598, 4294901760
    %799 = vmatmul.mubr.f32.gmra.mrb[0].mxu0 %v798
    %v800 = vpop.f32.mrb[0].mxu0
    %v801 = vadd.f32 %v689, %v800
    %v802 = vpop.f32.mrb[0].mxu0
    %803 = vdwg.mxu0
    %804 = vmatprep.subr.mxu0 0.0
    %v805 = vand.u32 %v37, 4294901760
    %v806 = vsub.f32 %v37, %v805
    %807 = vmatpush1.msra.mxu0 %v806
    %808 = vmatprep.subr.mxu0 0.0
    %v809 = vand.u32 %v38, 4294901760
    %v810 = vsub.f32 %v38, %v809
    %811 = vmatpush1.msra.mxu0 %v810
    %812 = vmatprep.subr.mxu0 0.0
    %v813 = vand.u32 %v39, 4294901760
    %v814 = vsub.f32 %v39, %v813
    %815 = vmatpush1.msra.mxu0 %v814
    %816 = vmatprep.subr.mxu0 0.0
    %v817 = vand.u32 %v40, 4294901760
    %v818 = vsub.f32 %v40, %v817
    %819 = vmatpush1.msra.mxu0 %v818
    %820 = vmatprep.subr.mxu0 0.0
    %v821 = vand.u32 %v41, 4294901760
    %v822 = vsub.f32 %v41, %v821
    %823 = vmatpush1.msra.mxu0 %v822
    %824 = vmatprep.subr.mxu0 0.0
    %v825 = vand.u32 %v42, 4294901760
    %v826 = vsub.f32 %v42, %v825
    %827 = vmatpush1.msra.mxu0 %v826
    %828 = vmatprep.subr.mxu0 0.0
    %v829 = vand.u32 %v43, 4294901760
    %v830 = vsub.f32 %v43, %v829
    %831 = vmatpush1.msra.mxu0 %v830
    %832 = vmatprep.subr.mxu0 0.0
    %833 = vmatpush1.msra.mxu0 0.0
    %834 = vmatprep.subr.mxu0 0.0
    %835 = vmatpush1.msra.mxu0 0.0
    %836 = vmatprep.subr.mxu0 0.0
    %837 = vmatpush1.msra.mxu0 0.0
    %838 = vmatprep.subr.mxu0 0.0
    %839 = vmatpush1.msra.mxu0 0.0
    %840 = vmatprep.subr.mxu0 0.0
    %841 = vmatpush1.msra.mxu0 0.0
    %842 = vmatprep.subr.mxu0 0.0
    %843 = vmatpush1.msra.mxu0 0.0
    %844 = vmatprep.subr.mxu0 0.0
    %845 = vmatpush1.msra.mxu0 0.0
    %846 = vmatprep.subr.mxu0 0.0
    %847 = vmatpush1.msra.mxu0 0.0
    %848 = vmatprep.subr.mxu0 0.0
    %849 = vmatpush1.msra.mxu0 0.0
    %850 = vmatprep.subr.mxu0 0.0
    %851 = vmatpush1.msra.mxu0 0.0
    %852 = vmatprep.subr.mxu0 0.0
    %853 = vmatpush1.msra.mxu0 0.0
    %854 = vmatprep.subr.mxu0 0.0
    %855 = vmatpush1.msra.mxu0 0.0
    %856 = vmatprep.subr.mxu0 0.0
    %857 = vmatpush1.msra.mxu0 0.0
    %858 = vmatprep.subr.mxu0 0.0
    %859 = vmatpush1.msra.mxu0 0.0
    %860 = vmatprep.subr.mxu0 0.0
    %861 = vmatpush1.msra.mxu0 0.0
    %862 = vmatprep.subr.mxu0 0.0
    %863 = vmatpush1.msra.mxu0 0.0
    %864 = vmatprep.subr.mxu0 0.0
    %865 = vmatpush1.msra.mxu0 0.0
    %866 = vmatprep.subr.mxu0 0.0
    %867 = vmatpush1.msra.mxu0 0.0
    %868 = vmatprep.subr.mxu0 0.0
    %869 = vmatpush1.msra.mxu0 0.0
    %870 = vmatprep.subr.mxu0 0.0
    %871 = vmatpush1.msra.mxu0 0.0
    %872 = vmatprep.subr.mxu0 0.0
    %873 = vmatpush1.msra.mxu0 0.0
    %874 = vmatprep.subr.mxu0 0.0
    %875 = vmatpush1.msra.mxu0 0.0
    %876 = vmatprep.subr.mxu0 0.0
    %877 = vmatpush1.msra.mxu0 0.0
    %878 = vmatprep.subr.mxu0 0.0
    %879 = vmatpush1.msra.mxu0 0.0
    %880 = vmatprep.subr.mxu0 0.0
    %881 = vmatpush1.msra.mxu0 0.0
    %882 = vmatprep.mubr.f32.mxu0 0.0
    %v883 = vand.u32 %v595, 4294901760
    %v884 = vsub.f32 %v595, %v883
    %885 = vmatmul.mubr.f32.gmra.mrb[0].mxu0 %v884
    %v886 = vpop.f32.mrb[0].mxu0
    %v887 = vadd.f32 %v795, %v886
    %v888 = vpop.f32.mrb[0].mxu0
    %889 = vmatprep.mubr.f32.mxu0 0.0
    %v890 = vand.u32 %v598, 4294901760
    %v891 = vsub.f32 %v598, %v890
    %892 = vmatmul.mubr.f32.gmra.mrb[0].mxu0 %v891
    %v893 = vpop.f32.mrb[0].mxu0
    %v894 = vadd.f32 %v801, %v893
    %v895 = vpop.f32.mrb[0].mxu0
    %896 = vdwg.mxu0
    %897 = vmatprep.subr.mxu0 0.0
    %v898 = vand.u32 %v37, 4294901760
    %899 = vmatpush1.msra.mxu0 %v898
    %900 = vmatprep.subr.mxu0 0.0
    %v901 = vand.u32 %v38, 4294901760
    %902 = vmatpush1.msra.mxu0 %v901
    %903 = vmatprep.subr.mxu0 0.0
    %v904 = vand.u32 %v39, 4294901760
    %905 = vmatpush1.msra.mxu0 %v904
    %906 = vmatprep.subr.mxu0 0.0
    %v907 = vand.u32 %v40, 4294901760
    %908 = vmatpush1.msra.mxu0 %v907
    %909 = vmatprep.subr.mxu0 0.0
    %v910 = vand.u32 %v41, 4294901760
    %911 = vmatpush1.msra.mxu0 %v910
    %912 = vmatprep.subr.mxu0 0.0
    %v913 = vand.u32 %v42, 4294901760
    %914 = vmatpush1.msra.mxu0 %v913
    %915 = vmatprep.subr.mxu0 0.0
    %v916 = vand.u32 %v43, 4294901760
    %917 = vmatpush1.msra.mxu0 %v916
    %918 = vmatprep.subr.mxu0 0.0
    %919 = vmatpush1.msra.mxu0 0.0
    %920 = vmatprep.subr.mxu0 0.0
    %921 = vmatpush1.msra.mxu0 0.0
    %922 = vmatprep.subr.mxu0 0.0
    %923 = vmatpush1.msra.mxu0 0.0
    %924 = vmatprep.subr.mxu0 0.0
    %925 = vmatpush1.msra.mxu0 0.0
    %926 = vmatprep.subr.mxu0 0.0
    %927 = vmatpush1.msra.mxu0 0.0
    %928 = vmatprep.subr.mxu0 0.0
    %929 = vmatpush1.msra.mxu0 0.0
    %930 = vmatprep.subr.mxu0 0.0
    %931 = vmatpush1.msra.mxu0 0.0
    %932 = vmatprep.subr.mxu0 0.0
    %933 = vmatpush1.msra.mxu0 0.0
    %934 = vmatprep.subr.mxu0 0.0
    %935 = vmatpush1.msra.mxu0 0.0
    %936 = vmatprep.subr.mxu0 0.0
    %937 = vmatpush1.msra.mxu0 0.0
    %938 = vmatprep.subr.mxu0 0.0
    %939 = vmatpush1.msra.mxu0 0.0
    %940 = vmatprep.subr.mxu0 0.0
    %941 = vmatpush1.msra.mxu0 0.0
    %942 = vmatprep.subr.mxu0 0.0
    %943 = vmatpush1.msra.mxu0 0.0
    %944 = vmatprep.subr.mxu0 0.0
    %945 = vmatpush1.msra.mxu0 0.0
    %946 = vmatprep.subr.mxu0 0.0
    %947 = vmatpush1.msra.mxu0 0.0
    %948 = vmatprep.subr.mxu0 0.0
    %949 = vmatpush1.msra.mxu0 0.0
    %950 = vmatprep.subr.mxu0 0.0
    %951 = vmatpush1.msra.mxu0 0.0
    %952 = vmatprep.subr.mxu0 0.0
    %953 = vmatpush1.msra.mxu0 0.0
    %954 = vmatprep.subr.mxu0 0.0
    %955 = vmatpush1.msra.mxu0 0.0
    %956 = vmatprep.subr.mxu0 0.0
    %957 = vmatpush1.msra.mxu0 0.0
    %958 = vmatprep.subr.mxu0 0.0
    %959 = vmatpush1.msra.mxu0 0.0
    %960 = vmatprep.subr.mxu0 0.0
    %961 = vmatpush1.msra.mxu0 0.0
    %962 = vmatprep.subr.mxu0 0.0
    %963 = vmatpush1.msra.mxu0 0.0
    %964 = vmatprep.subr.mxu0 0.0
    %965 = vmatpush1.msra.mxu0 0.0
    %966 = vmatprep.subr.mxu0 0.0
    %967 = vmatpush1.msra.mxu0 0.0
    %968 = vmatprep.mubr.f32.mxu0 0.0
    %v969 = vand.u32 %v595, 4294901760
    %v970 = vsub.f32 %v595, %v969
    %v971 = vand.u32 %v970, 4294901760
    %972 = vmatmul.mubr.f32.gmra.mrb[0].mxu0 %v971
    %v973 = vpop.f32.mrb[0].mxu0
    %v974 = vadd.f32 %v887, %v973
    %v975 = vpop.f32.mrb[0].mxu0
    %976 = vmatprep.mubr.f32.mxu0 0.0
    %v977 = vand.u32 %v598, 4294901760
    %v978 = vsub.f32 %v598, %v977
    %v979 = vand.u32 %v978, 4294901760
    %980 = vmatmul.mubr.f32.gmra.mrb[0].mxu0 %v979
    %v981 = vpop.f32.mrb[0].mxu0
    %v982 = vadd.f32 %v894, %v981
    %v983 = vpop.f32.mrb[0].mxu0
    %984 = vdwg.mxu0
    %985 = vmatprep.subr.mxu0 0.0
    %v986 = vand.u32 %v37, 4294901760
    %v987 = vsub.f32 %v37, %v986
    %v988 = vand.u32 %v987, 4294901760
    %989 = vmatpush1.msra.mxu0 %v988
    %990 = vmatprep.subr.mxu0 0.0
    %v991 = vand.u32 %v38, 4294901760
    %v992 = vsub.f32 %v38, %v991
    %v993 = vand.u32 %v992, 4294901760
    %994 = vmatpush1.msra.mxu0 %v993
    %995 = vmatprep.subr.mxu0 0.0
    %v996 = vand.u32 %v39, 4294901760
    %v997 = vsub.f32 %v39, %v996
    %v998 = vand.u32 %v997, 4294901760
    %999 = vmatpush1.msra.mxu0 %v998
    %1000 = vmatprep.subr.mxu0 0.0
    %v1001 = vand.u32 %v40, 4294901760
    %v1002 = vsub.f32 %v40, %v1001
    %v1003 = vand.u32 %v1002, 4294901760
    %1004 = vmatpush1.msra.mxu0 %v1003
    %1005 = vmatprep.subr.mxu0 0.0
    %v1006 = vand.u32 %v41, 4294901760
    %v1007 = vsub.f32 %v41, %v1006
    %v1008 = vand.u32 %v1007, 4294901760
    %1009 = vmatpush1.msra.mxu0 %v1008
    %1010 = vmatprep.subr.mxu0 0.0
    %v1011 = vand.u32 %v42, 4294901760
    %v1012 = vsub.f32 %v42, %v1011
    %v1013 = vand.u32 %v1012, 4294901760
    %1014 = vmatpush1.msra.mxu0 %v1013
    %1015 = vmatprep.subr.mxu0 0.0
    %v1016 = vand.u32 %v43, 4294901760
    %v1017 = vsub.f32 %v43, %v1016
    %v1018 = vand.u32 %v1017, 4294901760
    %1019 = vmatpush1.msra.mxu0 %v1018
    %1020 = vmatprep.subr.mxu0 0.0
    %1021 = vmatpush1.msra.mxu0 0.0
    %1022 = vmatprep.subr.mxu0 0.0
    %1023 = vmatpush1.msra.mxu0 0.0
    %1024 = vmatprep.subr.mxu0 0.0
    %1025 = vmatpush1.msra.mxu0 0.0
    %1026 = vmatprep.subr.mxu0 0.0
    %1027 = vmatpush1.msra.mxu0 0.0
    %1028 = vmatprep.subr.mxu0 0.0
    %1029 = vmatpush1.msra.mxu0 0.0
    %1030 = vmatprep.subr.mxu0 0.0
    %1031 = vmatpush1.msra.mxu0 0.0
    %1032 = vmatprep.subr.mxu0 0.0
    %1033 = vmatpush1.msra.mxu0 0.0
    %1034 = vmatprep.subr.mxu0 0.0
    %1035 = vmatpush1.msra.mxu0 0.0
    %1036 = vmatprep.subr.mxu0 0.0
    %1037 = vmatpush1.msra.mxu0 0.0
    %1038 = vmatprep.subr.mxu0 0.0
    %1039 = vmatpush1.msra.mxu0 0.0
    %1040 = vmatprep.subr.mxu0 0.0
    %1041 = vmatpush1.msra.mxu0 0.0
    %1042 = vmatprep.subr.mxu0 0.0
    %1043 = vmatpush1.msra.mxu0 0.0
    %1044 = vmatprep.subr.mxu0 0.0
    %1045 = vmatpush1.msra.mxu0 0.0
    %1046 = vmatprep.subr.mxu0 0.0
    %1047 = vmatpush1.msra.mxu0 0.0
    %1048 = vmatprep.subr.mxu0 0.0
    %1049 = vmatpush1.msra.mxu0 0.0
    %1050 = vmatprep.subr.mxu0 0.0
    %1051 = vmatpush1.msra.mxu0 0.0
    %1052 = vmatprep.subr.mxu0 0.0
    %1053 = vmatpush1.msra.mxu0 0.0
    %1054 = vmatprep.subr.mxu0 0.0
    %1055 = vmatpush1.msra.mxu0 0.0
    %1056 = vmatprep.subr.mxu0 0.0
    %1057 = vmatpush1.msra.mxu0 0.0
    %1058 = vmatprep.subr.mxu0 0.0
    %1059 = vmatpush1.msra.mxu0 0.0
    %1060 = vmatprep.subr.mxu0 0.0
    %1061 = vmatpush1.msra.mxu0 0.0
    %1062 = vmatprep.subr.mxu0 0.0
    %1063 = vmatpush1.msra.mxu0 0.0
    %1064 = vmatprep.subr.mxu0 0.0
    %1065 = vmatpush1.msra.mxu0 0.0
    %1066 = vmatprep.subr.mxu0 0.0
    %1067 = vmatpush1.msra.mxu0 0.0
    %1068 = vmatprep.subr.mxu0 0.0
    %1069 = vmatpush1.msra.mxu0 0.0
    %1070 = vmatprep.mubr.f32.mxu0 0.0
    %v1071 = vand.u32 %v595, 4294901760
    %1072 = vmatmul.mubr.f32.gmra.mrb[0].mxu0 %v1071
    %v1073 = vpop.f32.mrb[0].mxu0
    %v1074 = vadd.f32 %v974, %v1073
    %v1075 = vpop.f32.mrb[0].mxu0
    %1076 = vmatprep.mubr.f32.mxu0 0.0
    %v1077 = vand.u32 %v598, 4294901760
    %1078 = vmatmul.mubr.f32.gmra.mrb[0].mxu0 %v1077
    %v1079 = vpop.f32.mrb[0].mxu0
    %v1080 = vadd.f32 %v982, %v1079
    %v1081 = vpop.f32.mrb[0].mxu0
    %1082 = vdwg.mxu0
    %1083 = vmatprep.subr.mxu0 0.0
    %v1084 = vand.u32 %v37, 4294901760
    %1085 = vmatpush1.msra.mxu0 %v1084
    %1086 = vmatprep.subr.mxu0 0.0
    %v1087 = vand.u32 %v38, 4294901760
    %1088 = vmatpush1.msra.mxu0 %v1087
    %1089 = vmatprep.subr.mxu0 0.0
    %v1090 = vand.u32 %v39, 4294901760
    %1091 = vmatpush1.msra.mxu0 %v1090
    %1092 = vmatprep.subr.mxu0 0.0
    %v1093 = vand.u32 %v40, 4294901760
    %1094 = vmatpush1.msra.mxu0 %v1093
    %1095 = vmatprep.subr.mxu0 0.0
    %v1096 = vand.u32 %v41, 4294901760
    %1097 = vmatpush1.msra.mxu0 %v1096
    %1098 = vmatprep.subr.mxu0 0.0
    %v1099 = vand.u32 %v42, 4294901760
    %1100 = vmatpush1.msra.mxu0 %v1099
    %1101 = vmatprep.subr.mxu0 0.0
    %v1102 = vand.u32 %v43, 4294901760
    %1103 = vmatpush1.msra.mxu0 %v1102
    %1104 = vmatprep.subr.mxu0 0.0
    %1105 = vmatpush1.msra.mxu0 0.0
    %1106 = vmatprep.subr.mxu0 0.0
    %1107 = vmatpush1.msra.mxu0 0.0
    %1108 = vmatprep.subr.mxu0 0.0
    %1109 = vmatpush1.msra.mxu0 0.0
    %1110 = vmatprep.subr.mxu0 0.0
    %1111 = vmatpush1.msra.mxu0 0.0
    %1112 = vmatprep.subr.mxu0 0.0
    %1113 = vmatpush1.msra.mxu0 0.0
    %1114 = vmatprep.subr.mxu0 0.0
    %1115 = vmatpush1.msra.mxu0 0.0
    %1116 = vmatprep.subr.mxu0 0.0
    %1117 = vmatpush1.msra.mxu0 0.0
    %1118 = vmatprep.subr.mxu0 0.0
    %1119 = vmatpush1.msra.mxu0 0.0
    %1120 = vmatprep.subr.mxu0 0.0
    %1121 = vmatpush1.msra.mxu0 0.0
    %1122 = vmatprep.subr.mxu0 0.0
    %1123 = vmatpush1.msra.mxu0 0.0
    %1124 = vmatprep.subr.mxu0 0.0
    %1125 = vmatpush1.msra.mxu0 0.0
    %1126 = vmatprep.subr.mxu0 0.0
    %1127 = vmatpush1.msra.mxu0 0.0
    %1128 = vmatprep.subr.mxu0 0.0
    %1129 = vmatpush1.msra.mxu0 0.0
    %1130 = vmatprep.subr.mxu0 0.0
    %1131 = vmatpush1.msra.mxu0 0.0
    %1132 = vmatprep.subr.mxu0 0.0
    %1133 = vmatpush1.msra.mxu0 0.0
    %1134 = vmatprep.subr.mxu0 0.0
    %1135 = vmatpush1.msra.mxu0 0.0
    %1136 = vmatprep.subr.mxu0 0.0
    %1137 = vmatpush1.msra.mxu0 0.0
    %1138 = vmatprep.subr.mxu0 0.0
    %1139 = vmatpush1.msra.mxu0 0.0
    %1140 = vmatprep.subr.mxu0 0.0
    %1141 = vmatpush1.msra.mxu0 0.0
    %1142 = vmatprep.subr.mxu0 0.0
    %1143 = vmatpush1.msra.mxu0 0.0
    %1144 = vmatprep.subr.mxu0 0.0
    %1145 = vmatpush1.msra.mxu0 0.0
    %1146 = vmatprep.subr.mxu0 0.0
    %1147 = vmatpush1.msra.mxu0 0.0
    %1148 = vmatprep.subr.mxu0 0.0
    %1149 = vmatpush1.msra.mxu0 0.0
    %1150 = vmatprep.subr.mxu0 0.0
    %1151 = vmatpush1.msra.mxu0 0.0
    %1152 = vmatprep.subr.mxu0 0.0
    %1153 = vmatpush1.msra.mxu0 0.0
    %1154 = vmatprep.mubr.f32.mxu0 0.0
    %v1155 = vand.u32 %v595, 4294901760
    %1156 = vmatmul.mubr.f32.gmra.mrb[0].mxu0 %v1155
    %v1157 = vpop.f32.mrb[0].mxu0
    %v1158 = vadd.f32 %v1074, %v1157
    %v1159 = vpop.f32.mrb[0].mxu0
    %1160 = vmatprep.mubr.f32.mxu0 0.0
    %v1161 = vand.u32 %v598, 4294901760
    %1162 = vmatmul.mubr.f32.gmra.mrb[0].mxu0 %v1161
    %v1163 = vpop.f32.mrb[0].mxu0
    %v1164 = vadd.f32 %v1080, %v1163
    %v1165 = vpop.f32.mrb[0].mxu0
    %1166 = vdwg.mxu0
    %1167 = vset.pattern.permute.xlu0 3
    %1168 = vperm.xlu0 %1167, %v35
    %v1169 = vpop.permute.xlu0 %1168
    %1170 = vset.pattern.permute.xlu0 3
    %1171 = vperm.xlu0 %1170, %v36
    %v1172 = vpop.permute.xlu0 %1171
    %vm1173 = vcmp.eq.s32.totalorder %v47, %v1169
    %vm1174 = vcmp.eq.s32.totalorder %v47, %v1172
    %v1175 = vsel %vm1173, 1, 0
    %v1176 = vsel %vm1174, 1, 0
    %v1177 = vcvt.s32.f32 %v1175
    %v1178 = vcvt.s32.f32 %v1176
    %1179 = vset.pattern.permute.xlu0 4
    %1180 = vperm.xlu0 %1179, %v35
    %v1181 = vpop.permute.xlu0 %1180
    %1182 = vset.pattern.permute.xlu0 4
    %1183 = vperm.xlu0 %1182, %v36
    %v1184 = vpop.permute.xlu0 %1183
    %vm1185 = vcmp.eq.s32.totalorder %v47, %v1181
    %vm1186 = vcmp.eq.s32.totalorder %v47, %v1184
    %v1187 = vsel %vm1185, 1, 0
    %v1188 = vsel %vm1186, 1, 0
    %v1189 = vcvt.s32.f32 %v1187
    %v1190 = vcvt.s32.f32 %v1188
    %v1192 = vsel %vm72, %v1189, 0
    %v1195 = vsel %vm72, %v1190, 0
    %1197 = vmatprep.subr.mxu0 0.0
    %v1198 = vand.u32 %v44, 4294901760
    %1199 = vmatpush1.msra.mxu0 %v1198
    %1200 = vmatprep.subr.mxu0 0.0
    %v1201 = vand.u32 %v45, 4294901760
    %1202 = vmatpush1.msra.mxu0 %v1201
    %1203 = vmatprep.subr.mxu0 0.0
    %1204 = vmatpush1.msra.mxu0 0.0
    %1205 = vmatprep.subr.mxu0 0.0
    %1206 = vmatpush1.msra.mxu0 0.0
    %1207 = vmatprep.subr.mxu0 0.0
    %1208 = vmatpush1.msra.mxu0 0.0
    %1209 = vmatprep.subr.mxu0 0.0
    %1210 = vmatpush1.msra.mxu0 0.0
    %1211 = vmatprep.subr.mxu0 0.0
    %1212 = vmatpush1.msra.mxu0 0.0
    %1213 = vmatprep.subr.mxu0 0.0
    %1214 = vmatpush1.msra.mxu0 0.0
    %1215 = vmatprep.subr.mxu0 0.0
    %1216 = vmatpush1.msra.mxu0 0.0
    %1217 = vmatprep.subr.mxu0 0.0
    %1218 = vmatpush1.msra.mxu0 0.0
    %1219 = vmatprep.subr.mxu0 0.0
    %1220 = vmatpush1.msra.mxu0 0.0
    %1221 = vmatprep.subr.mxu0 0.0
    %1222 = vmatpush1.msra.mxu0 0.0
    %1223 = vmatprep.subr.mxu0 0.0
    %1224 = vmatpush1.msra.mxu0 0.0
    %1225 = vmatprep.subr.mxu0 0.0
    %1226 = vmatpush1.msra.mxu0 0.0
    %1227 = vmatprep.subr.mxu0 0.0
    %1228 = vmatpush1.msra.mxu0 0.0
    %1229 = vmatprep.subr.mxu0 0.0
    %1230 = vmatpush1.msra.mxu0 0.0
    %1231 = vmatprep.subr.mxu0 0.0
    %1232 = vmatpush1.msra.mxu0 0.0
    %1233 = vmatprep.subr.mxu0 0.0
    %1234 = vmatpush1.msra.mxu0 0.0
    %1235 = vmatprep.subr.mxu0 0.0
    %1236 = vmatpush1.msra.mxu0 0.0
    %1237 = vmatprep.subr.mxu0 0.0
    %1238 = vmatpush1.msra.mxu0 0.0
    %1239 = vmatprep.subr.mxu0 0.0
    %1240 = vmatpush1.msra.mxu0 0.0
    %1241 = vmatprep.subr.mxu0 0.0
    %1242 = vmatpush1.msra.mxu0 0.0
    %1243 = vmatprep.subr.mxu0 0.0
    %1244 = vmatpush1.msra.mxu0 0.0
    %1245 = vmatprep.subr.mxu0 0.0
    %1246 = vmatpush1.msra.mxu0 0.0
    %1247 = vmatprep.subr.mxu0 0.0
    %1248 = vmatpush1.msra.mxu0 0.0
    %1249 = vmatprep.subr.mxu0 0.0
    %1250 = vmatpush1.msra.mxu0 0.0
    %1251 = vmatprep.subr.mxu0 0.0
    %1252 = vmatpush1.msra.mxu0 0.0
    %1253 = vmatprep.subr.mxu0 0.0
    %1254 = vmatpush1.msra.mxu0 0.0
    %1255 = vmatprep.subr.mxu0 0.0
    %1256 = vmatpush1.msra.mxu0 0.0
    %1257 = vmatprep.subr.mxu0 0.0
    %1258 = vmatpush1.msra.mxu0 0.0
    %1259 = vmatprep.subr.mxu0 0.0
    %1260 = vmatpush1.msra.mxu0 0.0
    %1261 = vmatprep.subr.mxu0 0.0
    %1262 = vmatpush1.msra.mxu0 0.0
    %1263 = vmatprep.mubr.f32.mxu0 0.0
    %v1264 = vand.u32 %v1192, 4294901760
    %v1265 = vsub.f32 %v1192, %v1264
    %v1266 = vand.u32 %v1265, 4294901760
    %v1267 = vsub.f32 %v1265, %v1266
    %v1268 = vand.u32 %v1267, 4294901760
    %1269 = vmatmul.mubr.f32.gmra.mrb[0].mxu0 %v1268
    %v1270 = vpop.f32.mrb[0].mxu0
    %v1271 = vadd.f32 0.0, %v1270
    %v1272 = vpop.f32.mrb[0].mxu0
    %1273 = vmatprep.mubr.f32.mxu0 0.0
    %v1274 = vand.u32 %v1195, 4294901760
    %v1275 = vsub.f32 %v1195, %v1274
    %v1276 = vand.u32 %v1275, 4294901760
    %v1277 = vsub.f32 %v1275, %v1276
    %v1278 = vand.u32 %v1277, 4294901760
    %1279 = vmatmul.mubr.f32.gmra.mrb[0].mxu0 %v1278
    %v1280 = vpop.f32.mrb[0].mxu0
    %v1281 = vadd.f32 0.0, %v1280
    %v1282 = vpop.f32.mrb[0].mxu0
    %1283 = vdwg.mxu0
    %1284 = vmatprep.subr.mxu0 0.0
    %v1285 = vand.u32 %v44, 4294901760
    %v1286 = vsub.f32 %v44, %v1285
    %v1287 = vand.u32 %v1286, 4294901760
    %v1288 = vsub.f32 %v1286, %v1287
    %v1289 = vand.u32 %v1288, 4294901760
    %1290 = vmatpush1.msra.mxu0 %v1289
    %1291 = vmatprep.subr.mxu0 0.0
    %v1292 = vand.u32 %v45, 4294901760
    %v1293 = vsub.f32 %v45, %v1292
    %v1294 = vand.u32 %v1293, 4294901760
    %v1295 = vsub.f32 %v1293, %v1294
    %v1296 = vand.u32 %v1295, 4294901760
    %1297 = vmatpush1.msra.mxu0 %v1296
    %1298 = vmatprep.subr.mxu0 0.0
    %1299 = vmatpush1.msra.mxu0 0.0
    %1300 = vmatprep.subr.mxu0 0.0
    %1301 = vmatpush1.msra.mxu0 0.0
    %1302 = vmatprep.subr.mxu0 0.0
    %1303 = vmatpush1.msra.mxu0 0.0
    %1304 = vmatprep.subr.mxu0 0.0
    %1305 = vmatpush1.msra.mxu0 0.0
    %1306 = vmatprep.subr.mxu0 0.0
    %1307 = vmatpush1.msra.mxu0 0.0
    %1308 = vmatprep.subr.mxu0 0.0
    %1309 = vmatpush1.msra.mxu0 0.0
    %1310 = vmatprep.subr.mxu0 0.0
    %1311 = vmatpush1.msra.mxu0 0.0
    %1312 = vmatprep.subr.mxu0 0.0
    %1313 = vmatpush1.msra.mxu0 0.0
    %1314 = vmatprep.subr.mxu0 0.0
    %1315 = vmatpush1.msra.mxu0 0.0
    %1316 = vmatprep.subr.mxu0 0.0
    %1317 = vmatpush1.msra.mxu0 0.0
    %1318 = vmatprep.subr.mxu0 0.0
    %1319 = vmatpush1.msra.mxu0 0.0
    %1320 = vmatprep.subr.mxu0 0.0
    %1321 = vmatpush1.msra.mxu0 0.0
    %1322 = vmatprep.subr.mxu0 0.0
    %1323 = vmatpush1.msra.mxu0 0.0
    %1324 = vmatprep.subr.mxu0 0.0
    %1325 = vmatpush1.msra.mxu0 0.0
    %1326 = vmatprep.subr.mxu0 0.0
    %1327 = vmatpush1.msra.mxu0 0.0
    %1328 = vmatprep.subr.mxu0 0.0
    %1329 = vmatpush1.msra.mxu0 0.0
    %1330 = vmatprep.subr.mxu0 0.0
    %1331 = vmatpush1.msra.mxu0 0.0
    %1332 = vmatprep.subr.mxu0 0.0
    %1333 = vmatpush1.msra.mxu0 0.0
    %1334 = vmatprep.subr.mxu0 0.0
    %1335 = vmatpush1.msra.mxu0 0.0
    %1336 = vmatprep.subr.mxu0 0.0
    %1337 = vmatpush1.msra.mxu0 0.0
    %1338 = vmatprep.subr.mxu0 0.0
    %1339 = vmatpush1.msra.mxu0 0.0
    %1340 = vmatprep.subr.mxu0 0.0
    %1341 = vmatpush1.msra.mxu0 0.0
    %1342 = vmatprep.subr.mxu0 0.0
    %1343 = vmatpush1.msra.mxu0 0.0
    %1344 = vmatprep.subr.mxu0 0.0
    %1345 = vmatpush1.msra.mxu0 0.0
    %1346 = vmatprep.subr.mxu0 0.0
    %1347 = vmatpush1.msra.mxu0 0.0
    %1348 = vmatprep.subr.mxu0 0.0
    %1349 = vmatpush1.msra.mxu0 0.0
    %1350 = vmatprep.subr.mxu0 0.0
    %1351 = vmatpush1.msra.mxu0 0.0
    %1352 = vmatprep.subr.mxu0 0.0
    %1353 = vmatpush1.msra.mxu0 0.0
    %1354 = vmatprep.subr.mxu0 0.0
    %1355 = vmatpush1.msra.mxu0 0.0
    %1356 = vmatprep.subr.mxu0 0.0
    %1357 = vmatpush1.msra.mxu0 0.0
    %1358 = vmatprep.mubr.f32.mxu0 0.0
    %v1359 = vand.u32 %v1192, 4294901760
    %1360 = vmatmul.mubr.f32.gmra.mrb[0].mxu0 %v1359
    %v1361 = vpop.f32.mrb[0].mxu0
    %v1362 = vadd.f32 %v1271, %v1361
    %v1363 = vpop.f32.mrb[0].mxu0
    %1364 = vmatprep.mubr.f32.mxu0 0.0
    %v1365 = vand.u32 %v1195, 4294901760
    %1366 = vmatmul.mubr.f32.gmra.mrb[0].mxu0 %v1365
    %v1367 = vpop.f32.mrb[0].mxu0
    %v1368 = vadd.f32 %v1281, %v1367
    %v1369 = vpop.f32.mrb[0].mxu0
    %1370 = vdwg.mxu0
    %1371 = vmatprep.subr.mxu0 0.0
    %v1372 = vand.u32 %v44, 4294901760
    %v1373 = vsub.f32 %v44, %v1372
    %1374 = vmatpush1.msra.mxu0 %v1373
    %1375 = vmatprep.subr.mxu0 0.0
    %v1376 = vand.u32 %v45, 4294901760
    %v1377 = vsub.f32 %v45, %v1376
    %1378 = vmatpush1.msra.mxu0 %v1377
    %1379 = vmatprep.subr.mxu0 0.0
    %1380 = vmatpush1.msra.mxu0 0.0
    %1381 = vmatprep.subr.mxu0 0.0
    %1382 = vmatpush1.msra.mxu0 0.0
    %1383 = vmatprep.subr.mxu0 0.0
    %1384 = vmatpush1.msra.mxu0 0.0
    %1385 = vmatprep.subr.mxu0 0.0
    %1386 = vmatpush1.msra.mxu0 0.0
    %1387 = vmatprep.subr.mxu0 0.0
    %1388 = vmatpush1.msra.mxu0 0.0
    %1389 = vmatprep.subr.mxu0 0.0
    %1390 = vmatpush1.msra.mxu0 0.0
    %1391 = vmatprep.subr.mxu0 0.0
    %1392 = vmatpush1.msra.mxu0 0.0
    %1393 = vmatprep.subr.mxu0 0.0
    %1394 = vmatpush1.msra.mxu0 0.0
    %1395 = vmatprep.subr.mxu0 0.0
    %1396 = vmatpush1.msra.mxu0 0.0
    %1397 = vmatprep.subr.mxu0 0.0
    %1398 = vmatpush1.msra.mxu0 0.0
    %1399 = vmatprep.subr.mxu0 0.0
    %1400 = vmatpush1.msra.mxu0 0.0
    %1401 = vmatprep.subr.mxu0 0.0
    %1402 = vmatpush1.msra.mxu0 0.0
    %1403 = vmatprep.subr.mxu0 0.0
    %1404 = vmatpush1.msra.mxu0 0.0
    %1405 = vmatprep.subr.mxu0 0.0
    %1406 = vmatpush1.msra.mxu0 0.0
    %1407 = vmatprep.subr.mxu0 0.0
    %1408 = vmatpush1.msra.mxu0 0.0
    %1409 = vmatprep.subr.mxu0 0.0
    %1410 = vmatpush1.msra.mxu0 0.0
    %1411 = vmatprep.subr.mxu0 0.0
    %1412 = vmatpush1.msra.mxu0 0.0
    %1413 = vmatprep.subr.mxu0 0.0
    %1414 = vmatpush1.msra.mxu0 0.0
    %1415 = vmatprep.subr.mxu0 0.0
    %1416 = vmatpush1.msra.mxu0 0.0
    %1417 = vmatprep.subr.mxu0 0.0
    %1418 = vmatpush1.msra.mxu0 0.0
    %1419 = vmatprep.subr.mxu0 0.0
    %1420 = vmatpush1.msra.mxu0 0.0
    %1421 = vmatprep.subr.mxu0 0.0
    %1422 = vmatpush1.msra.mxu0 0.0
    %1423 = vmatprep.subr.mxu0 0.0
    %1424 = vmatpush1.msra.mxu0 0.0
    %1425 = vmatprep.subr.mxu0 0.0
    %1426 = vmatpush1.msra.mxu0 0.0
    %1427 = vmatprep.subr.mxu0 0.0
    %1428 = vmatpush1.msra.mxu0 0.0
    %1429 = vmatprep.subr.mxu0 0.0
    %1430 = vmatpush1.msra.mxu0 0.0
    %1431 = vmatprep.subr.mxu0 0.0
    %1432 = vmatpush1.msra.mxu0 0.0
    %1433 = vmatprep.subr.mxu0 0.0
    %1434 = vmatpush1.msra.mxu0 0.0
    %1435 = vmatprep.subr.mxu0 0.0
    %1436 = vmatpush1.msra.mxu0 0.0
    %1437 = vmatprep.subr.mxu0 0.0
    %1438 = vmatpush1.msra.mxu0 0.0
    %1439 = vmatprep.mubr.f32.mxu0 0.0
    %v1440 = vand.u32 %v1192, 4294901760
    %v1441 = vsub.f32 %v1192, %v1440
    %1442 = vmatmul.mubr.f32.gmra.mrb[0].mxu0 %v1441
    %v1443 = vpop.f32.mrb[0].mxu0
    %v1444 = vadd.f32 %v1362, %v1443
    %v1445 = vpop.f32.mrb[0].mxu0
    %1446 = vmatprep.mubr.f32.mxu0 0.0
    %v1447 = vand.u32 %v1195, 4294901760
    %v1448 = vsub.f32 %v1195, %v1447
    %1449 = vmatmul.mubr.f32.gmra.mrb[0].mxu0 %v1448
    %v1450 = vpop.f32.mrb[0].mxu0
    %v1451 = vadd.f32 %v1368, %v1450
    %v1452 = vpop.f32.mrb[0].mxu0
    %1453 = vdwg.mxu0
    %1454 = vmatprep.subr.mxu0 0.0
    %v1455 = vand.u32 %v44, 4294901760
    %1456 = vmatpush1.msra.mxu0 %v1455
    %1457 = vmatprep.subr.mxu0 0.0
    %v1458 = vand.u32 %v45, 4294901760
    %1459 = vmatpush1.msra.mxu0 %v1458
    %1460 = vmatprep.subr.mxu0 0.0
    %1461 = vmatpush1.msra.mxu0 0.0
    %1462 = vmatprep.subr.mxu0 0.0
    %1463 = vmatpush1.msra.mxu0 0.0
    %1464 = vmatprep.subr.mxu0 0.0
    %1465 = vmatpush1.msra.mxu0 0.0
    %1466 = vmatprep.subr.mxu0 0.0
    %1467 = vmatpush1.msra.mxu0 0.0
    %1468 = vmatprep.subr.mxu0 0.0
    %1469 = vmatpush1.msra.mxu0 0.0
    %1470 = vmatprep.subr.mxu0 0.0
    %1471 = vmatpush1.msra.mxu0 0.0
    %1472 = vmatprep.subr.mxu0 0.0
    %1473 = vmatpush1.msra.mxu0 0.0
    %1474 = vmatprep.subr.mxu0 0.0
    %1475 = vmatpush1.msra.mxu0 0.0
    %1476 = vmatprep.subr.mxu0 0.0
    %1477 = vmatpush1.msra.mxu0 0.0
    %1478 = vmatprep.subr.mxu0 0.0
    %1479 = vmatpush1.msra.mxu0 0.0
    %1480 = vmatprep.subr.mxu0 0.0
    %1481 = vmatpush1.msra.mxu0 0.0
    %1482 = vmatprep.subr.mxu0 0.0
    %1483 = vmatpush1.msra.mxu0 0.0
    %1484 = vmatprep.subr.mxu0 0.0
    %1485 = vmatpush1.msra.mxu0 0.0
    %1486 = vmatprep.subr.mxu0 0.0
    %1487 = vmatpush1.msra.mxu0 0.0
    %1488 = vmatprep.subr.mxu0 0.0
    %1489 = vmatpush1.msra.mxu0 0.0
    %1490 = vmatprep.subr.mxu0 0.0
    %1491 = vmatpush1.msra.mxu0 0.0
    %1492 = vmatprep.subr.mxu0 0.0
    %1493 = vmatpush1.msra.mxu0 0.0
    %1494 = vmatprep.subr.mxu0 0.0
    %1495 = vmatpush1.msra.mxu0 0.0
    %1496 = vmatprep.subr.mxu0 0.0
    %1497 = vmatpush1.msra.mxu0 0.0
    %1498 = vmatprep.subr.mxu0 0.0
    %1499 = vmatpush1.msra.mxu0 0.0
    %1500 = vmatprep.subr.mxu0 0.0
    %1501 = vmatpush1.msra.mxu0 0.0
    %1502 = vmatprep.subr.mxu0 0.0
    %1503 = vmatpush1.msra.mxu0 0.0
    %1504 = vmatprep.subr.mxu0 0.0
    %1505 = vmatpush1.msra.mxu0 0.0
    %1506 = vmatprep.subr.mxu0 0.0
    %1507 = vmatpush1.msra.mxu0 0.0
    %1508 = vmatprep.subr.mxu0 0.0
    %1509 = vmatpush1.msra.mxu0 0.0
    %1510 = vmatprep.subr.mxu0 0.0
    %1511 = vmatpush1.msra.mxu0 0.0
    %1512 = vmatprep.subr.mxu0 0.0
    %1513 = vmatpush1.msra.mxu0 0.0
    %1514 = vmatprep.subr.mxu0 0.0
    %1515 = vmatpush1.msra.mxu0 0.0
    %1516 = vmatprep.subr.mxu0 0.0
    %1517 = vmatpush1.msra.mxu0 0.0
    %1518 = vmatprep.subr.mxu0 0.0
    %1519 = vmatpush1.msra.mxu0 0.0
    %1520 = vmatprep.mubr.f32.mxu0 0.0
    %v1521 = vand.u32 %v1192, 4294901760
    %v1522 = vsub.f32 %v1192, %v1521
    %v1523 = vand.u32 %v1522, 4294901760
    %1524 = vmatmul.mubr.f32.gmra.mrb[0].mxu0 %v1523
    %v1525 = vpop.f32.mrb[0].mxu0
    %v1526 = vadd.f32 %v1444, %v1525
    %v1527 = vpop.f32.mrb[0].mxu0
    %1528 = vmatprep.mubr.f32.mxu0 0.0
    %v1529 = vand.u32 %v1195, 4294901760
    %v1530 = vsub.f32 %v1195, %v1529
    %v1531 = vand.u32 %v1530, 4294901760
    %1532 = vmatmul.mubr.f32.gmra.mrb[0].mxu0 %v1531
    %v1533 = vpop.f32.mrb[0].mxu0
    %v1534 = vadd.f32 %v1451, %v1533
    %v1535 = vpop.f32.mrb[0].mxu0
    %1536 = vdwg.mxu0
    %1537 = vmatprep.subr.mxu0 0.0
    %v1538 = vand.u32 %v44, 4294901760
    %v1539 = vsub.f32 %v44, %v1538
    %v1540 = vand.u32 %v1539, 4294901760
    %1541 = vmatpush1.msra.mxu0 %v1540
    %1542 = vmatprep.subr.mxu0 0.0
    %v1543 = vand.u32 %v45, 4294901760
    %v1544 = vsub.f32 %v45, %v1543
    %v1545 = vand.u32 %v1544, 4294901760
    %1546 = vmatpush1.msra.mxu0 %v1545
    %1547 = vmatprep.subr.mxu0 0.0
    %1548 = vmatpush1.msra.mxu0 0.0
    %1549 = vmatprep.subr.mxu0 0.0
    %1550 = vmatpush1.msra.mxu0 0.0
    %1551 = vmatprep.subr.mxu0 0.0
    %1552 = vmatpush1.msra.mxu0 0.0
    %1553 = vmatprep.subr.mxu0 0.0
    %1554 = vmatpush1.msra.mxu0 0.0
    %1555 = vmatprep.subr.mxu0 0.0
    %1556 = vmatpush1.msra.mxu0 0.0
    %1557 = vmatprep.subr.mxu0 0.0
    %1558 = vmatpush1.msra.mxu0 0.0
    %1559 = vmatprep.subr.mxu0 0.0
    %1560 = vmatpush1.msra.mxu0 0.0
    %1561 = vmatprep.subr.mxu0 0.0
    %1562 = vmatpush1.msra.mxu0 0.0
    %1563 = vmatprep.subr.mxu0 0.0
    %1564 = vmatpush1.msra.mxu0 0.0
    %1565 = vmatprep.subr.mxu0 0.0
    %1566 = vmatpush1.msra.mxu0 0.0
    %1567 = vmatprep.subr.mxu0 0.0
    %1568 = vmatpush1.msra.mxu0 0.0
    %1569 = vmatprep.subr.mxu0 0.0
    %1570 = vmatpush1.msra.mxu0 0.0
    %1571 = vmatprep.subr.mxu0 0.0
    %1572 = vmatpush1.msra.mxu0 0.0
    %1573 = vmatprep.subr.mxu0 0.0
    %1574 = vmatpush1.msra.mxu0 0.0
    %1575 = vmatprep.subr.mxu0 0.0
    %1576 = vmatpush1.msra.mxu0 0.0
    %1577 = vmatprep.subr.mxu0 0.0
    %1578 = vmatpush1.msra.mxu0 0.0
    %1579 = vmatprep.subr.mxu0 0.0
    %1580 = vmatpush1.msra.mxu0 0.0
    %1581 = vmatprep.subr.mxu0 0.0
    %1582 = vmatpush1.msra.mxu0 0.0
    %1583 = vmatprep.subr.mxu0 0.0
    %1584 = vmatpush1.msra.mxu0 0.0
    %1585 = vmatprep.subr.mxu0 0.0
    %1586 = vmatpush1.msra.mxu0 0.0
    %1587 = vmatprep.subr.mxu0 0.0
    %1588 = vmatpush1.msra.mxu0 0.0
    %1589 = vmatprep.subr.mxu0 0.0
    %1590 = vmatpush1.msra.mxu0 0.0
    %1591 = vmatprep.subr.mxu0 0.0
    %1592 = vmatpush1.msra.mxu0 0.0
    %1593 = vmatprep.subr.mxu0 0.0
    %1594 = vmatpush1.msra.mxu0 0.0
    %1595 = vmatprep.subr.mxu0 0.0
    %1596 = vmatpush1.msra.mxu0 0.0
    %1597 = vmatprep.subr.mxu0 0.0
    %1598 = vmatpush1.msra.mxu0 0.0
    %1599 = vmatprep.subr.mxu0 0.0
    %1600 = vmatpush1.msra.mxu0 0.0
    %1601 = vmatprep.subr.mxu0 0.0
    %1602 = vmatpush1.msra.mxu0 0.0
    %1603 = vmatprep.subr.mxu0 0.0
    %1604 = vmatpush1.msra.mxu0 0.0
    %1605 = vmatprep.subr.mxu0 0.0
    %1606 = vmatpush1.msra.mxu0 0.0
    %1607 = vmatprep.mubr.f32.mxu0 0.0
    %v1608 = vand.u32 %v1192, 4294901760
    %1609 = vmatmul.mubr.f32.gmra.mrb[0].mxu0 %v1608
    %v1610 = vpop.f32.mrb[0].mxu0
    %v1611 = vadd.f32 %v1526, %v1610
    %v1612 = vpop.f32.mrb[0].mxu0
    %1613 = vmatprep.mubr.f32.mxu0 0.0
    %v1614 = vand.u32 %v1195, 4294901760
    %1615 = vmatmul.mubr.f32.gmra.mrb[0].mxu0 %v1614
    %v1616 = vpop.f32.mrb[0].mxu0
    %v1617 = vadd.f32 %v1534, %v1616
    %v1618 = vpop.f32.mrb[0].mxu0
    %1619 = vdwg.mxu0
    %1620 = vmatprep.subr.mxu0 0.0
    %v1621 = vand.u32 %v44, 4294901760
    %1622 = vmatpush1.msra.mxu0 %v1621
    %1623 = vmatprep.subr.mxu0 0.0
    %v1624 = vand.u32 %v45, 4294901760
    %1625 = vmatpush1.msra.mxu0 %v1624
    %1626 = vmatprep.subr.mxu0 0.0
    %1627 = vmatpush1.msra.mxu0 0.0
    %1628 = vmatprep.subr.mxu0 0.0
    %1629 = vmatpush1.msra.mxu0 0.0
    %1630 = vmatprep.subr.mxu0 0.0
    %1631 = vmatpush1.msra.mxu0 0.0
    %1632 = vmatprep.subr.mxu0 0.0
    %1633 = vmatpush1.msra.mxu0 0.0
    %1634 = vmatprep.subr.mxu0 0.0
    %1635 = vmatpush1.msra.mxu0 0.0
    %1636 = vmatprep.subr.mxu0 0.0
    %1637 = vmatpush1.msra.mxu0 0.0
    %1638 = vmatprep.subr.mxu0 0.0
    %1639 = vmatpush1.msra.mxu0 0.0
    %1640 = vmatprep.subr.mxu0 0.0
    %1641 = vmatpush1.msra.mxu0 0.0
    %1642 = vmatprep.subr.mxu0 0.0
    %1643 = vmatpush1.msra.mxu0 0.0
    %1644 = vmatprep.subr.mxu0 0.0
    %1645 = vmatpush1.msra.mxu0 0.0
    %1646 = vmatprep.subr.mxu0 0.0
    %1647 = vmatpush1.msra.mxu0 0.0
    %1648 = vmatprep.subr.mxu0 0.0
    %1649 = vmatpush1.msra.mxu0 0.0
    %1650 = vmatprep.subr.mxu0 0.0
    %1651 = vmatpush1.msra.mxu0 0.0
    %1652 = vmatprep.subr.mxu0 0.0
    %1653 = vmatpush1.msra.mxu0 0.0
    %1654 = vmatprep.subr.mxu0 0.0
    %1655 = vmatpush1.msra.mxu0 0.0
    %1656 = vmatprep.subr.mxu0 0.0
    %1657 = vmatpush1.msra.mxu0 0.0
    %1658 = vmatprep.subr.mxu0 0.0
    %1659 = vmatpush1.msra.mxu0 0.0
    %1660 = vmatprep.subr.mxu0 0.0
    %1661 = vmatpush1.msra.mxu0 0.0
    %1662 = vmatprep.subr.mxu0 0.0
    %1663 = vmatpush1.msra.mxu0 0.0
    %1664 = vmatprep.subr.mxu0 0.0
    %1665 = vmatpush1.msra.mxu0 0.0
    %1666 = vmatprep.subr.mxu0 0.0
    %1667 = vmatpush1.msra.mxu0 0.0
    %1668 = vmatprep.subr.mxu0 0.0
    %1669 = vmatpush1.msra.mxu0 0.0
    %1670 = vmatprep.subr.mxu0 0.0
    %1671 = vmatpush1.msra.mxu0 0.0
    %1672 = vmatprep.subr.mxu0 0.0
    %1673 = vmatpush1.msra.mxu0 0.0
    %1674 = vmatprep.subr.mxu0 0.0
    %1675 = vmatpush1.msra.mxu0 0.0
    %1676 = vmatprep.subr.mxu0 0.0
    %1677 = vmatpush1.msra.mxu0 0.0
    %1678 = vmatprep.subr.mxu0 0.0
    %1679 = vmatpush1.msra.mxu0 0.0
    %1680 = vmatprep.subr.mxu0 0.0
    %1681 = vmatpush1.msra.mxu0 0.0
    %1682 = vmatprep.subr.mxu0 0.0
    %1683 = vmatpush1.msra.mxu0 0.0
    %1684 = vmatprep.subr.mxu0 0.0
    %1685 = vmatpush1.msra.mxu0 0.0
    %1686 = vmatprep.mubr.f32.mxu0 0.0
    %v1687 = vand.u32 %v1192, 4294901760
    %1688 = vmatmul.mubr.f32.gmra.mrb[0].mxu0 %v1687
    %v1689 = vpop.f32.mrb[0].mxu0
    %v1690 = vadd.f32 %v1611, %v1689
    %v1691 = vpop.f32.mrb[0].mxu0
    %1692 = vmatprep.mubr.f32.mxu0 0.0
    %v1693 = vand.u32 %v1195, 4294901760
    %1694 = vmatmul.mubr.f32.gmra.mrb[0].mxu0 %v1693
    %v1695 = vpop.f32.mrb[0].mxu0
    %v1696 = vadd.f32 %v1617, %v1695
    %v1697 = vpop.f32.mrb[0].mxu0
    %1698 = vdwg.mxu0
    %1699 = vset.pattern.permute.xlu0 5
    %1700 = vperm.xlu0 %1699, %v35
    %v1701 = vpop.permute.xlu0 %1700
    %1702 = vset.pattern.permute.xlu0 5
    %1703 = vperm.xlu0 %1702, %v36
    %v1704 = vpop.permute.xlu0 %1703
    %vm1705 = vcmp.eq.s32.totalorder %v47, %v1701
    %vm1706 = vcmp.eq.s32.totalorder %v47, %v1704
    %v1707 = vsel %vm1705, 1, 0
    %v1708 = vsel %vm1706, 1, 0
    %v1709 = vcvt.s32.f32 %v1707
    %v1710 = vcvt.s32.f32 %v1708
    %v1712 = vsel %vm593, %v1709, 0
    %v1715 = vsel %vm593, %v1710, 0
    %1717 = vmatprep.subr.mxu0 0.0
    %v1718 = vand.u32 %v37, 4294901760
    %1719 = vmatpush1.msra.mxu0 %v1718
    %1720 = vmatprep.subr.mxu0 0.0
    %v1721 = vand.u32 %v38, 4294901760
    %1722 = vmatpush1.msra.mxu0 %v1721
    %1723 = vmatprep.subr.mxu0 0.0
    %v1724 = vand.u32 %v39, 4294901760
    %1725 = vmatpush1.msra.mxu0 %v1724
    %1726 = vmatprep.subr.mxu0 0.0
    %v1727 = vand.u32 %v40, 4294901760
    %1728 = vmatpush1.msra.mxu0 %v1727
    %1729 = vmatprep.subr.mxu0 0.0
    %v1730 = vand.u32 %v41, 4294901760
    %1731 = vmatpush1.msra.mxu0 %v1730
    %1732 = vmatprep.subr.mxu0 0.0
    %v1733 = vand.u32 %v42, 4294901760
    %1734 = vmatpush1.msra.mxu0 %v1733
    %1735 = vmatprep.subr.mxu0 0.0
    %v1736 = vand.u32 %v43, 4294901760
    %1737 = vmatpush1.msra.mxu0 %v1736
    %1738 = vmatprep.subr.mxu0 0.0
    %1739 = vmatpush1.msra.mxu0 0.0
    %1740 = vmatprep.subr.mxu0 0.0
    %1741 = vmatpush1.msra.mxu0 0.0
    %1742 = vmatprep.subr.mxu0 0.0
    %1743 = vmatpush1.msra.mxu0 0.0
    %1744 = vmatprep.subr.mxu0 0.0
    %1745 = vmatpush1.msra.mxu0 0.0
    %1746 = vmatprep.subr.mxu0 0.0
    %1747 = vmatpush1.msra.mxu0 0.0
    %1748 = vmatprep.subr.mxu0 0.0
    %1749 = vmatpush1.msra.mxu0 0.0
    %1750 = vmatprep.subr.mxu0 0.0
    %1751 = vmatpush1.msra.mxu0 0.0
    %1752 = vmatprep.subr.mxu0 0.0
    %1753 = vmatpush1.msra.mxu0 0.0
    %1754 = vmatprep.subr.mxu0 0.0
    %1755 = vmatpush1.msra.mxu0 0.0
    %1756 = vmatprep.subr.mxu0 0.0
    %1757 = vmatpush1.msra.mxu0 0.0
    %1758 = vmatprep.subr.mxu0 0.0
    %1759 = vmatpush1.msra.mxu0 0.0
    %1760 = vmatprep.subr.mxu0 0.0
    %1761 = vmatpush1.msra.mxu0 0.0
    %1762 = vmatprep.subr.mxu0 0.0
    %1763 = vmatpush1.msra.mxu0 0.0
    %1764 = vmatprep.subr.mxu0 0.0
    %1765 = vmatpush1.msra.mxu0 0.0
    %1766 = vmatprep.subr.mxu0 0.0
    %1767 = vmatpush1.msra.mxu0 0.0
    %1768 = vmatprep.subr.mxu0 0.0
    %1769 = vmatpush1.msra.mxu0 0.0
    %1770 = vmatprep.subr.mxu0 0.0
    %1771 = vmatpush1.msra.mxu0 0.0
    %1772 = vmatprep.subr.mxu0 0.0
    %1773 = vmatpush1.msra.mxu0 0.0
    %1774 = vmatprep.subr.mxu0 0.0
    %1775 = vmatpush1.msra.mxu0 0.0
    %1776 = vmatprep.subr.mxu0 0.0
    %1777 = vmatpush1.msra.mxu0 0.0
    %1778 = vmatprep.subr.mxu0 0.0
    %1779 = vmatpush1.msra.mxu0 0.0
    %1780 = vmatprep.subr.mxu0 0.0
    %1781 = vmatpush1.msra.mxu0 0.0
    %1782 = vmatprep.subr.mxu0 0.0
    %1783 = vmatpush1.msra.mxu0 0.0
    %1784 = vmatprep.subr.mxu0 0.0
    %1785 = vmatpush1.msra.mxu0 0.0
    %1786 = vmatprep.subr.mxu0 0.0
    %1787 = vmatpush1.msra.mxu0 0.0
    %1788 = vmatprep.mubr.f32.mxu0 0.0
    %v1789 = vand.u32 %v1712, 4294901760
    %v1790 = vsub.f32 %v1712, %v1789
    %v1791 = vand.u32 %v1790, 4294901760
    %v1792 = vsub.f32 %v1790, %v1791
    %v1793 = vand.u32 %v1792, 4294901760
    %1794 = vmatmul.mubr.f32.gmra.mrb[0].mxu0 %v1793
    %v1795 = vpop.f32.mrb[0].mxu0
    %v1796 = vadd.f32 0.0, %v1795
    %v1797 = vpop.f32.mrb[0].mxu0
    %1798 = vmatprep.mubr.f32.mxu0 0.0
    %v1799 = vand.u32 %v1715, 4294901760
    %v1800 = vsub.f32 %v1715, %v1799
    %v1801 = vand.u32 %v1800, 4294901760
    %v1802 = vsub.f32 %v1800, %v1801
    %v1803 = vand.u32 %v1802, 4294901760
    %1804 = vmatmul.mubr.f32.gmra.mrb[0].mxu0 %v1803
    %v1805 = vpop.f32.mrb[0].mxu0
    %v1806 = vadd.f32 0.0, %v1805
    %v1807 = vpop.f32.mrb[0].mxu0
    %1808 = vdwg.mxu0
    %1809 = vmatprep.subr.mxu0 0.0
    %v1810 = vand.u32 %v37, 4294901760
    %v1811 = vsub.f32 %v37, %v1810
    %v1812 = vand.u32 %v1811, 4294901760
    %v1813 = vsub.f32 %v1811, %v1812
    %v1814 = vand.u32 %v1813, 4294901760
    %1815 = vmatpush1.msra.mxu0 %v1814
    %1816 = vmatprep.subr.mxu0 0.0
    %v1817 = vand.u32 %v38, 4294901760
    %v1818 = vsub.f32 %v38, %v1817
    %v1819 = vand.u32 %v1818, 4294901760
    %v1820 = vsub.f32 %v1818, %v1819
    %v1821 = vand.u32 %v1820, 4294901760
    %1822 = vmatpush1.msra.mxu0 %v1821
    %1823 = vmatprep.subr.mxu0 0.0
    %v1824 = vand.u32 %v39, 4294901760
    %v1825 = vsub.f32 %v39, %v1824
    %v1826 = vand.u32 %v1825, 4294901760
    %v1827 = vsub.f32 %v1825, %v1826
    %v1828 = vand.u32 %v1827, 4294901760
    %1829 = vmatpush1.msra.mxu0 %v1828
    %1830 = vmatprep.subr.mxu0 0.0
    %v1831 = vand.u32 %v40, 4294901760
    %v1832 = vsub.f32 %v40, %v1831
    %v1833 = vand.u32 %v1832, 4294901760
    %v1834 = vsub.f32 %v1832, %v1833
    %v1835 = vand.u32 %v1834, 4294901760
    %1836 = vmatpush1.msra.mxu0 %v1835
    %1837 = vmatprep.subr.mxu0 0.0
    %v1838 = vand.u32 %v41, 4294901760
    %v1839 = vsub.f32 %v41, %v1838
    %v1840 = vand.u32 %v1839, 4294901760
    %v1841 = vsub.f32 %v1839, %v1840
    %v1842 = vand.u32 %v1841, 4294901760
    %1843 = vmatpush1.msra.mxu0 %v1842
    %1844 = vmatprep.subr.mxu0 0.0
    %v1845 = vand.u32 %v42, 4294901760
    %v1846 = vsub.f32 %v42, %v1845
    %v1847 = vand.u32 %v1846, 4294901760
    %v1848 = vsub.f32 %v1846, %v1847
    %v1849 = vand.u32 %v1848, 4294901760
    %1850 = vmatpush1.msra.mxu0 %v1849
    %1851 = vmatprep.subr.mxu0 0.0
    %v1852 = vand.u32 %v43, 4294901760
    %v1853 = vsub.f32 %v43, %v1852
    %v1854 = vand.u32 %v1853, 4294901760
    %v1855 = vsub.f32 %v1853, %v1854
    %v1856 = vand.u32 %v1855, 4294901760
    %1857 = vmatpush1.msra.mxu0 %v1856
    %1858 = vmatprep.subr.mxu0 0.0
    %1859 = vmatpush1.msra.mxu0 0.0
    %1860 = vmatprep.subr.mxu0 0.0
    %1861 = vmatpush1.msra.mxu0 0.0
    %1862 = vmatprep.subr.mxu0 0.0
    %1863 = vmatpush1.msra.mxu0 0.0
    %1864 = vmatprep.subr.mxu0 0.0
    %1865 = vmatpush1.msra.mxu0 0.0
    %1866 = vmatprep.subr.mxu0 0.0
    %1867 = vmatpush1.msra.mxu0 0.0
    %1868 = vmatprep.subr.mxu0 0.0
    %1869 = vmatpush1.msra.mxu0 0.0
    %1870 = vmatprep.subr.mxu0 0.0
    %1871 = vmatpush1.msra.mxu0 0.0
    %1872 = vmatprep.subr.mxu0 0.0
    %1873 = vmatpush1.msra.mxu0 0.0
    %1874 = vmatprep.subr.mxu0 0.0
    %1875 = vmatpush1.msra.mxu0 0.0
    %1876 = vmatprep.subr.mxu0 0.0
    %1877 = vmatpush1.msra.mxu0 0.0
    %1878 = vmatprep.subr.mxu0 0.0
    %1879 = vmatpush1.msra.mxu0 0.0
    %1880 = vmatprep.subr.mxu0 0.0
    %1881 = vmatpush1.msra.mxu0 0.0
    %1882 = vmatprep.subr.mxu0 0.0
    %1883 = vmatpush1.msra.mxu0 0.0
    %1884 = vmatprep.subr.mxu0 0.0
    %1885 = vmatpush1.msra.mxu0 0.0
    %1886 = vmatprep.subr.mxu0 0.0
    %1887 = vmatpush1.msra.mxu0 0.0
    %1888 = vmatprep.subr.mxu0 0.0
    %1889 = vmatpush1.msra.mxu0 0.0
    %1890 = vmatprep.subr.mxu0 0.0
    %1891 = vmatpush1.msra.mxu0 0.0
    %1892 = vmatprep.subr.mxu0 0.0
    %1893 = vmatpush1.msra.mxu0 0.0
    %1894 = vmatprep.subr.mxu0 0.0
    %1895 = vmatpush1.msra.mxu0 0.0
    %1896 = vmatprep.subr.mxu0 0.0
    %1897 = vmatpush1.msra.mxu0 0.0
    %1898 = vmatprep.subr.mxu0 0.0
    %1899 = vmatpush1.msra.mxu0 0.0
    %1900 = vmatprep.subr.mxu0 0.0
    %1901 = vmatpush1.msra.mxu0 0.0
    %1902 = vmatprep.subr.mxu0 0.0
    %1903 = vmatpush1.msra.mxu0 0.0
    %1904 = vmatprep.subr.mxu0 0.0
    %1905 = vmatpush1.msra.mxu0 0.0
    %1906 = vmatprep.subr.mxu0 0.0
    %1907 = vmatpush1.msra.mxu0 0.0
    %1908 = vmatprep.mubr.f32.mxu0 0.0
    %v1909 = vand.u32 %v1712, 4294901760
    %1910 = vmatmul.mubr.f32.gmra.mrb[0].mxu0 %v1909
    %v1911 = vpop.f32.mrb[0].mxu0
    %v1912 = vadd.f32 %v1796, %v1911
    %v1913 = vpop.f32.mrb[0].mxu0
    %1914 = vmatprep.mubr.f32.mxu0 0.0
    %v1915 = vand.u32 %v1715, 4294901760
    %1916 = vmatmul.mubr.f32.gmra.mrb[0].mxu0 %v1915
    %v1917 = vpop.f32.mrb[0].mxu0
    %v1918 = vadd.f32 %v1806, %v1917
    %v1919 = vpop.f32.mrb[0].mxu0
    %1920 = vdwg.mxu0
    %1921 = vmatprep.subr.mxu0 0.0
    %v1922 = vand.u32 %v37, 4294901760
    %v1923 = vsub.f32 %v37, %v1922
    %1924 = vmatpush1.msra.mxu0 %v1923
    %1925 = vmatprep.subr.mxu0 0.0
    %v1926 = vand.u32 %v38, 4294901760
    %v1927 = vsub.f32 %v38, %v1926
    %1928 = vmatpush1.msra.mxu0 %v1927
    %1929 = vmatprep.subr.mxu0 0.0
    %v1930 = vand.u32 %v39, 4294901760
    %v1931 = vsub.f32 %v39, %v1930
    %1932 = vmatpush1.msra.mxu0 %v1931
    %1933 = vmatprep.subr.mxu0 0.0
    %v1934 = vand.u32 %v40, 4294901760
    %v1935 = vsub.f32 %v40, %v1934
    %1936 = vmatpush1.msra.mxu0 %v1935
    %1937 = vmatprep.subr.mxu0 0.0
    %v1938 = vand.u32 %v41, 4294901760
    %v1939 = vsub.f32 %v41, %v1938
    %1940 = vmatpush1.msra.mxu0 %v1939
    %1941 = vmatprep.subr.mxu0 0.0
    %v1942 = vand.u32 %v42, 4294901760
    %v1943 = vsub.f32 %v42, %v1942
    %1944 = vmatpush1.msra.mxu0 %v1943
    %1945 = vmatprep.subr.mxu0 0.0
    %v1946 = vand.u32 %v43, 4294901760
    %v1947 = vsub.f32 %v43, %v1946
    %1948 = vmatpush1.msra.mxu0 %v1947
    %1949 = vmatprep.subr.mxu0 0.0
    %1950 = vmatpush1.msra.mxu0 0.0
    %1951 = vmatprep.subr.mxu0 0.0
    %1952 = vmatpush1.msra.mxu0 0.0
    %1953 = vmatprep.subr.mxu0 0.0
    %1954 = vmatpush1.msra.mxu0 0.0
    %1955 = vmatprep.subr.mxu0 0.0
    %1956 = vmatpush1.msra.mxu0 0.0
    %1957 = vmatprep.subr.mxu0 0.0
    %1958 = vmatpush1.msra.mxu0 0.0
    %1959 = vmatprep.subr.mxu0 0.0
    %1960 = vmatpush1.msra.mxu0 0.0
    %1961 = vmatprep.subr.mxu0 0.0
    %1962 = vmatpush1.msra.mxu0 0.0
    %1963 = vmatprep.subr.mxu0 0.0
    %1964 = vmatpush1.msra.mxu0 0.0
    %1965 = vmatprep.subr.mxu0 0.0
    %1966 = vmatpush1.msra.mxu0 0.0
    %1967 = vmatprep.subr.mxu0 0.0
    %1968 = vmatpush1.msra.mxu0 0.0
    %1969 = vmatprep.subr.mxu0 0.0
    %1970 = vmatpush1.msra.mxu0 0.0
    %1971 = vmatprep.subr.mxu0 0.0
    %1972 = vmatpush1.msra.mxu0 0.0
    %1973 = vmatprep.subr.mxu0 0.0
    %1974 = vmatpush1.msra.mxu0 0.0
    %1975 = vmatprep.subr.mxu0 0.0
    %1976 = vmatpush1.msra.mxu0 0.0
    %1977 = vmatprep.subr.mxu0 0.0
    %1978 = vmatpush1.msra.mxu0 0.0
    %1979 = vmatprep.subr.mxu0 0.0
    %1980 = vmatpush1.msra.mxu0 0.0
    %1981 = vmatprep.subr.mxu0 0.0
    %1982 = vmatpush1.msra.mxu0 0.0
    %1983 = vmatprep.subr.mxu0 0.0
    %1984 = vmatpush1.msra.mxu0 0.0
    %1985 = vmatprep.subr.mxu0 0.0
    %1986 = vmatpush1.msra.mxu0 0.0
    %1987 = vmatprep.subr.mxu0 0.0
    %1988 = vmatpush1.msra.mxu0 0.0
    %1989 = vmatprep.subr.mxu0 0.0
    %1990 = vmatpush1.msra.mxu0 0.0
    %1991 = vmatprep.subr.mxu0 0.0
    %1992 = vmatpush1.msra.mxu0 0.0
    %1993 = vmatprep.subr.mxu0 0.0
    %1994 = vmatpush1.msra.mxu0 0.0
    %1995 = vmatprep.subr.mxu0 0.0
    %1996 = vmatpush1.msra.mxu0 0.0
    %1997 = vmatprep.subr.mxu0 0.0
    %1998 = vmatpush1.msra.mxu0 0.0
    %1999 = vmatprep.mubr.f32.mxu0 0.0
    %v2000 = vand.u32 %v1712, 4294901760
    %v2001 = vsub.f32 %v1712, %v2000
    %2002 = vmatmul.mubr.f32.gmra.mrb[0].mxu0 %v2001
    %v2003 = vpop.f32.mrb[0].mxu0
    %v2004 = vadd.f32 %v1912, %v2003
    %v2005 = vpop.f32.mrb[0].mxu0
    %2006 = vmatprep.mubr.f32.mxu0 0.0
    %v2007 = vand.u32 %v1715, 4294901760
    %v2008 = vsub.f32 %v1715, %v2007
    %2009 = vmatmul.mubr.f32.gmra.mrb[0].mxu0 %v2008
    %v2010 = vpop.f32.mrb[0].mxu0
    %v2011 = vadd.f32 %v1918, %v2010
    %v2012 = vpop.f32.mrb[0].mxu0
    %2013 = vdwg.mxu0
    %2014 = vmatprep.subr.mxu0 0.0
    %v2015 = vand.u32 %v37, 4294901760
    %2016 = vmatpush1.msra.mxu0 %v2015
    %2017 = vmatprep.subr.mxu0 0.0
    %v2018 = vand.u32 %v38, 4294901760
    %2019 = vmatpush1.msra.mxu0 %v2018
    %2020 = vmatprep.subr.mxu0 0.0
    %v2021 = vand.u32 %v39, 4294901760
    %2022 = vmatpush1.msra.mxu0 %v2021
    %2023 = vmatprep.subr.mxu0 0.0
    %v2024 = vand.u32 %v40, 4294901760
    %2025 = vmatpush1.msra.mxu0 %v2024
    %2026 = vmatprep.subr.mxu0 0.0
    %v2027 = vand.u32 %v41, 4294901760
    %2028 = vmatpush1.msra.mxu0 %v2027
    %2029 = vmatprep.subr.mxu0 0.0
    %v2030 = vand.u32 %v42, 4294901760
    %2031 = vmatpush1.msra.mxu0 %v2030
    %2032 = vmatprep.subr.mxu0 0.0
    %v2033 = vand.u32 %v43, 4294901760
    %2034 = vmatpush1.msra.mxu0 %v2033
    %2035 = vmatprep.subr.mxu0 0.0
    %2036 = vmatpush1.msra.mxu0 0.0
    %2037 = vmatprep.subr.mxu0 0.0
    %2038 = vmatpush1.msra.mxu0 0.0
    %2039 = vmatprep.subr.mxu0 0.0
    %2040 = vmatpush1.msra.mxu0 0.0
    %2041 = vmatprep.subr.mxu0 0.0
    %2042 = vmatpush1.msra.mxu0 0.0
    %2043 = vmatprep.subr.mxu0 0.0
    %2044 = vmatpush1.msra.mxu0 0.0
    %2045 = vmatprep.subr.mxu0 0.0
    %2046 = vmatpush1.msra.mxu0 0.0
    %2047 = vmatprep.subr.mxu0 0.0
    %2048 = vmatpush1.msra.mxu0 0.0
    %2049 = vmatprep.subr.mxu0 0.0
    %2050 = vmatpush1.msra.mxu0 0.0
    %2051 = vmatprep.subr.mxu0 0.0
    %2052 = vmatpush1.msra.mxu0 0.0
    %2053 = vmatprep.subr.mxu0 0.0
    %2054 = vmatpush1.msra.mxu0 0.0
    %2055 = vmatprep.subr.mxu0 0.0
    %2056 = vmatpush1.msra.mxu0 0.0
    %2057 = vmatprep.subr.mxu0 0.0
    %2058 = vmatpush1.msra.mxu0 0.0
    %2059 = vmatprep.subr.mxu0 0.0
    %2060 = vmatpush1.msra.mxu0 0.0
    %2061 = vmatprep.subr.mxu0 0.0
    %2062 = vmatpush1.msra.mxu0 0.0
    %2063 = vmatprep.subr.mxu0 0.0
    %2064 = vmatpush1.msra.mxu0 0.0
    %2065 = vmatprep.subr.mxu0 0.0
    %2066 = vmatpush1.msra.mxu0 0.0
    %2067 = vmatprep.subr.mxu0 0.0
    %2068 = vmatpush1.msra.mxu0 0.0
    %2069 = vmatprep.subr.mxu0 0.0
    %2070 = vmatpush1.msra.mxu0 0.0
    %2071 = vmatprep.subr.mxu0 0.0
    %2072 = vmatpush1.msra.mxu0 0.0
    %2073 = vmatprep.subr.mxu0 0.0
    %2074 = vmatpush1.msra.mxu0 0.0
    %2075 = vmatprep.subr.mxu0 0.0
    %2076 = vmatpush1.msra.mxu0 0.0
    %2077 = vmatprep.subr.mxu0 0.0
    %2078 = vmatpush1.msra.mxu0 0.0
    %2079 = vmatprep.subr.mxu0 0.0
    %2080 = vmatpush1.msra.mxu0 0.0
    %2081 = vmatprep.subr.mxu0 0.0
    %2082 = vmatpush1.msra.mxu0 0.0
    %2083 = vmatprep.subr.mxu0 0.0
    %2084 = vmatpush1.msra.mxu0 0.0
    %2085 = vmatprep.mubr.f32.mxu0 0.0
    %v2086 = vand.u32 %v1712, 4294901760
    %v2087 = vsub.f32 %v1712, %v2086
    %v2088 = vand.u32 %v2087, 4294901760
    %2089 = vmatmul.mubr.f32.gmra.mrb[0].mxu0 %v2088
    %v2090 = vpop.f32.mrb[0].mxu0
    %v2091 = vadd.f32 %v2004, %v2090
    %v2092 = vpop.f32.mrb[0].mxu0
    %2093 = vmatprep.mubr.f32.mxu0 0.0
    %v2094 = vand.u32 %v1715, 4294901760
    %v2095 = vsub.f32 %v1715, %v2094
    %v2096 = vand.u32 %v2095, 4294901760
    %2097 = vmatmul.mubr.f32.gmra.mrb[0].mxu0 %v2096
    %v2098 = vpop.f32.mrb[0].mxu0
    %v2099 = vadd.f32 %v2011, %v2098
    %v2100 = vpop.f32.mrb[0].mxu0
    %2101 = vdwg.mxu0
    %2102 = vmatprep.subr.mxu0 0.0
    %v2103 = vand.u32 %v37, 4294901760
    %v2104 = vsub.f32 %v37, %v2103
    %v2105 = vand.u32 %v2104, 4294901760
    %2106 = vmatpush1.msra.mxu0 %v2105
    %2107 = vmatprep.subr.mxu0 0.0
    %v2108 = vand.u32 %v38, 4294901760
    %v2109 = vsub.f32 %v38, %v2108
    %v2110 = vand.u32 %v2109, 4294901760
    %2111 = vmatpush1.msra.mxu0 %v2110
    %2112 = vmatprep.subr.mxu0 0.0
    %v2113 = vand.u32 %v39, 4294901760
    %v2114 = vsub.f32 %v39, %v2113
    %v2115 = vand.u32 %v2114, 4294901760
    %2116 = vmatpush1.msra.mxu0 %v2115
    %2117 = vmatprep.subr.mxu0 0.0
    %v2118 = vand.u32 %v40, 4294901760
    %v2119 = vsub.f32 %v40, %v2118
    %v2120 = vand.u32 %v2119, 4294901760
    %2121 = vmatpush1.msra.mxu0 %v2120
    %2122 = vmatprep.subr.mxu0 0.0
    %v2123 = vand.u32 %v41, 4294901760
    %v2124 = vsub.f32 %v41, %v2123
    %v2125 = vand.u32 %v2124, 4294901760
    %2126 = vmatpush1.msra.mxu0 %v2125
    %2127 = vmatprep.subr.mxu0 0.0
    %v2128 = vand.u32 %v42, 4294901760
    %v2129 = vsub.f32 %v42, %v2128
    %v2130 = vand.u32 %v2129, 4294901760
    %2131 = vmatpush1.msra.mxu0 %v2130
    %2132 = vmatprep.subr.mxu0 0.0
    %v2133 = vand.u32 %v43, 4294901760
    %v2134 = vsub.f32 %v43, %v2133
    %v2135 = vand.u32 %v2134, 4294901760
    %2136 = vmatpush1.msra.mxu0 %v2135
    %2137 = vmatprep.subr.mxu0 0.0
    %2138 = vmatpush1.msra.mxu0 0.0
    %2139 = vmatprep.subr.mxu0 0.0
    %2140 = vmatpush1.msra.mxu0 0.0
    %2141 = vmatprep.subr.mxu0 0.0
    %2142 = vmatpush1.msra.mxu0 0.0
    %2143 = vmatprep.subr.mxu0 0.0
    %2144 = vmatpush1.msra.mxu0 0.0
    %2145 = vmatprep.subr.mxu0 0.0
    %2146 = vmatpush1.msra.mxu0 0.0
    %2147 = vmatprep.subr.mxu0 0.0
    %2148 = vmatpush1.msra.mxu0 0.0
    %2149 = vmatprep.subr.mxu0 0.0
    %2150 = vmatpush1.msra.mxu0 0.0
    %2151 = vmatprep.subr.mxu0 0.0
    %2152 = vmatpush1.msra.mxu0 0.0
    %2153 = vmatprep.subr.mxu0 0.0
    %2154 = vmatpush1.msra.mxu0 0.0
    %2155 = vmatprep.subr.mxu0 0.0
    %2156 = vmatpush1.msra.mxu0 0.0
    %2157 = vmatprep.subr.mxu0 0.0
    %2158 = vmatpush1.msra.mxu0 0.0
    %2159 = vmatprep.subr.mxu0 0.0
    %2160 = vmatpush1.msra.mxu0 0.0
    %2161 = vmatprep.subr.mxu0 0.0
    %2162 = vmatpush1.msra.mxu0 0.0
    %2163 = vmatprep.subr.mxu0 0.0
    %2164 = vmatpush1.msra.mxu0 0.0
    %2165 = vmatprep.subr.mxu0 0.0
    %2166 = vmatpush1.msra.mxu0 0.0
    %2167 = vmatprep.subr.mxu0 0.0
    %2168 = vmatpush1.msra.mxu0 0.0
    %2169 = vmatprep.subr.mxu0 0.0
    %2170 = vmatpush1.msra.mxu0 0.0
    %2171 = vmatprep.subr.mxu0 0.0
    %2172 = vmatpush1.msra.mxu0 0.0
    %2173 = vmatprep.subr.mxu0 0.0
    %2174 = vmatpush1.msra.mxu0 0.0
    %2175 = vmatprep.subr.mxu0 0.0
    %2176 = vmatpush1.msra.mxu0 0.0
    %2177 = vmatprep.subr.mxu0 0.0
    %2178 = vmatpush1.msra.mxu0 0.0
    %2179 = vmatprep.subr.mxu0 0.0
    %2180 = vmatpush1.msra.mxu0 0.0
    %2181 = vmatprep.subr.mxu0 0.0
    %2182 = vmatpush1.msra.mxu0 0.0
    %2183 = vmatprep.subr.mxu0 0.0
    %2184 = vmatpush1.msra.mxu0 0.0
    %2185 = vmatprep.subr.mxu0 0.0
    %2186 = vmatpush1.msra.mxu0 0.0
    %2187 = vmatprep.mubr.f32.mxu0 0.0
    %v2188 = vand.u32 %v1712, 4294901760
    %2189 = vmatmul.mubr.f32.gmra.mrb[0].mxu0 %v2188
    %v2190 = vpop.f32.mrb[0].mxu0
    %v2191 = vadd.f32 %v2091, %v2190
    %v2192 = vpop.f32.mrb[0].mxu0
    %2193 = vmatprep.mubr.f32.mxu0 0.0
    %v2194 = vand.u32 %v1715, 4294901760
    %2195 = vmatmul.mubr.f32.gmra.mrb[0].mxu0 %v2194
    %v2196 = vpop.f32.mrb[0].mxu0
    %v2197 = vadd.f32 %v2099, %v2196
    %v2198 = vpop.f32.mrb[0].mxu0
    %2199 = vdwg.mxu0
    %2200 = vmatprep.subr.mxu0 0.0
    %v2201 = vand.u32 %v37, 4294901760
    %2202 = vmatpush1.msra.mxu0 %v2201
    %2203 = vmatprep.subr.mxu0 0.0
    %v2204 = vand.u32 %v38, 4294901760
    %2205 = vmatpush1.msra.mxu0 %v2204
    %2206 = vmatprep.subr.mxu0 0.0
    %v2207 = vand.u32 %v39, 4294901760
    %2208 = vmatpush1.msra.mxu0 %v2207
    %2209 = vmatprep.subr.mxu0 0.0
    %v2210 = vand.u32 %v40, 4294901760
    %2211 = vmatpush1.msra.mxu0 %v2210
    %2212 = vmatprep.subr.mxu0 0.0
    %v2213 = vand.u32 %v41, 4294901760
    %2214 = vmatpush1.msra.mxu0 %v2213
    %2215 = vmatprep.subr.mxu0 0.0
    %v2216 = vand.u32 %v42, 4294901760
    %2217 = vmatpush1.msra.mxu0 %v2216
    %2218 = vmatprep.subr.mxu0 0.0
    %v2219 = vand.u32 %v43, 4294901760
    %2220 = vmatpush1.msra.mxu0 %v2219
    %2221 = vmatprep.subr.mxu0 0.0
    %2222 = vmatpush1.msra.mxu0 0.0
    %2223 = vmatprep.subr.mxu0 0.0
    %2224 = vmatpush1.msra.mxu0 0.0
    %2225 = vmatprep.subr.mxu0 0.0
    %2226 = vmatpush1.msra.mxu0 0.0
    %2227 = vmatprep.subr.mxu0 0.0
    %2228 = vmatpush1.msra.mxu0 0.0
    %2229 = vmatprep.subr.mxu0 0.0
    %2230 = vmatpush1.msra.mxu0 0.0
    %2231 = vmatprep.subr.mxu0 0.0
    %2232 = vmatpush1.msra.mxu0 0.0
    %2233 = vmatprep.subr.mxu0 0.0
    %2234 = vmatpush1.msra.mxu0 0.0
    %2235 = vmatprep.subr.mxu0 0.0
    %2236 = vmatpush1.msra.mxu0 0.0
    %2237 = vmatprep.subr.mxu0 0.0
    %2238 = vmatpush1.msra.mxu0 0.0
    %2239 = vmatprep.subr.mxu0 0.0
    %2240 = vmatpush1.msra.mxu0 0.0
    %2241 = vmatprep.subr.mxu0 0.0
    %2242 = vmatpush1.msra.mxu0 0.0
    %2243 = vmatprep.subr.mxu0 0.0
    %2244 = vmatpush1.msra.mxu0 0.0
    %2245 = vmatprep.subr.mxu0 0.0
    %2246 = vmatpush1.msra.mxu0 0.0
    %2247 = vmatprep.subr.mxu0 0.0
    %2248 = vmatpush1.msra.mxu0 0.0
    %2249 = vmatprep.subr.mxu0 0.0
    %2250 = vmatpush1.msra.mxu0 0.0
    %2251 = vmatprep.subr.mxu0 0.0
    %2252 = vmatpush1.msra.mxu0 0.0
    %2253 = vmatprep.subr.mxu0 0.0
    %2254 = vmatpush1.msra.mxu0 0.0
    %2255 = vmatprep.subr.mxu0 0.0
    %2256 = vmatpush1.msra.mxu0 0.0
    %2257 = vmatprep.subr.mxu0 0.0
    %2258 = vmatpush1.msra.mxu0 0.0
    %2259 = vmatprep.subr.mxu0 0.0
    %2260 = vmatpush1.msra.mxu0 0.0
    %2261 = vmatprep.subr.mxu0 0.0
    %2262 = vmatpush1.msra.mxu0 0.0
    %2263 = vmatprep.subr.mxu0 0.0
    %2264 = vmatpush1.msra.mxu0 0.0
    %2265 = vmatprep.subr.mxu0 0.0
    %2266 = vmatpush1.msra.mxu0 0.0
    %2267 = vmatprep.subr.mxu0 0.0
    %2268 = vmatpush1.msra.mxu0 0.0
    %2269 = vmatprep.subr.mxu0 0.0
    %2270 = vmatpush1.msra.mxu0 0.0
    %2271 = vmatprep.mubr.f32.mxu0 0.0
    %v2272 = vand.u32 %v1712, 4294901760
    %2273 = vmatmul.mubr.f32.gmra.mrb[0].mxu0 %v2272
    %v2274 = vpop.f32.mrb[0].mxu0
    %v2275 = vadd.f32 %v2191, %v2274
    %v2276 = vpop.f32.mrb[0].mxu0
    %2277 = vmatprep.mubr.f32.mxu0 0.0
    %v2278 = vand.u32 %v1715, 4294901760
    %2279 = vmatmul.mubr.f32.gmra.mrb[0].mxu0 %v2278
    %v2280 = vpop.f32.mrb[0].mxu0
    %v2281 = vadd.f32 %v2197, %v2280
    %v2282 = vpop.f32.mrb[0].mxu0
    %2283 = vdwg.mxu0
    %v2285 = vsel %vm593, %v58, 0
    %v2288 = vsel %vm593, %v59, 0
    %2290 = vmatprep.subr.mxu0 0.0
    %v2291 = vand.u32 %v37, 4294901760
    %2292 = vmatpush1.msra.mxu0 %v2291
    %2293 = vmatprep.subr.mxu0 0.0
    %v2294 = vand.u32 %v38, 4294901760
    %2295 = vmatpush1.msra.mxu0 %v2294
    %2296 = vmatprep.subr.mxu0 0.0
    %v2297 = vand.u32 %v39, 4294901760
    %2298 = vmatpush1.msra.mxu0 %v2297
    %2299 = vmatprep.subr.mxu0 0.0
    %v2300 = vand.u32 %v40, 4294901760
    %2301 = vmatpush1.msra.mxu0 %v2300
    %2302 = vmatprep.subr.mxu0 0.0
    %v2303 = vand.u32 %v41, 4294901760
    %2304 = vmatpush1.msra.mxu0 %v2303
    %2305 = vmatprep.subr.mxu0 0.0
    %v2306 = vand.u32 %v42, 4294901760
    %2307 = vmatpush1.msra.mxu0 %v2306
    %2308 = vmatprep.subr.mxu0 0.0
    %v2309 = vand.u32 %v43, 4294901760
    %2310 = vmatpush1.msra.mxu0 %v2309
    %2311 = vmatprep.subr.mxu0 0.0
    %2312 = vmatpush1.msra.mxu0 0.0
    %2313 = vmatprep.subr.mxu0 0.0
    %2314 = vmatpush1.msra.mxu0 0.0
    %2315 = vmatprep.subr.mxu0 0.0
    %2316 = vmatpush1.msra.mxu0 0.0
    %2317 = vmatprep.subr.mxu0 0.0
    %2318 = vmatpush1.msra.mxu0 0.0
    %2319 = vmatprep.subr.mxu0 0.0
    %2320 = vmatpush1.msra.mxu0 0.0
    %2321 = vmatprep.subr.mxu0 0.0
    %2322 = vmatpush1.msra.mxu0 0.0
    %2323 = vmatprep.subr.mxu0 0.0
    %2324 = vmatpush1.msra.mxu0 0.0
    %2325 = vmatprep.subr.mxu0 0.0
    %2326 = vmatpush1.msra.mxu0 0.0
    %2327 = vmatprep.subr.mxu0 0.0
    %2328 = vmatpush1.msra.mxu0 0.0
    %2329 = vmatprep.subr.mxu0 0.0
    %2330 = vmatpush1.msra.mxu0 0.0
    %2331 = vmatprep.subr.mxu0 0.0
    %2332 = vmatpush1.msra.mxu0 0.0
    %2333 = vmatprep.subr.mxu0 0.0
    %2334 = vmatpush1.msra.mxu0 0.0
    %2335 = vmatprep.subr.mxu0 0.0
    %2336 = vmatpush1.msra.mxu0 0.0
    %2337 = vmatprep.subr.mxu0 0.0
    %2338 = vmatpush1.msra.mxu0 0.0
    %2339 = vmatprep.subr.mxu0 0.0
    %2340 = vmatpush1.msra.mxu0 0.0
    %2341 = vmatprep.subr.mxu0 0.0
    %2342 = vmatpush1.msra.mxu0 0.0
    %2343 = vmatprep.subr.mxu0 0.0
    %2344 = vmatpush1.msra.mxu0 0.0
    %2345 = vmatprep.subr.mxu0 0.0
    %2346 = vmatpush1.msra.mxu0 0.0
    %2347 = vmatprep.subr.mxu0 0.0
    %2348 = vmatpush1.msra.mxu0 0.0
    %2349 = vmatprep.subr.mxu0 0.0
    %2350 = vmatpush1.msra.mxu0 0.0
    %2351 = vmatprep.subr.mxu0 0.0
    %2352 = vmatpush1.msra.mxu0 0.0
    %2353 = vmatprep.subr.mxu0 0.0
    %2354 = vmatpush1.msra.mxu0 0.0
    %2355 = vmatprep.subr.mxu0 0.0
    %2356 = vmatpush1.msra.mxu0 0.0
    %2357 = vmatprep.subr.mxu0 0.0
    %2358 = vmatpush1.msra.mxu0 0.0
    %2359 = vmatprep.subr.mxu0 0.0
    %2360 = vmatpush1.msra.mxu0 0.0
    %2361 = vmatprep.mubr.f32.mxu0 0.0
    %v2362 = vand.u32 %v2285, 4294901760
    %v2363 = vsub.f32 %v2285, %v2362
    %v2364 = vand.u32 %v2363, 4294901760
    %v2365 = vsub.f32 %v2363, %v2364
    %v2366 = vand.u32 %v2365, 4294901760
    %2367 = vmatmul.mubr.f32.gmra.mrb[0].mxu0 %v2366
    %v2368 = vpop.f32.mrb[0].mxu0
    %v2369 = vadd.f32 %v572, %v2368
    %v2370 = vpop.f32.mrb[0].mxu0
    %2371 = vmatprep.mubr.f32.mxu0 0.0
    %v2372 = vand.u32 %v2288, 4294901760
    %v2373 = vsub.f32 %v2288, %v2372
    %v2374 = vand.u32 %v2373, 4294901760
    %v2375 = vsub.f32 %v2373, %v2374
    %v2376 = vand.u32 %v2375, 4294901760
    %2377 = vmatmul.mubr.f32.gmra.mrb[0].mxu0 %v2376
    %v2378 = vpop.f32.mrb[0].mxu0
    %v2379 = vadd.f32 %v578, %v2378
    %v2380 = vpop.f32.mrb[0].mxu0
    %2381 = vdwg.mxu0
    %2382 = vmatprep.subr.mxu0 0.0
    %v2383 = vand.u32 %v37, 4294901760
    %v2384 = vsub.f32 %v37, %v2383
    %v2385 = vand.u32 %v2384, 4294901760
    %v2386 = vsub.f32 %v2384, %v2385
    %v2387 = vand.u32 %v2386, 4294901760
    %2388 = vmatpush1.msra.mxu0 %v2387
    %2389 = vmatprep.subr.mxu0 0.0
    %v2390 = vand.u32 %v38, 4294901760
    %v2391 = vsub.f32 %v38, %v2390
    %v2392 = vand.u32 %v2391, 4294901760
    %v2393 = vsub.f32 %v2391, %v2392
    %v2394 = vand.u32 %v2393, 4294901760
    %2395 = vmatpush1.msra.mxu0 %v2394
    %2396 = vmatprep.subr.mxu0 0.0
    %v2397 = vand.u32 %v39, 4294901760
    %v2398 = vsub.f32 %v39, %v2397
    %v2399 = vand.u32 %v2398, 4294901760
    %v2400 = vsub.f32 %v2398, %v2399
    %v2401 = vand.u32 %v2400, 4294901760
    %2402 = vmatpush1.msra.mxu0 %v2401
    %2403 = vmatprep.subr.mxu0 0.0
    %v2404 = vand.u32 %v40, 4294901760
    %v2405 = vsub.f32 %v40, %v2404
    %v2406 = vand.u32 %v2405, 4294901760
    %v2407 = vsub.f32 %v2405, %v2406
    %v2408 = vand.u32 %v2407, 4294901760
    %2409 = vmatpush1.msra.mxu0 %v2408
    %2410 = vmatprep.subr.mxu0 0.0
    %v2411 = vand.u32 %v41, 4294901760
    %v2412 = vsub.f32 %v41, %v2411
    %v2413 = vand.u32 %v2412, 4294901760
    %v2414 = vsub.f32 %v2412, %v2413
    %v2415 = vand.u32 %v2414, 4294901760
    %2416 = vmatpush1.msra.mxu0 %v2415
    %2417 = vmatprep.subr.mxu0 0.0
    %v2418 = vand.u32 %v42, 4294901760
    %v2419 = vsub.f32 %v42, %v2418
    %v2420 = vand.u32 %v2419, 4294901760
    %v2421 = vsub.f32 %v2419, %v2420
    %v2422 = vand.u32 %v2421, 4294901760
    %2423 = vmatpush1.msra.mxu0 %v2422
    %2424 = vmatprep.subr.mxu0 0.0
    %v2425 = vand.u32 %v43, 4294901760
    %v2426 = vsub.f32 %v43, %v2425
    %v2427 = vand.u32 %v2426, 4294901760
    %v2428 = vsub.f32 %v2426, %v2427
    %v2429 = vand.u32 %v2428, 4294901760
    %2430 = vmatpush1.msra.mxu0 %v2429
    %2431 = vmatprep.subr.mxu0 0.0
    %2432 = vmatpush1.msra.mxu0 0.0
    %2433 = vmatprep.subr.mxu0 0.0
    %2434 = vmatpush1.msra.mxu0 0.0
    %2435 = vmatprep.subr.mxu0 0.0
    %2436 = vmatpush1.msra.mxu0 0.0
    %2437 = vmatprep.subr.mxu0 0.0
    %2438 = vmatpush1.msra.mxu0 0.0
    %2439 = vmatprep.subr.mxu0 0.0
    %2440 = vmatpush1.msra.mxu0 0.0
    %2441 = vmatprep.subr.mxu0 0.0
    %2442 = vmatpush1.msra.mxu0 0.0
    %2443 = vmatprep.subr.mxu0 0.0
    %2444 = vmatpush1.msra.mxu0 0.0
    %2445 = vmatprep.subr.mxu0 0.0
    %2446 = vmatpush1.msra.mxu0 0.0
    %2447 = vmatprep.subr.mxu0 0.0
    %2448 = vmatpush1.msra.mxu0 0.0
    %2449 = vmatprep.subr.mxu0 0.0
    %2450 = vmatpush1.msra.mxu0 0.0
    %2451 = vmatprep.subr.mxu0 0.0
    %2452 = vmatpush1.msra.mxu0 0.0
    %2453 = vmatprep.subr.mxu0 0.0
    %2454 = vmatpush1.msra.mxu0 0.0
    %2455 = vmatprep.subr.mxu0 0.0
    %2456 = vmatpush1.msra.mxu0 0.0
    %2457 = vmatprep.subr.mxu0 0.0
    %2458 = vmatpush1.msra.mxu0 0.0
    %2459 = vmatprep.subr.mxu0 0.0
    %2460 = vmatpush1.msra.mxu0 0.0
    %2461 = vmatprep.subr.mxu0 0.0
    %2462 = vmatpush1.msra.mxu0 0.0
    %2463 = vmatprep.subr.mxu0 0.0
    %2464 = vmatpush1.msra.mxu0 0.0
    %2465 = vmatprep.subr.mxu0 0.0
    %2466 = vmatpush1.msra.mxu0 0.0
    %2467 = vmatprep.subr.mxu0 0.0
    %2468 = vmatpush1.msra.mxu0 0.0
    %2469 = vmatprep.subr.mxu0 0.0
    %2470 = vmatpush1.msra.mxu0 0.0
    %2471 = vmatprep.subr.mxu0 0.0
    %2472 = vmatpush1.msra.mxu0 0.0
    %2473 = vmatprep.subr.mxu0 0.0
    %2474 = vmatpush1.msra.mxu0 0.0
    %2475 = vmatprep.subr.mxu0 0.0
    %2476 = vmatpush1.msra.mxu0 0.0
    %2477 = vmatprep.subr.mxu0 0.0
    %2478 = vmatpush1.msra.mxu0 0.0
    %2479 = vmatprep.subr.mxu0 0.0
    %2480 = vmatpush1.msra.mxu0 0.0
    %2481 = vmatprep.mubr.f32.mxu0 0.0
    %v2482 = vand.u32 %v2285, 4294901760
    %2483 = vmatmul.mubr.f32.gmra.mrb[0].mxu0 %v2482
    %v2484 = vpop.f32.mrb[0].mxu0
    %v2485 = vadd.f32 %v2369, %v2484
    %v2486 = vpop.f32.mrb[0].mxu0
    %2487 = vmatprep.mubr.f32.mxu0 0.0
    %v2488 = vand.u32 %v2288, 4294901760
    %2489 = vmatmul.mubr.f32.gmra.mrb[0].mxu0 %v2488
    %v2490 = vpop.f32.mrb[0].mxu0
    %v2491 = vadd.f32 %v2379, %v2490
    %v2492 = vpop.f32.mrb[0].mxu0
    %2493 = vdwg.mxu0
    %2494 = vmatprep.subr.mxu0 0.0
    %v2495 = vand.u32 %v37, 4294901760
    %v2496 = vsub.f32 %v37, %v2495
    %2497 = vmatpush1.msra.mxu0 %v2496
    %2498 = vmatprep.subr.mxu0 0.0
    %v2499 = vand.u32 %v38, 4294901760
    %v2500 = vsub.f32 %v38, %v2499
    %2501 = vmatpush1.msra.mxu0 %v2500
    %2502 = vmatprep.subr.mxu0 0.0
    %v2503 = vand.u32 %v39, 4294901760
    %v2504 = vsub.f32 %v39, %v2503
    %2505 = vmatpush1.msra.mxu0 %v2504
    %2506 = vmatprep.subr.mxu0 0.0
    %v2507 = vand.u32 %v40, 4294901760
    %v2508 = vsub.f32 %v40, %v2507
    %2509 = vmatpush1.msra.mxu0 %v2508
    %2510 = vmatprep.subr.mxu0 0.0
    %v2511 = vand.u32 %v41, 4294901760
    %v2512 = vsub.f32 %v41, %v2511
    %2513 = vmatpush1.msra.mxu0 %v2512
    %2514 = vmatprep.subr.mxu0 0.0
    %v2515 = vand.u32 %v42, 4294901760
    %v2516 = vsub.f32 %v42, %v2515
    %2517 = vmatpush1.msra.mxu0 %v2516
    %2518 = vmatprep.subr.mxu0 0.0
    %v2519 = vand.u32 %v43, 4294901760
    %v2520 = vsub.f32 %v43, %v2519
    %2521 = vmatpush1.msra.mxu0 %v2520
    %2522 = vmatprep.subr.mxu0 0.0
    %2523 = vmatpush1.msra.mxu0 0.0
    %2524 = vmatprep.subr.mxu0 0.0
    %2525 = vmatpush1.msra.mxu0 0.0
    %2526 = vmatprep.subr.mxu0 0.0
    %2527 = vmatpush1.msra.mxu0 0.0
    %2528 = vmatprep.subr.mxu0 0.0
    %2529 = vmatpush1.msra.mxu0 0.0
    %2530 = vmatprep.subr.mxu0 0.0
    %2531 = vmatpush1.msra.mxu0 0.0
    %2532 = vmatprep.subr.mxu0 0.0
    %2533 = vmatpush1.msra.mxu0 0.0
    %2534 = vmatprep.subr.mxu0 0.0
    %2535 = vmatpush1.msra.mxu0 0.0
    %2536 = vmatprep.subr.mxu0 0.0
    %2537 = vmatpush1.msra.mxu0 0.0
    %2538 = vmatprep.subr.mxu0 0.0
    %2539 = vmatpush1.msra.mxu0 0.0
    %2540 = vmatprep.subr.mxu0 0.0
    %2541 = vmatpush1.msra.mxu0 0.0
    %2542 = vmatprep.subr.mxu0 0.0
    %2543 = vmatpush1.msra.mxu0 0.0
    %2544 = vmatprep.subr.mxu0 0.0
    %2545 = vmatpush1.msra.mxu0 0.0
    %2546 = vmatprep.subr.mxu0 0.0
    %2547 = vmatpush1.msra.mxu0 0.0
    %2548 = vmatprep.subr.mxu0 0.0
    %2549 = vmatpush1.msra.mxu0 0.0
    %2550 = vmatprep.subr.mxu0 0.0
    %2551 = vmatpush1.msra.mxu0 0.0
    %2552 = vmatprep.subr.mxu0 0.0
    %2553 = vmatpush1.msra.mxu0 0.0
    %2554 = vmatprep.subr.mxu0 0.0
    %2555 = vmatpush1.msra.mxu0 0.0
    %2556 = vmatprep.subr.mxu0 0.0
    %2557 = vmatpush1.msra.mxu0 0.0
    %2558 = vmatprep.subr.mxu0 0.0
    %2559 = vmatpush1.msra.mxu0 0.0
    %2560 = vmatprep.subr.mxu0 0.0
    %2561 = vmatpush1.msra.mxu0 0.0
    %2562 = vmatprep.subr.mxu0 0.0
    %2563 = vmatpush1.msra.mxu0 0.0
    %2564 = vmatprep.subr.mxu0 0.0
    %2565 = vmatpush1.msra.mxu0 0.0
    %2566 = vmatprep.subr.mxu0 0.0
    %2567 = vmatpush1.msra.mxu0 0.0
    %2568 = vmatprep.subr.mxu0 0.0
    %2569 = vmatpush1.msra.mxu0 0.0
    %2570 = vmatprep.subr.mxu0 0.0
    %2571 = vmatpush1.msra.mxu0 0.0
    %2572 = vmatprep.mubr.f32.mxu0 0.0
    %v2573 = vand.u32 %v2285, 4294901760
    %v2574 = vsub.f32 %v2285, %v2573
    %2575 = vmatmul.mubr.f32.gmra.mrb[0].mxu0 %v2574
    %v2576 = vpop.f32.mrb[0].mxu0
    %v2577 = vadd.f32 %v2485, %v2576
    %v2578 = vpop.f32.mrb[0].mxu0
    %2579 = vmatprep.mubr.f32.mxu0 0.0
    %v2580 = vand.u32 %v2288, 4294901760
    %v2581 = vsub.f32 %v2288, %v2580
    %2582 = vmatmul.mubr.f32.gmra.mrb[0].mxu0 %v2581
    %v2583 = vpop.f32.mrb[0].mxu0
    %v2584 = vadd.f32 %v2491, %v2583
    %v2585 = vpop.f32.mrb[0].mxu0
    %2586 = vdwg.mxu0
    %2587 = vmatprep.subr.mxu0 0.0
    %v2588 = vand.u32 %v37, 4294901760
    %2589 = vmatpush1.msra.mxu0 %v2588
    %2590 = vmatprep.subr.mxu0 0.0
    %v2591 = vand.u32 %v38, 4294901760
    %2592 = vmatpush1.msra.mxu0 %v2591
    %2593 = vmatprep.subr.mxu0 0.0
    %v2594 = vand.u32 %v39, 4294901760
    %2595 = vmatpush1.msra.mxu0 %v2594
    %2596 = vmatprep.subr.mxu0 0.0
    %v2597 = vand.u32 %v40, 4294901760
    %2598 = vmatpush1.msra.mxu0 %v2597
    %2599 = vmatprep.subr.mxu0 0.0
    %v2600 = vand.u32 %v41, 4294901760
    %2601 = vmatpush1.msra.mxu0 %v2600
    %2602 = vmatprep.subr.mxu0 0.0
    %v2603 = vand.u32 %v42, 4294901760
    %2604 = vmatpush1.msra.mxu0 %v2603
    %2605 = vmatprep.subr.mxu0 0.0
    %v2606 = vand.u32 %v43, 4294901760
    %2607 = vmatpush1.msra.mxu0 %v2606
    %2608 = vmatprep.subr.mxu0 0.0
    %2609 = vmatpush1.msra.mxu0 0.0
    %2610 = vmatprep.subr.mxu0 0.0
    %2611 = vmatpush1.msra.mxu0 0.0
    %2612 = vmatprep.subr.mxu0 0.0
    %2613 = vmatpush1.msra.mxu0 0.0
    %2614 = vmatprep.subr.mxu0 0.0
    %2615 = vmatpush1.msra.mxu0 0.0
    %2616 = vmatprep.subr.mxu0 0.0
    %2617 = vmatpush1.msra.mxu0 0.0
    %2618 = vmatprep.subr.mxu0 0.0
    %2619 = vmatpush1.msra.mxu0 0.0
    %2620 = vmatprep.subr.mxu0 0.0
    %2621 = vmatpush1.msra.mxu0 0.0
    %2622 = vmatprep.subr.mxu0 0.0
    %2623 = vmatpush1.msra.mxu0 0.0
    %2624 = vmatprep.subr.mxu0 0.0
    %2625 = vmatpush1.msra.mxu0 0.0
    %2626 = vmatprep.subr.mxu0 0.0
    %2627 = vmatpush1.msra.mxu0 0.0
    %2628 = vmatprep.subr.mxu0 0.0
    %2629 = vmatpush1.msra.mxu0 0.0
    %2630 = vmatprep.subr.mxu0 0.0
    %2631 = vmatpush1.msra.mxu0 0.0
    %2632 = vmatprep.subr.mxu0 0.0
    %2633 = vmatpush1.msra.mxu0 0.0
    %2634 = vmatprep.subr.mxu0 0.0
    %2635 = vmatpush1.msra.mxu0 0.0
    %2636 = vmatprep.subr.mxu0 0.0
    %2637 = vmatpush1.msra.mxu0 0.0
    %2638 = vmatprep.subr.mxu0 0.0
    %2639 = vmatpush1.msra.mxu0 0.0
    %2640 = vmatprep.subr.mxu0 0.0
    %2641 = vmatpush1.msra.mxu0 0.0
    %2642 = vmatprep.subr.mxu0 0.0
    %2643 = vmatpush1.msra.mxu0 0.0
    %2644 = vmatprep.subr.mxu0 0.0
    %2645 = vmatpush1.msra.mxu0 0.0
    %2646 = vmatprep.subr.mxu0 0.0
    %2647 = vmatpush1.msra.mxu0 0.0
    %2648 = vmatprep.subr.mxu0 0.0
    %2649 = vmatpush1.msra.mxu0 0.0
    %2650 = vmatprep.subr.mxu0 0.0
    %2651 = vmatpush1.msra.mxu0 0.0
    %2652 = vmatprep.subr.mxu0 0.0
    %2653 = vmatpush1.msra.mxu0 0.0
    %2654 = vmatprep.subr.mxu0 0.0
    %2655 = vmatpush1.msra.mxu0 0.0
    %2656 = vmatprep.subr.mxu0 0.0
    %2657 = vmatpush1.msra.mxu0 0.0
    %2658 = vmatprep.mubr.f32.mxu0 0.0
    %v2659 = vand.u32 %v2285, 4294901760
    %v2660 = vsub.f32 %v2285, %v2659
    %v2661 = vand.u32 %v2660, 4294901760
    %2662 = vmatmul.mubr.f32.gmra.mrb[0].mxu0 %v2661
    %v2663 = vpop.f32.mrb[0].mxu0
    %v2664 = vadd.f32 %v2577, %v2663
    %v2665 = vpop.f32.mrb[0].mxu0
    %2666 = vmatprep.mubr.f32.mxu0 0.0
    %v2667 = vand.u32 %v2288, 4294901760
    %v2668 = vsub.f32 %v2288, %v2667
    %v2669 = vand.u32 %v2668, 4294901760
    %2670 = vmatmul.mubr.f32.gmra.mrb[0].mxu0 %v2669
    %v2671 = vpop.f32.mrb[0].mxu0
    %v2672 = vadd.f32 %v2584, %v2671
    %v2673 = vpop.f32.mrb[0].mxu0
    %2674 = vdwg.mxu0
    %2675 = vmatprep.subr.mxu0 0.0
    %v2676 = vand.u32 %v37, 4294901760
    %v2677 = vsub.f32 %v37, %v2676
    %v2678 = vand.u32 %v2677, 4294901760
    %2679 = vmatpush1.msra.mxu0 %v2678
    %2680 = vmatprep.subr.mxu0 0.0
    %v2681 = vand.u32 %v38, 4294901760
    %v2682 = vsub.f32 %v38, %v2681
    %v2683 = vand.u32 %v2682, 4294901760
    %2684 = vmatpush1.msra.mxu0 %v2683
    %2685 = vmatprep.subr.mxu0 0.0
    %v2686 = vand.u32 %v39, 4294901760
    %v2687 = vsub.f32 %v39, %v2686
    %v2688 = vand.u32 %v2687, 4294901760
    %2689 = vmatpush1.msra.mxu0 %v2688
    %2690 = vmatprep.subr.mxu0 0.0
    %v2691 = vand.u32 %v40, 4294901760
    %v2692 = vsub.f32 %v40, %v2691
    %v2693 = vand.u32 %v2692, 4294901760
    %2694 = vmatpush1.msra.mxu0 %v2693
    %2695 = vmatprep.subr.mxu0 0.0
    %v2696 = vand.u32 %v41, 4294901760
    %v2697 = vsub.f32 %v41, %v2696
    %v2698 = vand.u32 %v2697, 4294901760
    %2699 = vmatpush1.msra.mxu0 %v2698
    %2700 = vmatprep.subr.mxu0 0.0
    %v2701 = vand.u32 %v42, 4294901760
    %v2702 = vsub.f32 %v42, %v2701
    %v2703 = vand.u32 %v2702, 4294901760
    %2704 = vmatpush1.msra.mxu0 %v2703
    %2705 = vmatprep.subr.mxu0 0.0
    %v2706 = vand.u32 %v43, 4294901760
    %v2707 = vsub.f32 %v43, %v2706
    %v2708 = vand.u32 %v2707, 4294901760
    %2709 = vmatpush1.msra.mxu0 %v2708
    %2710 = vmatprep.subr.mxu0 0.0
    %2711 = vmatpush1.msra.mxu0 0.0
    %2712 = vmatprep.subr.mxu0 0.0
    %2713 = vmatpush1.msra.mxu0 0.0
    %2714 = vmatprep.subr.mxu0 0.0
    %2715 = vmatpush1.msra.mxu0 0.0
    %2716 = vmatprep.subr.mxu0 0.0
    %2717 = vmatpush1.msra.mxu0 0.0
    %2718 = vmatprep.subr.mxu0 0.0
    %2719 = vmatpush1.msra.mxu0 0.0
    %2720 = vmatprep.subr.mxu0 0.0
    %2721 = vmatpush1.msra.mxu0 0.0
    %2722 = vmatprep.subr.mxu0 0.0
    %2723 = vmatpush1.msra.mxu0 0.0
    %2724 = vmatprep.subr.mxu0 0.0
    %2725 = vmatpush1.msra.mxu0 0.0
    %2726 = vmatprep.subr.mxu0 0.0
    %2727 = vmatpush1.msra.mxu0 0.0
    %2728 = vmatprep.subr.mxu0 0.0
    %2729 = vmatpush1.msra.mxu0 0.0
    %2730 = vmatprep.subr.mxu0 0.0
    %2731 = vmatpush1.msra.mxu0 0.0
    %2732 = vmatprep.subr.mxu0 0.0
    %2733 = vmatpush1.msra.mxu0 0.0
    %2734 = vmatprep.subr.mxu0 0.0
    %2735 = vmatpush1.msra.mxu0 0.0
    %2736 = vmatprep.subr.mxu0 0.0
    %2737 = vmatpush1.msra.mxu0 0.0
    %2738 = vmatprep.subr.mxu0 0.0
    %2739 = vmatpush1.msra.mxu0 0.0
    %2740 = vmatprep.subr.mxu0 0.0
    %2741 = vmatpush1.msra.mxu0 0.0
    %2742 = vmatprep.subr.mxu0 0.0
    %2743 = vmatpush1.msra.mxu0 0.0
    %2744 = vmatprep.subr.mxu0 0.0
    %2745 = vmatpush1.msra.mxu0 0.0
    %2746 = vmatprep.subr.mxu0 0.0
    %2747 = vmatpush1.msra.mxu0 0.0
    %2748 = vmatprep.subr.mxu0 0.0
    %2749 = vmatpush1.msra.mxu0 0.0
    %2750 = vmatprep.subr.mxu0 0.0
    %2751 = vmatpush1.msra.mxu0 0.0
    %2752 = vmatprep.subr.mxu0 0.0
    %2753 = vmatpush1.msra.mxu0 0.0
    %2754 = vmatprep.subr.mxu0 0.0
    %2755 = vmatpush1.msra.mxu0 0.0
    %2756 = vmatprep.subr.mxu0 0.0
    %2757 = vmatpush1.msra.mxu0 0.0
    %2758 = vmatprep.subr.mxu0 0.0
    %2759 = vmatpush1.msra.mxu0 0.0
    %2760 = vmatprep.mubr.f32.mxu0 0.0
    %v2761 = vand.u32 %v2285, 4294901760
    %2762 = vmatmul.mubr.f32.gmra.mrb[0].mxu0 %v2761
    %v2763 = vpop.f32.mrb[0].mxu0
    %v2764 = vadd.f32 %v2664, %v2763
    %v2765 = vpop.f32.mrb[0].mxu0
    %2766 = vmatprep.mubr.f32.mxu0 0.0
    %v2767 = vand.u32 %v2288, 4294901760
    %2768 = vmatmul.mubr.f32.gmra.mrb[0].mxu0 %v2767
    %v2769 = vpop.f32.mrb[0].mxu0
    %v2770 = vadd.f32 %v2672, %v2769
    %v2771 = vpop.f32.mrb[0].mxu0
    %2772 = vdwg.mxu0
    %2773 = vmatprep.subr.mxu0 0.0
    %v2774 = vand.u32 %v37, 4294901760
    %2775 = vmatpush1.msra.mxu0 %v2774
    %2776 = vmatprep.subr.mxu0 0.0
    %v2777 = vand.u32 %v38, 4294901760
    %2778 = vmatpush1.msra.mxu0 %v2777
    %2779 = vmatprep.subr.mxu0 0.0
    %v2780 = vand.u32 %v39, 4294901760
    %2781 = vmatpush1.msra.mxu0 %v2780
    %2782 = vmatprep.subr.mxu0 0.0
    %v2783 = vand.u32 %v40, 4294901760
    %2784 = vmatpush1.msra.mxu0 %v2783
    %2785 = vmatprep.subr.mxu0 0.0
    %v2786 = vand.u32 %v41, 4294901760
    %2787 = vmatpush1.msra.mxu0 %v2786
    %2788 = vmatprep.subr.mxu0 0.0
    %v2789 = vand.u32 %v42, 4294901760
    %2790 = vmatpush1.msra.mxu0 %v2789
    %2791 = vmatprep.subr.mxu0 0.0
    %v2792 = vand.u32 %v43, 4294901760
    %2793 = vmatpush1.msra.mxu0 %v2792
    %2794 = vmatprep.subr.mxu0 0.0
    %2795 = vmatpush1.msra.mxu0 0.0
    %2796 = vmatprep.subr.mxu0 0.0
    %2797 = vmatpush1.msra.mxu0 0.0
    %2798 = vmatprep.subr.mxu0 0.0
    %2799 = vmatpush1.msra.mxu0 0.0
    %2800 = vmatprep.subr.mxu0 0.0
    %2801 = vmatpush1.msra.mxu0 0.0
    %2802 = vmatprep.subr.mxu0 0.0
    %2803 = vmatpush1.msra.mxu0 0.0
    %2804 = vmatprep.subr.mxu0 0.0
    %2805 = vmatpush1.msra.mxu0 0.0
    %2806 = vmatprep.subr.mxu0 0.0
    %2807 = vmatpush1.msra.mxu0 0.0
    %2808 = vmatprep.subr.mxu0 0.0
    %2809 = vmatpush1.msra.mxu0 0.0
    %2810 = vmatprep.subr.mxu0 0.0
    %2811 = vmatpush1.msra.mxu0 0.0
    %2812 = vmatprep.subr.mxu0 0.0
    %2813 = vmatpush1.msra.mxu0 0.0
    %2814 = vmatprep.subr.mxu0 0.0
    %2815 = vmatpush1.msra.mxu0 0.0
    %2816 = vmatprep.subr.mxu0 0.0
    %2817 = vmatpush1.msra.mxu0 0.0
    %2818 = vmatprep.subr.mxu0 0.0
    %2819 = vmatpush1.msra.mxu0 0.0
    %2820 = vmatprep.subr.mxu0 0.0
    %2821 = vmatpush1.msra.mxu0 0.0
    %2822 = vmatprep.subr.mxu0 0.0
    %2823 = vmatpush1.msra.mxu0 0.0
    %2824 = vmatprep.subr.mxu0 0.0
    %2825 = vmatpush1.msra.mxu0 0.0
    %2826 = vmatprep.subr.mxu0 0.0
    %2827 = vmatpush1.msra.mxu0 0.0
    %2828 = vmatprep.subr.mxu0 0.0
    %2829 = vmatpush1.msra.mxu0 0.0
    %2830 = vmatprep.subr.mxu0 0.0
    %2831 = vmatpush1.msra.mxu0 0.0
    %2832 = vmatprep.subr.mxu0 0.0
    %2833 = vmatpush1.msra.mxu0 0.0
    %2834 = vmatprep.subr.mxu0 0.0
    %2835 = vmatpush1.msra.mxu0 0.0
    %2836 = vmatprep.subr.mxu0 0.0
    %2837 = vmatpush1.msra.mxu0 0.0
    %2838 = vmatprep.subr.mxu0 0.0
    %2839 = vmatpush1.msra.mxu0 0.0
    %2840 = vmatprep.subr.mxu0 0.0
    %2841 = vmatpush1.msra.mxu0 0.0
    %2842 = vmatprep.subr.mxu0 0.0
    %2843 = vmatpush1.msra.mxu0 0.0
    %2844 = vmatprep.mubr.f32.mxu0 0.0
    %v2845 = vand.u32 %v2285, 4294901760
    %2846 = vmatmul.mubr.f32.gmra.mrb[0].mxu0 %v2845
    %v2847 = vpop.f32.mrb[0].mxu0
    %v2848 = vadd.f32 %v2764, %v2847
    %v2849 = vpop.f32.mrb[0].mxu0
    %2850 = vmatprep.mubr.f32.mxu0 0.0
    %v2851 = vand.u32 %v2288, 4294901760
    %2852 = vmatmul.mubr.f32.gmra.mrb[0].mxu0 %v2851
    %v2853 = vpop.f32.mrb[0].mxu0
    %v2854 = vadd.f32 %v2770, %v2853
    %v2855 = vpop.f32.mrb[0].mxu0
    %2856 = vdwg.mxu0
    %v2857 = vsub.f32 %v2848, %v1158
    %v2858 = vsub.f32 %v2854, %v1164
    %v2859 = vand.u32 2147483647, %v2857
    %v2860 = vand.u32 2147483647, %v2858
    %2861 = vadd.xlane.f32.xlu0 %v2859
    %v2862 = vpop.xlane.xlu0 %2861
    %2863 = vadd.xlane.f32.xlu0 %v2860
    %v2864 = vpop.xlane.xlu0 %2863
    %v2866 = vsel %vm593, %v1177, 0
    %v2869 = vsel %vm593, %v1178, 0
    %2871 = vmatprep.subr.mxu0 0.0
    %v2872 = vand.u32 %v37, 4294901760
    %2873 = vmatpush1.msra.mxu0 %v2872
    %2874 = vmatprep.subr.mxu0 0.0
    %v2875 = vand.u32 %v38, 4294901760
    %2876 = vmatpush1.msra.mxu0 %v2875
    %2877 = vmatprep.subr.mxu0 0.0
    %v2878 = vand.u32 %v39, 4294901760
    %2879 = vmatpush1.msra.mxu0 %v2878
    %2880 = vmatprep.subr.mxu0 0.0
    %v2881 = vand.u32 %v40, 4294901760
    %2882 = vmatpush1.msra.mxu0 %v2881
    %2883 = vmatprep.subr.mxu0 0.0
    %v2884 = vand.u32 %v41, 4294901760
    %2885 = vmatpush1.msra.mxu0 %v2884
    %2886 = vmatprep.subr.mxu0 0.0
    %v2887 = vand.u32 %v42, 4294901760
    %2888 = vmatpush1.msra.mxu0 %v2887
    %2889 = vmatprep.subr.mxu0 0.0
    %v2890 = vand.u32 %v43, 4294901760
    %2891 = vmatpush1.msra.mxu0 %v2890
    %2892 = vmatprep.subr.mxu0 0.0
    %2893 = vmatpush1.msra.mxu0 0.0
    %2894 = vmatprep.subr.mxu0 0.0
    %2895 = vmatpush1.msra.mxu0 0.0
    %2896 = vmatprep.subr.mxu0 0.0
    %2897 = vmatpush1.msra.mxu0 0.0
    %2898 = vmatprep.subr.mxu0 0.0
    %2899 = vmatpush1.msra.mxu0 0.0
    %2900 = vmatprep.subr.mxu0 0.0
    %2901 = vmatpush1.msra.mxu0 0.0
    %2902 = vmatprep.subr.mxu0 0.0
    %2903 = vmatpush1.msra.mxu0 0.0
    %2904 = vmatprep.subr.mxu0 0.0
    %2905 = vmatpush1.msra.mxu0 0.0
    %2906 = vmatprep.subr.mxu0 0.0
    %2907 = vmatpush1.msra.mxu0 0.0
    %2908 = vmatprep.subr.mxu0 0.0
    %2909 = vmatpush1.msra.mxu0 0.0
    %2910 = vmatprep.subr.mxu0 0.0
    %2911 = vmatpush1.msra.mxu0 0.0
    %2912 = vmatprep.subr.mxu0 0.0
    %2913 = vmatpush1.msra.mxu0 0.0
    %2914 = vmatprep.subr.mxu0 0.0
    %2915 = vmatpush1.msra.mxu0 0.0
    %2916 = vmatprep.subr.mxu0 0.0
    %2917 = vmatpush1.msra.mxu0 0.0
    %2918 = vmatprep.subr.mxu0 0.0
    %2919 = vmatpush1.msra.mxu0 0.0
    %2920 = vmatprep.subr.mxu0 0.0
    %2921 = vmatpush1.msra.mxu0 0.0
    %2922 = vmatprep.subr.mxu0 0.0
    %2923 = vmatpush1.msra.mxu0 0.0
    %2924 = vmatprep.subr.mxu0 0.0
    %2925 = vmatpush1.msra.mxu0 0.0
    %2926 = vmatprep.subr.mxu0 0.0
    %2927 = vmatpush1.msra.mxu0 0.0
    %2928 = vmatprep.subr.mxu0 0.0
    %2929 = vmatpush1.msra.mxu0 0.0
    %2930 = vmatprep.subr.mxu0 0.0
    %2931 = vmatpush1.msra.mxu0 0.0
    %2932 = vmatprep.subr.mxu0 0.0
    %2933 = vmatpush1.msra.mxu0 0.0
    %2934 = vmatprep.subr.mxu0 0.0
    %2935 = vmatpush1.msra.mxu0 0.0
    %2936 = vmatprep.subr.mxu0 0.0
    %2937 = vmatpush1.msra.mxu0 0.0
    %2938 = vmatprep.subr.mxu0 0.0
    %2939 = vmatpush1.msra.mxu0 0.0
    %2940 = vmatprep.subr.mxu0 0.0
    %2941 = vmatpush1.msra.mxu0 0.0
    %2942 = vmatprep.mubr.f32.mxu0 0.0
    %v2943 = vand.u32 %v2866, 4294901760
    %v2944 = vsub.f32 %v2866, %v2943
    %v2945 = vand.u32 %v2944, 4294901760
    %v2946 = vsub.f32 %v2944, %v2945
    %v2947 = vand.u32 %v2946, 4294901760
    %2948 = vmatmul.mubr.f32.gmra.mrb[0].mxu0 %v2947
    %v2949 = vpop.f32.mrb[0].mxu0
    %v2950 = vadd.f32 %v1690, %v2949
    %v2951 = vpop.f32.mrb[0].mxu0
    %2952 = vmatprep.mubr.f32.mxu0 0.0
    %v2953 = vand.u32 %v2869, 4294901760
    %v2954 = vsub.f32 %v2869, %v2953
    %v2955 = vand.u32 %v2954, 4294901760
    %v2956 = vsub.f32 %v2954, %v2955
    %v2957 = vand.u32 %v2956, 4294901760
    %2958 = vmatmul.mubr.f32.gmra.mrb[0].mxu0 %v2957
    %v2959 = vpop.f32.mrb[0].mxu0
    %v2960 = vadd.f32 %v1696, %v2959
    %v2961 = vpop.f32.mrb[0].mxu0
    %2962 = vdwg.mxu0
    %2963 = vmatprep.subr.mxu0 0.0
    %v2964 = vand.u32 %v37, 4294901760
    %v2965 = vsub.f32 %v37, %v2964
    %v2966 = vand.u32 %v2965, 4294901760
    %v2967 = vsub.f32 %v2965, %v2966
    %v2968 = vand.u32 %v2967, 4294901760
    %2969 = vmatpush1.msra.mxu0 %v2968
    %2970 = vmatprep.subr.mxu0 0.0
    %v2971 = vand.u32 %v38, 4294901760
    %v2972 = vsub.f32 %v38, %v2971
    %v2973 = vand.u32 %v2972, 4294901760
    %v2974 = vsub.f32 %v2972, %v2973
    %v2975 = vand.u32 %v2974, 4294901760
    %2976 = vmatpush1.msra.mxu0 %v2975
    %2977 = vmatprep.subr.mxu0 0.0
    %v2978 = vand.u32 %v39, 4294901760
    %v2979 = vsub.f32 %v39, %v2978
    %v2980 = vand.u32 %v2979, 4294901760
    %v2981 = vsub.f32 %v2979, %v2980
    %v2982 = vand.u32 %v2981, 4294901760
    %2983 = vmatpush1.msra.mxu0 %v2982
    %2984 = vmatprep.subr.mxu0 0.0
    %v2985 = vand.u32 %v40, 4294901760
    %v2986 = vsub.f32 %v40, %v2985
    %v2987 = vand.u32 %v2986, 4294901760
    %v2988 = vsub.f32 %v2986, %v2987
    %v2989 = vand.u32 %v2988, 4294901760
    %2990 = vmatpush1.msra.mxu0 %v2989
    %2991 = vmatprep.subr.mxu0 0.0
    %v2992 = vand.u32 %v41, 4294901760
    %v2993 = vsub.f32 %v41, %v2992
    %v2994 = vand.u32 %v2993, 4294901760
    %v2995 = vsub.f32 %v2993, %v2994
    %v2996 = vand.u32 %v2995, 4294901760
    %2997 = vmatpush1.msra.mxu0 %v2996
    %2998 = vmatprep.subr.mxu0 0.0
    %v2999 = vand.u32 %v42, 4294901760
    %v3000 = vsub.f32 %v42, %v2999
    %v3001 = vand.u32 %v3000, 4294901760
    %v3002 = vsub.f32 %v3000, %v3001
    %v3003 = vand.u32 %v3002, 4294901760
    %3004 = vmatpush1.msra.mxu0 %v3003
    %3005 = vmatprep.subr.mxu0 0.0
    %v3006 = vand.u32 %v43, 4294901760
    %v3007 = vsub.f32 %v43, %v3006
    %v3008 = vand.u32 %v3007, 4294901760
    %v3009 = vsub.f32 %v3007, %v3008
    %v3010 = vand.u32 %v3009, 4294901760
    %3011 = vmatpush1.msra.mxu0 %v3010
    %3012 = vmatprep.subr.mxu0 0.0
    %3013 = vmatpush1.msra.mxu0 0.0
    %3014 = vmatprep.subr.mxu0 0.0
    %3015 = vmatpush1.msra.mxu0 0.0
    %3016 = vmatprep.subr.mxu0 0.0
    %3017 = vmatpush1.msra.mxu0 0.0
    %3018 = vmatprep.subr.mxu0 0.0
    %3019 = vmatpush1.msra.mxu0 0.0
    %3020 = vmatprep.subr.mxu0 0.0
    %3021 = vmatpush1.msra.mxu0 0.0
    %3022 = vmatprep.subr.mxu0 0.0
    %3023 = vmatpush1.msra.mxu0 0.0
    %3024 = vmatprep.subr.mxu0 0.0
    %3025 = vmatpush1.msra.mxu0 0.0
    %3026 = vmatprep.subr.mxu0 0.0
    %3027 = vmatpush1.msra.mxu0 0.0
    %3028 = vmatprep.subr.mxu0 0.0
    %3029 = vmatpush1.msra.mxu0 0.0
    %3030 = vmatprep.subr.mxu0 0.0
    %3031 = vmatpush1.msra.mxu0 0.0
    %3032 = vmatprep.subr.mxu0 0.0
    %3033 = vmatpush1.msra.mxu0 0.0
    %3034 = vmatprep.subr.mxu0 0.0
    %3035 = vmatpush1.msra.mxu0 0.0
    %3036 = vmatprep.subr.mxu0 0.0
    %3037 = vmatpush1.msra.mxu0 0.0
    %3038 = vmatprep.subr.mxu0 0.0
    %3039 = vmatpush1.msra.mxu0 0.0
    %3040 = vmatprep.subr.mxu0 0.0
    %3041 = vmatpush1.msra.mxu0 0.0
    %3042 = vmatprep.subr.mxu0 0.0
    %3043 = vmatpush1.msra.mxu0 0.0
    %3044 = vmatprep.subr.mxu0 0.0
    %3045 = vmatpush1.msra.mxu0 0.0
    %3046 = vmatprep.subr.mxu0 0.0
    %3047 = vmatpush1.msra.mxu0 0.0
    %3048 = vmatprep.subr.mxu0 0.0
    %3049 = vmatpush1.msra.mxu0 0.0
    %3050 = vmatprep.subr.mxu0 0.0
    %3051 = vmatpush1.msra.mxu0 0.0
    %3052 = vmatprep.subr.mxu0 0.0
    %3053 = vmatpush1.msra.mxu0 0.0
    %3054 = vmatprep.subr.mxu0 0.0
    %3055 = vmatpush1.msra.mxu0 0.0
    %3056 = vmatprep.subr.mxu0 0.0
    %3057 = vmatpush1.msra.mxu0 0.0
    %3058 = vmatprep.subr.mxu0 0.0
    %3059 = vmatpush1.msra.mxu0 0.0
    %3060 = vmatprep.subr.mxu0 0.0
    %3061 = vmatpush1.msra.mxu0 0.0
    %3062 = vmatprep.mubr.f32.mxu0 0.0
    %v3063 = vand.u32 %v2866, 4294901760
    %3064 = vmatmul.mubr.f32.gmra.mrb[0].mxu0 %v3063
    %v3065 = vpop.f32.mrb[0].mxu0
    %v3066 = vadd.f32 %v2950, %v3065
    %v3067 = vpop.f32.mrb[0].mxu0
    %3068 = vmatprep.mubr.f32.mxu0 0.0
    %v3069 = vand.u32 %v2869, 4294901760
    %3070 = vmatmul.mubr.f32.gmra.mrb[0].mxu0 %v3069
    %v3071 = vpop.f32.mrb[0].mxu0
    %v3072 = vadd.f32 %v2960, %v3071
    %v3073 = vpop.f32.mrb[0].mxu0
    %3074 = vdwg.mxu0
    %3075 = vmatprep.subr.mxu0 0.0
    %v3076 = vand.u32 %v37, 4294901760
    %v3077 = vsub.f32 %v37, %v3076
    %3078 = vmatpush1.msra.mxu0 %v3077
    %3079 = vmatprep.subr.mxu0 0.0
    %v3080 = vand.u32 %v38, 4294901760
    %v3081 = vsub.f32 %v38, %v3080
    %3082 = vmatpush1.msra.mxu0 %v3081
    %3083 = vmatprep.subr.mxu0 0.0
    %v3084 = vand.u32 %v39, 4294901760
    %v3085 = vsub.f32 %v39, %v3084
    %3086 = vmatpush1.msra.mxu0 %v3085
    %3087 = vmatprep.subr.mxu0 0.0
    %v3088 = vand.u32 %v40, 4294901760
    %v3089 = vsub.f32 %v40, %v3088
    %3090 = vmatpush1.msra.mxu0 %v3089
    %3091 = vmatprep.subr.mxu0 0.0
    %v3092 = vand.u32 %v41, 4294901760
    %v3093 = vsub.f32 %v41, %v3092
    %3094 = vmatpush1.msra.mxu0 %v3093
    %3095 = vmatprep.subr.mxu0 0.0
    %v3096 = vand.u32 %v42, 4294901760
    %v3097 = vsub.f32 %v42, %v3096
    %3098 = vmatpush1.msra.mxu0 %v3097
    %3099 = vmatprep.subr.mxu0 0.0
    %v3100 = vand.u32 %v43, 4294901760
    %v3101 = vsub.f32 %v43, %v3100
    %3102 = vmatpush1.msra.mxu0 %v3101
    %3103 = vmatprep.subr.mxu0 0.0
    %3104 = vmatpush1.msra.mxu0 0.0
    %3105 = vmatprep.subr.mxu0 0.0
    %3106 = vmatpush1.msra.mxu0 0.0
    %3107 = vmatprep.subr.mxu0 0.0
    %3108 = vmatpush1.msra.mxu0 0.0
    %3109 = vmatprep.subr.mxu0 0.0
    %3110 = vmatpush1.msra.mxu0 0.0
    %3111 = vmatprep.subr.mxu0 0.0
    %3112 = vmatpush1.msra.mxu0 0.0
    %3113 = vmatprep.subr.mxu0 0.0
    %3114 = vmatpush1.msra.mxu0 0.0
    %3115 = vmatprep.subr.mxu0 0.0
    %3116 = vmatpush1.msra.mxu0 0.0
    %3117 = vmatprep.subr.mxu0 0.0
    %3118 = vmatpush1.msra.mxu0 0.0
    %3119 = vmatprep.subr.mxu0 0.0
    %3120 = vmatpush1.msra.mxu0 0.0
    %3121 = vmatprep.subr.mxu0 0.0
    %3122 = vmatpush1.msra.mxu0 0.0
    %3123 = vmatprep.subr.mxu0 0.0
    %3124 = vmatpush1.msra.mxu0 0.0
    %3125 = vmatprep.subr.mxu0 0.0
    %3126 = vmatpush1.msra.mxu0 0.0
    %3127 = vmatprep.subr.mxu0 0.0
    %3128 = vmatpush1.msra.mxu0 0.0
    %3129 = vmatprep.subr.mxu0 0.0
    %3130 = vmatpush1.msra.mxu0 0.0
    %3131 = vmatprep.subr.mxu0 0.0
    %3132 = vmatpush1.msra.mxu0 0.0
    %3133 = vmatprep.subr.mxu0 0.0
    %3134 = vmatpush1.msra.mxu0 0.0
    %3135 = vmatprep.subr.mxu0 0.0
    %3136 = vmatpush1.msra.mxu0 0.0
    %3137 = vmatprep.subr.mxu0 0.0
    %3138 = vmatpush1.msra.mxu0 0.0
    %3139 = vmatprep.subr.mxu0 0.0
    %3140 = vmatpush1.msra.mxu0 0.0
    %3141 = vmatprep.subr.mxu0 0.0
    %3142 = vmatpush1.msra.mxu0 0.0
    %3143 = vmatprep.subr.mxu0 0.0
    %3144 = vmatpush1.msra.mxu0 0.0
    %3145 = vmatprep.subr.mxu0 0.0
    %3146 = vmatpush1.msra.mxu0 0.0
    %3147 = vmatprep.subr.mxu0 0.0
    %3148 = vmatpush1.msra.mxu0 0.0
    %3149 = vmatprep.subr.mxu0 0.0
    %3150 = vmatpush1.msra.mxu0 0.0
    %3151 = vmatprep.subr.mxu0 0.0
    %3152 = vmatpush1.msra.mxu0 0.0
    %3153 = vmatprep.mubr.f32.mxu0 0.0
    %v3154 = vand.u32 %v2866, 4294901760
    %v3155 = vsub.f32 %v2866, %v3154
    %3156 = vmatmul.mubr.f32.gmra.mrb[0].mxu0 %v3155
    %v3157 = vpop.f32.mrb[0].mxu0
    %v3158 = vadd.f32 %v3066, %v3157
    %v3159 = vpop.f32.mrb[0].mxu0
    %3160 = vmatprep.mubr.f32.mxu0 0.0
    %v3161 = vand.u32 %v2869, 4294901760
    %v3162 = vsub.f32 %v2869, %v3161
    %3163 = vmatmul.mubr.f32.gmra.mrb[0].mxu0 %v3162
    %v3164 = vpop.f32.mrb[0].mxu0
    %v3165 = vadd.f32 %v3072, %v3164
    %v3166 = vpop.f32.mrb[0].mxu0
    %3167 = vdwg.mxu0
    %3168 = vmatprep.subr.mxu0 0.0
    %v3169 = vand.u32 %v37, 4294901760
    %3170 = vmatpush1.msra.mxu0 %v3169
    %3171 = vmatprep.subr.mxu0 0.0
    %v3172 = vand.u32 %v38, 4294901760
    %3173 = vmatpush1.msra.mxu0 %v3172
    %3174 = vmatprep.subr.mxu0 0.0
    %v3175 = vand.u32 %v39, 4294901760
    %3176 = vmatpush1.msra.mxu0 %v3175
    %3177 = vmatprep.subr.mxu0 0.0
    %v3178 = vand.u32 %v40, 4294901760
    %3179 = vmatpush1.msra.mxu0 %v3178
    %3180 = vmatprep.subr.mxu0 0.0
    %v3181 = vand.u32 %v41, 4294901760
    %3182 = vmatpush1.msra.mxu0 %v3181
    %3183 = vmatprep.subr.mxu0 0.0
    %v3184 = vand.u32 %v42, 4294901760
    %3185 = vmatpush1.msra.mxu0 %v3184
    %3186 = vmatprep.subr.mxu0 0.0
    %v3187 = vand.u32 %v43, 4294901760
    %3188 = vmatpush1.msra.mxu0 %v3187
    %3189 = vmatprep.subr.mxu0 0.0
    %3190 = vmatpush1.msra.mxu0 0.0
    %3191 = vmatprep.subr.mxu0 0.0
    %3192 = vmatpush1.msra.mxu0 0.0
    %3193 = vmatprep.subr.mxu0 0.0
    %3194 = vmatpush1.msra.mxu0 0.0
    %3195 = vmatprep.subr.mxu0 0.0
    %3196 = vmatpush1.msra.mxu0 0.0
    %3197 = vmatprep.subr.mxu0 0.0
    %3198 = vmatpush1.msra.mxu0 0.0
    %3199 = vmatprep.subr.mxu0 0.0
    %3200 = vmatpush1.msra.mxu0 0.0
    %3201 = vmatprep.subr.mxu0 0.0
    %3202 = vmatpush1.msra.mxu0 0.0
    %3203 = vmatprep.subr.mxu0 0.0
    %3204 = vmatpush1.msra.mxu0 0.0
    %3205 = vmatprep.subr.mxu0 0.0
    %3206 = vmatpush1.msra.mxu0 0.0
    %3207 = vmatprep.subr.mxu0 0.0
    %3208 = vmatpush1.msra.mxu0 0.0
    %3209 = vmatprep.subr.mxu0 0.0
    %3210 = vmatpush1.msra.mxu0 0.0
    %3211 = vmatprep.subr.mxu0 0.0
    %3212 = vmatpush1.msra.mxu0 0.0
    %3213 = vmatprep.subr.mxu0 0.0
    %3214 = vmatpush1.msra.mxu0 0.0
    %3215 = vmatprep.subr.mxu0 0.0
    %3216 = vmatpush1.msra.mxu0 0.0
    %3217 = vmatprep.subr.mxu0 0.0
    %3218 = vmatpush1.msra.mxu0 0.0
    %3219 = vmatprep.subr.mxu0 0.0
    %3220 = vmatpush1.msra.mxu0 0.0
    %3221 = vmatprep.subr.mxu0 0.0
    %3222 = vmatpush1.msra.mxu0 0.0
    %3223 = vmatprep.subr.mxu0 0.0
    %3224 = vmatpush1.msra.mxu0 0.0
    %3225 = vmatprep.subr.mxu0 0.0
    %3226 = vmatpush1.msra.mxu0 0.0
    %3227 = vmatprep.subr.mxu0 0.0
    %3228 = vmatpush1.msra.mxu0 0.0
    %3229 = vmatprep.subr.mxu0 0.0
    %3230 = vmatpush1.msra.mxu0 0.0
    %3231 = vmatprep.subr.mxu0 0.0
    %3232 = vmatpush1.msra.mxu0 0.0
    %3233 = vmatprep.subr.mxu0 0.0
    %3234 = vmatpush1.msra.mxu0 0.0
    %3235 = vmatprep.subr.mxu0 0.0
    %3236 = vmatpush1.msra.mxu0 0.0
    %3237 = vmatprep.subr.mxu0 0.0
    %3238 = vmatpush1.msra.mxu0 0.0
    %3239 = vmatprep.mubr.f32.mxu0 0.0
    %v3240 = vand.u32 %v2866, 4294901760
    %v3241 = vsub.f32 %v2866, %v3240
    %v3242 = vand.u32 %v3241, 4294901760
    %3243 = vmatmul.mubr.f32.gmra.mrb[0].mxu0 %v3242
    %v3244 = vpop.f32.mrb[0].mxu0
    %v3245 = vadd.f32 %v3158, %v3244
    %v3246 = vpop.f32.mrb[0].mxu0
    %3247 = vmatprep.mubr.f32.mxu0 0.0
    %v3248 = vand.u32 %v2869, 4294901760
    %v3249 = vsub.f32 %v2869, %v3248
    %v3250 = vand.u32 %v3249, 4294901760
    %3251 = vmatmul.mubr.f32.gmra.mrb[0].mxu0 %v3250
    %v3252 = vpop.f32.mrb[0].mxu0
    %v3253 = vadd.f32 %v3165, %v3252
    %v3254 = vpop.f32.mrb[0].mxu0
    %3255 = vdwg.mxu0
    %3256 = vmatprep.subr.mxu0 0.0
    %v3257 = vand.u32 %v37, 4294901760
    %v3258 = vsub.f32 %v37, %v3257
    %v3259 = vand.u32 %v3258, 4294901760
    %3260 = vmatpush1.msra.mxu0 %v3259
    %3261 = vmatprep.subr.mxu0 0.0
    %v3262 = vand.u32 %v38, 4294901760
    %v3263 = vsub.f32 %v38, %v3262
    %v3264 = vand.u32 %v3263, 4294901760
    %3265 = vmatpush1.msra.mxu0 %v3264
    %3266 = vmatprep.subr.mxu0 0.0
    %v3267 = vand.u32 %v39, 4294901760
    %v3268 = vsub.f32 %v39, %v3267
    %v3269 = vand.u32 %v3268, 4294901760
    %3270 = vmatpush1.msra.mxu0 %v3269
    %3271 = vmatprep.subr.mxu0 0.0
    %v3272 = vand.u32 %v40, 4294901760
    %v3273 = vsub.f32 %v40, %v3272
    %v3274 = vand.u32 %v3273, 4294901760
    %3275 = vmatpush1.msra.mxu0 %v3274
    %3276 = vmatprep.subr.mxu0 0.0
    %v3277 = vand.u32 %v41, 4294901760
    %v3278 = vsub.f32 %v41, %v3277
    %v3279 = vand.u32 %v3278, 4294901760
    %3280 = vmatpush1.msra.mxu0 %v3279
    %3281 = vmatprep.subr.mxu0 0.0
    %v3282 = vand.u32 %v42, 4294901760
    %v3283 = vsub.f32 %v42, %v3282
    %v3284 = vand.u32 %v3283, 4294901760
    %3285 = vmatpush1.msra.mxu0 %v3284
    %3286 = vmatprep.subr.mxu0 0.0
    %v3287 = vand.u32 %v43, 4294901760
    %v3288 = vsub.f32 %v43, %v3287
    %v3289 = vand.u32 %v3288, 4294901760
    %3290 = vmatpush1.msra.mxu0 %v3289
    %3291 = vmatprep.subr.mxu0 0.0
    %3292 = vmatpush1.msra.mxu0 0.0
    %3293 = vmatprep.subr.mxu0 0.0
    %3294 = vmatpush1.msra.mxu0 0.0
    %3295 = vmatprep.subr.mxu0 0.0
    %3296 = vmatpush1.msra.mxu0 0.0
    %3297 = vmatprep.subr.mxu0 0.0
    %3298 = vmatpush1.msra.mxu0 0.0
    %3299 = vmatprep.subr.mxu0 0.0
    %3300 = vmatpush1.msra.mxu0 0.0
    %3301 = vmatprep.subr.mxu0 0.0
    %3302 = vmatpush1.msra.mxu0 0.0
    %3303 = vmatprep.subr.mxu0 0.0
    %3304 = vmatpush1.msra.mxu0 0.0
    %3305 = vmatprep.subr.mxu0 0.0
    %3306 = vmatpush1.msra.mxu0 0.0
    %3307 = vmatprep.subr.mxu0 0.0
    %3308 = vmatpush1.msra.mxu0 0.0
    %3309 = vmatprep.subr.mxu0 0.0
    %3310 = vmatpush1.msra.mxu0 0.0
    %3311 = vmatprep.subr.mxu0 0.0
    %3312 = vmatpush1.msra.mxu0 0.0
    %3313 = vmatprep.subr.mxu0 0.0
    %3314 = vmatpush1.msra.mxu0 0.0
    %3315 = vmatprep.subr.mxu0 0.0
    %3316 = vmatpush1.msra.mxu0 0.0
    %3317 = vmatprep.subr.mxu0 0.0
    %3318 = vmatpush1.msra.mxu0 0.0
    %3319 = vmatprep.subr.mxu0 0.0
    %3320 = vmatpush1.msra.mxu0 0.0
    %3321 = vmatprep.subr.mxu0 0.0
    %3322 = vmatpush1.msra.mxu0 0.0
    %3323 = vmatprep.subr.mxu0 0.0
    %3324 = vmatpush1.msra.mxu0 0.0
    %3325 = vmatprep.subr.mxu0 0.0
    %3326 = vmatpush1.msra.mxu0 0.0
    %3327 = vmatprep.subr.mxu0 0.0
    %3328 = vmatpush1.msra.mxu0 0.0
    %3329 = vmatprep.subr.mxu0 0.0
    %3330 = vmatpush1.msra.mxu0 0.0
    %3331 = vmatprep.subr.mxu0 0.0
    %3332 = vmatpush1.msra.mxu0 0.0
    %3333 = vmatprep.subr.mxu0 0.0
    %3334 = vmatpush1.msra.mxu0 0.0
    %3335 = vmatprep.subr.mxu0 0.0
    %3336 = vmatpush1.msra.mxu0 0.0
    %3337 = vmatprep.subr.mxu0 0.0
    %3338 = vmatpush1.msra.mxu0 0.0
    %3339 = vmatprep.subr.mxu0 0.0
    %3340 = vmatpush1.msra.mxu0 0.0
    %3341 = vmatprep.mubr.f32.mxu0 0.0
    %v3342 = vand.u32 %v2866, 4294901760
    %3343 = vmatmul.mubr.f32.gmra.mrb[0].mxu0 %v3342
    %v3344 = vpop.f32.mrb[0].mxu0
    %v3345 = vadd.f32 %v3245, %v3344
    %v3346 = vpop.f32.mrb[0].mxu0
    %3347 = vmatprep.mubr.f32.mxu0 0.0
    %v3348 = vand.u32 %v2869, 4294901760
    %3349 = vmatmul.mubr.f32.gmra.mrb[0].mxu0 %v3348
    %v3350 = vpop.f32.mrb[0].mxu0
    %v3351 = vadd.f32 %v3253, %v3350
    %v3352 = vpop.f32.mrb[0].mxu0
    %3353 = vdwg.mxu0
    %3354 = vmatprep.subr.mxu0 0.0
    %v3355 = vand.u32 %v37, 4294901760
    %3356 = vmatpush1.msra.mxu0 %v3355
    %3357 = vmatprep.subr.mxu0 0.0
    %v3358 = vand.u32 %v38, 4294901760
    %3359 = vmatpush1.msra.mxu0 %v3358
    %3360 = vmatprep.subr.mxu0 0.0
    %v3361 = vand.u32 %v39, 4294901760
    %3362 = vmatpush1.msra.mxu0 %v3361
    %3363 = vmatprep.subr.mxu0 0.0
    %v3364 = vand.u32 %v40, 4294901760
    %3365 = vmatpush1.msra.mxu0 %v3364
    %3366 = vmatprep.subr.mxu0 0.0
    %v3367 = vand.u32 %v41, 4294901760
    %3368 = vmatpush1.msra.mxu0 %v3367
    %3369 = vmatprep.subr.mxu0 0.0
    %v3370 = vand.u32 %v42, 4294901760
    %3371 = vmatpush1.msra.mxu0 %v3370
    %3372 = vmatprep.subr.mxu0 0.0
    %v3373 = vand.u32 %v43, 4294901760
    %3374 = vmatpush1.msra.mxu0 %v3373
    %3375 = vmatprep.subr.mxu0 0.0
    %3376 = vmatpush1.msra.mxu0 0.0
    %3377 = vmatprep.subr.mxu0 0.0
    %3378 = vmatpush1.msra.mxu0 0.0
    %3379 = vmatprep.subr.mxu0 0.0
    %3380 = vmatpush1.msra.mxu0 0.0
    %3381 = vmatprep.subr.mxu0 0.0
    %3382 = vmatpush1.msra.mxu0 0.0
    %3383 = vmatprep.subr.mxu0 0.0
    %3384 = vmatpush1.msra.mxu0 0.0
    %3385 = vmatprep.subr.mxu0 0.0
    %3386 = vmatpush1.msra.mxu0 0.0
    %3387 = vmatprep.subr.mxu0 0.0
    %3388 = vmatpush1.msra.mxu0 0.0
    %3389 = vmatprep.subr.mxu0 0.0
    %3390 = vmatpush1.msra.mxu0 0.0
    %3391 = vmatprep.subr.mxu0 0.0
    %3392 = vmatpush1.msra.mxu0 0.0
    %3393 = vmatprep.subr.mxu0 0.0
    %3394 = vmatpush1.msra.mxu0 0.0
    %3395 = vmatprep.subr.mxu0 0.0
    %3396 = vmatpush1.msra.mxu0 0.0
    %3397 = vmatprep.subr.mxu0 0.0
    %3398 = vmatpush1.msra.mxu0 0.0
    %3399 = vmatprep.subr.mxu0 0.0
    %3400 = vmatpush1.msra.mxu0 0.0
    %3401 = vmatprep.subr.mxu0 0.0
    %3402 = vmatpush1.msra.mxu0 0.0
    %3403 = vmatprep.subr.mxu0 0.0
    %3404 = vmatpush1.msra.mxu0 0.0
    %3405 = vmatprep.subr.mxu0 0.0
    %3406 = vmatpush1.msra.mxu0 0.0
    %3407 = vmatprep.subr.mxu0 0.0
    %3408 = vmatpush1.msra.mxu0 0.0
    %3409 = vmatprep.subr.mxu0 0.0
    %3410 = vmatpush1.msra.mxu0 0.0
    %3411 = vmatprep.subr.mxu0 0.0
    %3412 = vmatpush1.msra.mxu0 0.0
    %3413 = vmatprep.subr.mxu0 0.0
    %3414 = vmatpush1.msra.mxu0 0.0
    %3415 = vmatprep.subr.mxu0 0.0
    %3416 = vmatpush1.msra.mxu0 0.0
    %3417 = vmatprep.subr.mxu0 0.0
    %3418 = vmatpush1.msra.mxu0 0.0
    %3419 = vmatprep.subr.mxu0 0.0
    %3420 = vmatpush1.msra.mxu0 0.0
    %3421 = vmatprep.subr.mxu0 0.0
    %3422 = vmatpush1.msra.mxu0 0.0
    %3423 = vmatprep.subr.mxu0 0.0
    %3424 = vmatpush1.msra.mxu0 0.0
    %3425 = vmatprep.mubr.f32.mxu0 0.0
    %v3426 = vand.u32 %v2866, 4294901760
    %3427 = vmatmul.mubr.f32.gmra.mrb[0].mxu0 %v3426
    %v3428 = vpop.f32.mrb[0].mxu0
    %v3429 = vadd.f32 %v3345, %v3428
    %v3430 = vpop.f32.mrb[0].mxu0
    %3431 = vmatprep.mubr.f32.mxu0 0.0
    %v3432 = vand.u32 %v2869, 4294901760
    %3433 = vmatmul.mubr.f32.gmra.mrb[0].mxu0 %v3432
    %v3434 = vpop.f32.mrb[0].mxu0
    %v3435 = vadd.f32 %v3351, %v3434
    %v3436 = vpop.f32.mrb[0].mxu0
    %3437 = vdwg.mxu0
    %v3438 = vsub.f32 %v3429, %v2275
    %v3439 = vsub.f32 %v3435, %v2281
    %v3440 = vand.u32 2147483647, %v3438
    %v3441 = vand.u32 2147483647, %v3439
    %3442 = vadd.xlane.f32.xlu0 %v3440
    %v3443 = vpop.xlane.xlu0 %3442
    %3444 = vadd.xlane.f32.xlu0 %v3441
    %v3445 = vpop.xlane.xlu0 %3444
    %v3446 = vsub.f32 %v2862, %v3443
    %v3447 = vsub.f32 %v2864, %v3445
    %v3448 = vadd.f32 %v3446, 5.0
    %v3449 = vadd.f32 %v3447, 5.0
    %v3450 = vmax.f32 %v3448, 0.0
    %v3451 = vmax.f32 %v3449, 0.0
    %s3452 = smul.u32 0, 16
    %v3453 = vlaneseq
    %v3454 = vshrl.u32 %v3453, 7
    %v3455 = vadd.s32 %v3454, 8
    %v3456 = vstv %s3452
    %v3457 = vadd.s32 %v3456, %v3454
    %v3458 = vadd.s32 %v3456, %v3455
    %vm3459 = vcmp.lt.s32.totalorder %v3457, 10
    %vm3460 = vcmp.lt.s32.totalorder %v3458, 10
    %v3461 = vsel %vm3459, %v3450, 0.0
    %v3462 = vsel %vm3460, %v3451, 0.0
    %v3463 = vld [vmem:[#allocation2] sm:$0x1]
    %v3464 = vadd.f32 %v3461, %v3462
    %v3465 = vrot.slane %v3464, 4
    %v3466 = vadd.f32 %v3464, %v3465
    %v3467 = vrot.slane %v3466, 2
    %v3468 = vadd.f32 %v3466, %v3467
    %v3469 = vrot.slane %v3468, 1
    %v3470 = vadd.f32 %v3468, %v3469
    %v3471 = vadd.f32 %v3463, %v3470
    %vm3472 = vcmask 0
    %3473 = vst.msk [vmem:[#allocation2] sm:$0x1] %vm3472, %v3471
    // Predicated region
    $region22: #{tpu_custom_call.1} parent=1 // pred_check
      %p3474 = pneg %p29
    $region23: #{tpu_custom_call.1} parent=1 // pred_check_branch
      %3476 = sbr.rel (%p3474) target = $region25
    $region24: #{tpu_custom_call.1} parent=1 // pred_region
      %v3477 = vld [vmem:[#allocation2] sm:$0x1]
      %v3478 = vmul.f32 %v3477, 0.1
      %3479 = vst.msk [vmem:[#allocation6] sm:$0x1] %vm3472, %v3478
    $region25: #{tpu_custom_call.1} parent=1 // pred_fallthru
      _
    // Predicated region
    $region26: #{tpu_custom_call.1} parent=1 // pred_check
      _
    $region27: #{tpu_custom_call.1} parent=1 // pred_check_branch
      %3481 = sbr.rel (0) target = $region29
    $region28: #{tpu_custom_call.1} parent=1 // pred_region
      %s3483 = ssub.s32 16, 16
      %3484 = vsyncadd [#allocation5], %s3483
      %s3486 = sshll.u32 [#allocation6], 4
      %s3487 = int_to_ptr.vmem [resolvable:$true] %s3486
      %3489 = dma.vmem_to_hbm [thread:$0]  %s3487, 16, %s3, [#allocation5]
    $region29: #{tpu_custom_call.1} parent=1 // pred_fallthru
      _
    // Predicated region
    $region30: #{tpu_custom_call.1} parent=1 // pred_check
      _
    $region31: #{tpu_custom_call.1} parent=1 // pred_check_branch
      %3491 = sbr.rel (0) target = $region33
    $region32: #{tpu_custom_call.1} parent=1 // pred_region
      %3492 = dma.done [#allocation5], 16
    $region33: #{tpu_custom_call.1} parent=1 // pred_fallthru
      _
    %3493 = vsyncpa [#allocation4], 1
    %3494 = vsyncpa [#allocation5], 1

</llo_original>
